<compile_context>
chip_gen: v5e
topology: v5e:2x2
jax: 0.10.0
libtpu: 0.0.40
codegen_flags: <defaults>
</compile_context>

<pallas_src>
import jax
import jax.numpy as jnp
from jax import lax
from jax.experimental import pallas as pl
from jax.experimental.pallas import tpu as pltpu

NEG_SLOPE = 0.2
BN_EPS = 1e-5

_VMEM_CFG = None


def _vmem_caps():
    """Generation-aware VMEM limits: ~96/64 MiB on 128-MiB parts (v5e/v6e),
    ~48/32 MiB on 64-MiB v7x.  Conservative fallback if the query fails."""
    global _VMEM_CFG
    if _VMEM_CFG is None:
        mib = 1024 * 1024
        cap = 64 * mib
        try:
            info = pltpu.get_tpu_info()
            cap = int(getattr(info, "vmem_capacity_bytes", cap) or cap)
        except Exception:
            pass
        limit = max(32 * mib, min(96 * mib, (cap * 3) // 4))
        budget = max(16 * mib, min(64 * mib, cap // 2))
        _VMEM_CFG = (limit, budget)
    return _VMEM_CFG


# ---------------------------------------------------------------------------
# VMEM-budget-aware row-block picker
# ---------------------------------------------------------------------------
def _pick_tr(N, Ho, Wp, Wo, Cin, Cout, Kh, Kw, budget):
    in_b, acc_b = 2, 4                                 # bf16 stream, f32 accumulate
    fixed = 2 * (Kh - 1) * Wp * Cin * in_b             # halo double-buffers
    fixed += 2 * Kh * Kw * Cin * Cout * 4              # resident weights (headroom)
    fixed += 2 * 1024 * 1024                           # misc headroom
    per_tr = (3 + Kw) * Wp * Cin * in_b                # in dbl-buffer + window + col copies
    per_tr += 2 * Wo * Cout * in_b                     # bf16 output double-buffer
    per_tr += (Kh * Kw // 2 + 2) * Wo * Cout * acc_b   # f32 accumulator + live tap partials
    tr = (budget - fixed) // per_tr
    tr = int(max(1, min(tr, Ho)))
    if N == 1 and Ho >= 32:
        tr = min(tr, -(-Ho // 2))      # keep >= 2 row blocks so both v7x cores get work
    if tr < Ho:
        tr = max(16, (tr // 16) * 16)  # sublane-aligned tiles (bf16 packs 16 rows/vreg)
        if tr >= Ho:
            tr = Ho
    return tr


# ---------------------------------------------------------------------------
# Core kernel: stride-1 KhxKw conv over an NHWC input that already contains
# any spatial zero padding.  Streamed via BlockSpecs (tr-row main block plus
# Kh-1 one-row halo blocks over the SAME array) -- no materialized im2col.
# Optional fused bias / LeakyReLU and fused BatchNorm partial statistics.
# ---------------------------------------------------------------------------
def _conv_s1(x, w_taps, bias, *, apply_lrelu, emit_stats, out_dtype):
    x = x.astype(jnp.bfloat16)
    w_taps = w_taps.astype(jnp.bfloat16)
    N, Hp, Wp, Cin = x.shape
    Kh, Kw, _, Cout = w_taps.shape
    Ho = Hp - Kh + 1
    Wo = Wp - Kw + 1
    vmem_limit, vmem_budget = _vmem_caps()
    tr = _pick_tr(N, Ho, Wp, Wo, Cin, Cout, Kh, Kw, vmem_budget)
    n_rb = -(-Ho // tr)
    Ho_pad = n_rb * tr
    extra = Ho_pad + Kh - 1 - Hp
    if extra > 0:   # extra zero rows are only ever seen by discarded output rows
        x = jnp.pad(x, ((0, 0), (0, extra), (0, 0), (0, 0)))
    has_bias = bias is not None
    n_halo = Kh - 1

    def kernel(*refs):
        i = 0
        main = refs[i]; i += 1
        halos = refs[i:i + n_halo]; i += n_halo
        w_ref = refs[i]; i += 1
        b_ref = None
        if has_bias:
            b_ref = refs[i]; i += 1
        o_ref = refs[i]; i += 1
        if emit_stats:
            sum_ref, m2_ref = refs[i], refs[i + 1]

        # (tr + Kh - 1, Wp, Cin) input window, bf16
        win = main[0]
        if n_halo:
            win = jnp.concatenate([win] + [h[0] for h in halos], axis=0)

        wv = w_ref[...]                                   # (Kh, Kw, Cin, Cout)
        # Tap loop: the column-shifted slice is hoisted out of the row loop
        # (Kw relayout copies instead of Kh*Kw); row shifts are cheap
        # leading-dim slices.  The tap matmuls are summed with no interleaved
        # VPU ops so v7x can accumulate in-place in the MXU result buffer.
        parts = []
        for kj in range(Kw):
            wcol = win[:, kj:kj + Wo, :]                  # (tr + Kh - 1, Wo, Cin)
            for ki in range(Kh):
                p = wcol[ki:ki + tr]                      # (tr, Wo, Cin)
                parts.append(jnp.dot(p.reshape(tr * Wo, Cin), wv[ki, kj],
                                     preferred_element_type=jnp.float32))
        acc = parts[0]
        for t in parts[1:]:
            acc = acc + t                                 # (tr*Wo, Cout) f32
        if has_bias:
            acc = acc + b_ref[...]                        # (1, Cout) broadcast
        if apply_lrelu:
            acc = jnp.where(acc >= 0, acc, NEG_SLOPE * acc)

        y3 = acc.reshape(tr, Wo, Cout)                    # f32, reused for BN stats
        o_ref[...] = y3.reshape(1, tr, Wo, Cout).astype(o_ref.dtype)

        if emit_stats:
            # Per-block partial BN statistics from the f32 accumulator while the
            # tile is in VMEM (combined outside with Chan's parallel formula).
            rb = pl.program_id(1)
            nvalid = jnp.minimum(Ho - rb * tr, tr)        # valid output rows here
            cnt = (nvalid * Wo).astype(jnp.float32)
            ridx = lax.broadcasted_iota(jnp.int32, (tr, Wo, 1), 0)
            mask = ridx < nvalid
            ym = jnp.where(mask, y3, 0.0)
            s = jnp.sum(jnp.sum(ym, axis=0, keepdims=True), axis=1, keepdims=True)
            mu = s / cnt
            d = jnp.where(mask, y3 - mu, 0.0)
            m2 = jnp.sum(jnp.sum(d * d, axis=0, keepdims=True), axis=1, keepdims=True)
            sum_ref[...] = s.reshape(1, 1, 1, Cout)
            m2_ref[...] = m2.reshape(1, 1, 1, Cout)

    in_specs = [pl.BlockSpec((1, tr, Wp, Cin), lambda n, r: (n, r, 0, 0))]
    for d in range(n_halo):
        in_specs.append(
            pl.BlockSpec((1, 1, Wp, Cin),
                         lambda n, r, d=d: (n, tr * (r + 1) + d, 0, 0)))
    in_specs.append(pl.BlockSpec((Kh, Kw, Cin, Cout), lambda n, r: (0, 0, 0, 0)))
    inputs = [x] * (1 + n_halo) + [w_taps]
    if has_bias:
        in_specs.append(pl.BlockSpec((1, Cout), lambda n, r: (0, 0)))
        inputs.append(bias.astype(jnp.float32).reshape(1, Cout))

    y_shape = jax.ShapeDtypeStruct((N, Ho_pad, Wo, Cout), out_dtype)
    y_spec = pl.BlockSpec((1, tr, Wo, Cout), lambda n, r: (n, r, 0, 0))
    if emit_stats:
        stat_shape = jax.ShapeDtypeStruct((N, n_rb, 1, Cout), jnp.float32)
        stat_spec = pl.BlockSpec((1, 1, 1, Cout), lambda n, r: (n, r, 0, 0))
        out_shape = (y_shape, stat_shape, stat_shape)
        out_specs = (y_spec, stat_spec, stat_spec)
    else:
        out_shape = y_shape
        out_specs = y_spec

    res = pl.pallas_call(
        kernel,
        out_shape=out_shape,
        grid_spec=pltpu.PrefetchScalarGridSpec(
            num_scalar_prefetch=0,
            grid=(N, n_rb),
            in_specs=in_specs,
            out_specs=out_specs),
        compiler_params=pltpu.CompilerParams(
            dimension_semantics=("parallel", "parallel"),
            vmem_limit_bytes=vmem_limit),
    )(*inputs)

    if emit_stats:
        y, sums, m2s = res
        return y, Ho, Wo, tr, sums, m2s
    return res, Ho, Wo, tr


# ---------------------------------------------------------------------------
# Combine per-block BN partials (Chan's parallel-variance formula, biased var)
# ---------------------------------------------------------------------------
def _combine_stats(sums, m2s, Ho, Wo, tr):
    N, n_rb = sums.shape[0], sums.shape[1]
    rows = jnp.minimum(Ho - jnp.arange(n_rb) * tr, tr).astype(jnp.float32)
    cnt = (rows * Wo).reshape(1, n_rb, 1, 1)
    total = jnp.float32(N * Ho * Wo)
    mean = jnp.sum(sums, axis=(0, 1, 2)) / total
    mu_k = sums / cnt
    var = (jnp.sum(m2s, axis=(0, 1, 2))
           + jnp.sum(cnt * (mu_k - mean) ** 2, axis=(0, 1, 2))) / total
    return mean, var


# ---------------------------------------------------------------------------
# Layout prep (pure pad + transpose; any preceding elementwise math --
# BN normalize + LeakyReLU -- is fused by XLA into this same HBM pass)
# ---------------------------------------------------------------------------
def _sd_layout(act):
    """Zero-pad an NHWC activation by 1 and space-to-depth it by 2 so that the
    next 4x4/stride-2 conv becomes a 2x2/stride-1 conv with 4x the channels."""
    N, H, W, C = act.shape
    Hp, Wp = H + 2, W + 2
    # TODO(synk): odd spatial sizes (odd H or W) are not supported by the
    # space-to-depth factorization of the stride-2 layers.
    assert Hp % 2 == 0 and Wp % 2 == 0, "even H, W required for stride-2 layers"
    xp = jnp.pad(act, ((0, 0), (1, 1), (1, 1), (0, 0)))
    xsd = xp.reshape(N, Hp // 2, 2, Wp // 2, 2, C)
    xsd = jnp.transpose(xsd, (0, 1, 3, 2, 4, 5)).reshape(N, Hp // 2, Wp // 2, 4 * C)
    return xsd.astype(jnp.bfloat16)


def _sd_weights(w):
    """Torch-layout (Cout, Cin, 4, 4) -> space-to-depth taps (2, 2, 4*Cin, Cout)."""
    Cout, Cin, kh, kw = w.shape
    wt = jnp.transpose(w, (2, 3, 1, 0))              # (kh, kw, Cin, Cout)
    wt = wt.reshape(2, 2, 2, 2, Cin, Cout)           # (da, u, db, v, Cin, Cout)
    wt = jnp.transpose(wt, (0, 2, 1, 3, 4, 5))       # (da, db, u, v, Cin, Cout)
    return wt.reshape(2, 2, 4 * Cin, Cout)


# ---------------------------------------------------------------------------
# Parameters + forward
# ---------------------------------------------------------------------------
def init_params(key, channels=3, n_feats=64, kernel_size=4, n_layers=3):
    ks = iter(jax.random.split(key, 4 + 3 * (n_layers - 1)))
    p = {}
    p["w1"] = 0.05 * jax.random.normal(next(ks), (n_feats, channels, kernel_size, kernel_size), jnp.float32)
    p["b1"] = 0.05 * jax.random.normal(next(ks), (n_feats,), jnp.float32)
    for l in range(1, n_layers):
        p[f"w{l+1}"] = 0.05 * jax.random.normal(next(ks), (n_feats, n_feats, kernel_size, kernel_size), jnp.float32)
        p[f"gamma{l+1}"] = 1.0 + 0.1 * jax.random.normal(next(ks), (n_feats,), jnp.float32)
        p[f"beta{l+1}"] = 0.1 * jax.random.normal(next(ks), (n_feats,), jnp.float32)
    p["w_last"] = 0.05 * jax.random.normal(next(ks), (1, n_feats, kernel_size, kernel_size), jnp.float32)
    p["b_last"] = 0.05 * jax.random.normal(next(ks), (1,), jnp.float32)
    return p


def convs_forward(x_nchw, params, n_feats=64, n_layers=3, kernel_size=4):
    assert kernel_size == 4, "space-to-depth factorization assumes kernel_size=4, stride=2, pad=1"
    x = jnp.transpose(x_nchw, (0, 2, 3, 1))          # NHWC; the only input transpose
    C = n_feats

    # layer 0: Conv(s=2, p=1, bias) + LeakyReLU(0.2) fused into the epilogue
    y, Ho, Wo, tr = _conv_s1(_sd_layout(x), _sd_weights(params["w1"]), params["b1"],
                             apply_lrelu=True, emit_stats=False, out_dtype=jnp.bfloat16)
    act = y[:, :Ho]                                  # bf16, already activated

    for l in range(1, n_layers):
        # Conv(s=2, p=1, no bias) with fused BN partial stats in the epilogue
        y, Ho, Wo, tr, sums, m2s = _conv_s1(
            _sd_layout(act), _sd_weights(params[f"w{l+1}"]), None,
            apply_lrelu=False, emit_stats=True, out_dtype=jnp.bfloat16)
        mean, var = _combine_stats(sums, m2s, Ho, Wo, tr)
        scale = params[f"gamma{l+1}"] / jnp.sqrt(var + BN_EPS)
        shift = params[f"beta{l+1}"] - mean * scale
        # BN normalize + LeakyReLU: plain XLA elementwise that fuses into the
        # next layer's pad + space-to-depth pass (no standalone pallas_call).
        yv = y[:, :Ho].astype(jnp.float32) * scale.reshape(1, 1, 1, C) + shift.reshape(1, 1, 1, C)
        act = jnp.where(yv >= 0, yv, NEG_SLOPE * yv)

    # final: Conv(s=1, p=1, bias), Cout=1 padded to 128 lanes (lane-dense store)
    xp = jnp.pad(act, ((0, 0), (1, 1), (1, 1), (0, 0))).astype(jnp.bfloat16)
    wl = jnp.transpose(params["w_last"], (2, 3, 1, 0))        # (4, 4, n_feats, 1)
    wl = jnp.pad(wl, ((0, 0), (0, 0), (0, 0), (0, 127)))
    bl = jnp.pad(params["b_last"], ((0, 127),))
    y, Ho, Wo, tr = _conv_s1(xp, wl, bl, apply_lrelu=False, emit_stats=False,
                             out_dtype=jnp.float32)
    out = y[:, :Ho, :, :1]                                    # (N, Ho, Wo, 1)
    return jnp.transpose(out, (0, 3, 1, 2))                   # NCHW at the boundary


# ---------------------------------------------------------------------------
# Pure-JAX reference (lax.conv).  match_kernel=True mirrors the kernel's
# dataflow exactly: bf16 conv operands, bf16 storage of every intermediate
# activation, f32 accumulation and f32 BN statistics.
# ---------------------------------------------------------------------------
def ref_forward(x, params, n_layers=3, match_kernel=False):
    if match_kernel:
        rnd = lambda a: a.astype(jnp.bfloat16).astype(jnp.float32)
    else:
        rnd = lambda a: a

    def conv(v, w, b, stride):
        y = lax.conv_general_dilated(
            rnd(v), rnd(w), (stride, stride), [(1, 1), (1, 1)],
            dimension_numbers=("NCHW", "OIHW", "NCHW"),
            precision=lax.Precision.HIGHEST)
        if b is not None:
            y = y + b.reshape(1, -1, 1, 1)
        return y

    def lrelu(v):
        return jnp.where(v >= 0, v, NEG_SLOPE * v)

    y = rnd(lrelu(conv(x, params["w1"], params["b1"], 2)))
    for l in range(1, n_layers):
        a = conv(y, params[f"w{l+1}"], None, 2)                 # f32 accumulator
        mean = a.mean(axis=(0, 2, 3), keepdims=True)
        var = ((a - mean) ** 2).mean(axis=(0, 2, 3), keepdims=True)
        scale = params[f"gamma{l+1}"].reshape(1, -1, 1, 1) / jnp.sqrt(var + BN_EPS)
        shift = params[f"beta{l+1}"].reshape(1, -1, 1, 1) - mean * scale
        y = rnd(lrelu(rnd(a) * scale + shift))                  # bf16-stored activation
    return conv(y, params["w_last"], params["b_last"], 1)


if __name__ == "__main__":
    key = jax.random.PRNGKey(0)
    kx, kp = jax.random.split(key)

    # small shapes: batch=2, channels=3 (module default), spatial=16
    x = jax.random.normal(kx, (2, 3, 16, 16), jnp.float32)
    params = init_params(kp)

    out = jax.block_until_ready(jax.jit(convs_forward)(x, params))
    assert out.shape == (2, 1, 1, 1), out.shape

    # matched-precision reference (bf16 operands + bf16 intermediate storage like the kernels)
    ref_bf = ref_forward(x, params, match_kernel=True)
    assert jnp.allclose(out, ref_bf, atol=5e-3, rtol=5e-3), (out, ref_bf)
    # full-f32 reference: loose sanity bound on the bf16 rounding error
    ref32 = ref_forward(x, params, match_kernel=False)
    assert jnp.allclose(out, ref32, atol=7.5e-2, rtol=7.5e-2), (out, ref32)

    print("KERNEL_OK")
</pallas_src>

<mosaic_0001>
module attributes {stable_mosaic.version = 11 : i64} {
  func.func @kernel(%arg0: i32, %arg1: i32, %arg2: memref<1x8x9x12xbf16, #tpu.memory_space<vmem>>, %arg3: memref<1x1x9x12xbf16, #tpu.memory_space<vmem>>, %arg4: memref<2x2x12x64xbf16, #tpu.memory_space<vmem>>, %arg5: memref<1x64xf32, #tpu.memory_space<vmem>>, %arg6: memref<1x8x8x64xbf16, #tpu.memory_space<vmem>>) attributes {dimension_semantics = [#tpu.dimension_semantics<parallel>, #tpu.dimension_semantics<parallel>], iteration_bounds = array<i64: 2, 1>, scalar_prefetch = 0 : i64, scratch_operands = 0 : i64, tpu.core_type = #tpu.core_type<tc>, window_params = [{transform_indices = @transform_0, window_bounds = array<i64: 1, 8, 9, 12>}, {transform_indices = @transform_1, window_bounds = array<i64: 1, 1, 9, 12>}, {pipeline_mode = #tpu.pipeline_mode<synchronous>, transform_indices = @transform_2, window_bounds = array<i64: 2, 2, 12, 64>}, {pipeline_mode = #tpu.pipeline_mode<synchronous>, transform_indices = @transform_3, window_bounds = array<i64: 1, 64>}, {transform_indices = @transform_4, window_bounds = array<i64: 1, 8, 8, 64>}]} {
    %c0 = arith.constant 0 : index
    %c0_0 = arith.constant 0 : index
    %c0_1 = arith.constant 0 : index
    %c0_2 = arith.constant 0 : index
    %0 = vector.load %arg2[%c0, %c0_0, %c0_1, %c0_2] : memref<1x8x9x12xbf16, #tpu.memory_space<vmem>>, vector<1x8x9x12xbf16>
    %1 = vector.shape_cast %0 : vector<1x8x9x12xbf16> to vector<8x9x12xbf16>
    %c0_3 = arith.constant 0 : index
    %c0_4 = arith.constant 0 : index
    %c0_5 = arith.constant 0 : index
    %c0_6 = arith.constant 0 : index
    %2 = vector.load %arg3[%c0_3, %c0_4, %c0_5, %c0_6] : memref<1x1x9x12xbf16, #tpu.memory_space<vmem>>, vector<1x1x9x12xbf16>
    %3 = vector.shape_cast %2 : vector<1x1x9x12xbf16> to vector<1x9x12xbf16>
    %4 = tpu.concatenate %1, %3 in 0 : vector<8x9x12xbf16>, vector<1x9x12xbf16> -> vector<9x9x12xbf16>
    %c0_7 = arith.constant 0 : index
    %c0_8 = arith.constant 0 : index
    %c0_9 = arith.constant 0 : index
    %c0_10 = arith.constant 0 : index
    %5 = vector.load %arg4[%c0_7, %c0_8, %c0_9, %c0_10] : memref<2x2x12x64xbf16, #tpu.memory_space<vmem>>, vector<2x2x12x64xbf16>
    %6 = vector.extract_strided_slice %4 {offsets = [0, 0, 0], sizes = [9, 8, 12], strides = [1, 1, 1]} : vector<9x9x12xbf16> to vector<9x8x12xbf16>
    %7 = vector.extract_strided_slice %6 {offsets = [0, 0, 0], sizes = [8, 8, 12], strides = [1, 1, 1]} : vector<9x8x12xbf16> to vector<8x8x12xbf16>
    %8 = vector.shape_cast %7 : vector<8x8x12xbf16> to vector<64x12xbf16>
    %9 = vector.extract_strided_slice %5 {offsets = [0, 0, 0, 0], sizes = [1, 1, 12, 64], strides = [1, 1, 1, 1]} : vector<2x2x12x64xbf16> to vector<1x1x12x64xbf16>
    %10 = vector.shape_cast %9 : vector<1x1x12x64xbf16> to vector<12x64xbf16>
    %cst = arith.constant dense<0.000000e+00> : vector<64x64xf32>
    %11 = tpu.matmul %8, %10, %cst {dimension_numbers = #tpu.dot_dimension_numbers<[1], [0], [0], [1], [0, 0, 1, 1], [], []>} : vector<64x12xbf16>, vector<12x64xbf16>, vector<64x64xf32> -> vector<64x64xf32>
    %12 = vector.extract_strided_slice %6 {offsets = [1, 0, 0], sizes = [8, 8, 12], strides = [1, 1, 1]} : vector<9x8x12xbf16> to vector<8x8x12xbf16>
    %13 = vector.shape_cast %12 : vector<8x8x12xbf16> to vector<64x12xbf16>
    %14 = vector.extract_strided_slice %5 {offsets = [1, 0, 0, 0], sizes = [1, 1, 12, 64], strides = [1, 1, 1, 1]} : vector<2x2x12x64xbf16> to vector<1x1x12x64xbf16>
    %15 = vector.shape_cast %14 : vector<1x1x12x64xbf16> to vector<12x64xbf16>
    %cst_11 = arith.constant dense<0.000000e+00> : vector<64x64xf32>
    %16 = tpu.matmul %13, %15, %cst_11 {dimension_numbers = #tpu.dot_dimension_numbers<[1], [0], [0], [1], [0, 0, 1, 1], [], []>} : vector<64x12xbf16>, vector<12x64xbf16>, vector<64x64xf32> -> vector<64x64xf32>
    %17 = vector.extract_strided_slice %4 {offsets = [0, 1, 0], sizes = [9, 8, 12], strides = [1, 1, 1]} : vector<9x9x12xbf16> to vector<9x8x12xbf16>
    %18 = vector.extract_strided_slice %17 {offsets = [0, 0, 0], sizes = [8, 8, 12], strides = [1, 1, 1]} : vector<9x8x12xbf16> to vector<8x8x12xbf16>
    %19 = vector.shape_cast %18 : vector<8x8x12xbf16> to vector<64x12xbf16>
    %20 = vector.extract_strided_slice %5 {offsets = [0, 1, 0, 0], sizes = [1, 1, 12, 64], strides = [1, 1, 1, 1]} : vector<2x2x12x64xbf16> to vector<1x1x12x64xbf16>
    %21 = vector.shape_cast %20 : vector<1x1x12x64xbf16> to vector<12x64xbf16>
    %cst_12 = arith.constant dense<0.000000e+00> : vector<64x64xf32>
    %22 = tpu.matmul %19, %21, %cst_12 {dimension_numbers = #tpu.dot_dimension_numbers<[1], [0], [0], [1], [0, 0, 1, 1], [], []>} : vector<64x12xbf16>, vector<12x64xbf16>, vector<64x64xf32> -> vector<64x64xf32>
    %23 = vector.extract_strided_slice %17 {offsets = [1, 0, 0], sizes = [8, 8, 12], strides = [1, 1, 1]} : vector<9x8x12xbf16> to vector<8x8x12xbf16>
    %24 = vector.shape_cast %23 : vector<8x8x12xbf16> to vector<64x12xbf16>
    %25 = vector.extract_strided_slice %5 {offsets = [1, 1, 0, 0], sizes = [1, 1, 12, 64], strides = [1, 1, 1, 1]} : vector<2x2x12x64xbf16> to vector<1x1x12x64xbf16>
    %26 = vector.shape_cast %25 : vector<1x1x12x64xbf16> to vector<12x64xbf16>
    %cst_13 = arith.constant dense<0.000000e+00> : vector<64x64xf32>
    %27 = tpu.matmul %24, %26, %cst_13 {dimension_numbers = #tpu.dot_dimension_numbers<[1], [0], [0], [1], [0, 0, 1, 1], [], []>} : vector<64x12xbf16>, vector<12x64xbf16>, vector<64x64xf32> -> vector<64x64xf32>
    %28 = arith.addf %11, %16 : vector<64x64xf32>
    %29 = arith.addf %28, %22 : vector<64x64xf32>
    %30 = arith.addf %29, %27 : vector<64x64xf32>
    %c0_14 = arith.constant 0 : index
    %c0_15 = arith.constant 0 : index
    %31 = vector.load %arg5[%c0_14, %c0_15] : memref<1x64xf32, #tpu.memory_space<vmem>>, vector<1x64xf32>
    %32 = vector.broadcast %31 : vector<1x64xf32> to vector<64x64xf32>
    %33 = arith.addf %30, %32 : vector<64x64xf32>
    %cst_16 = arith.constant 0.000000e+00 : f32
    %34 = vector.broadcast %cst_16 : f32 to vector<64x64xf32>
    %35 = arith.cmpf oge, %33, %34 : vector<64x64xf32>
    %cst_17 = arith.constant 2.000000e-01 : f32
    %36 = vector.broadcast %cst_17 : f32 to vector<64x64xf32>
    %37 = arith.mulf %36, %33 : vector<64x64xf32>
    %38 = arith.select %35, %33, %37 : vector<64x64xi1>, vector<64x64xf32>
    %39 = vector.shape_cast %38 : vector<64x64xf32> to vector<8x8x64xf32>
    %40 = vector.shape_cast %39 : vector<8x8x64xf32> to vector<1x8x8x64xf32>
    %41 = arith.truncf %40 : vector<1x8x8x64xf32> to vector<1x8x8x64xbf16>
    %c0_18 = arith.constant 0 : index
    %c0_19 = arith.constant 0 : index
    %c0_20 = arith.constant 0 : index
    %c0_21 = arith.constant 0 : index
    %42 = vector.load %arg6[%c0_18, %c0_19, %c0_20, %c0_21] : memref<1x8x8x64xbf16, #tpu.memory_space<vmem>>, vector<1x8x8x64xbf16>
    tpu.vector_store %arg6[%c0_18, %c0_19, %c0_20, %c0_21], %41 {strides = array<i32>} : memref<1x8x8x64xbf16, #tpu.memory_space<vmem>>, vector<1x8x8x64xbf16>,
    return
  }
  func.func @transform_0(%arg0: i32, %arg1: i32) -> (i32, i32, i32, i32) {
    %c0_i32 = arith.constant 0 : i32
    %c0_i32_0 = arith.constant 0 : i32
    %c0_i32_1 = arith.constant 0 : i32
    return %arg0, %arg1, %c0_i32, %c0_i32_0 : i32, i32, i32, i32
  }
  func.func @transform_1(%arg0: i32, %arg1: i32) -> (i32, i32, i32, i32) {
    %c1_i32 = arith.constant 1 : i32
    %0 = arith.addi %arg1, %c1_i32 : i32
    %c8_i32 = arith.constant 8 : i32
    %1 = arith.muli %c8_i32, %0 : i32
    %c0_i32 = arith.constant 0 : i32
    %2 = arith.addi %1, %c0_i32 : i32
    %c0_i32_0 = arith.constant 0 : i32
    %c0_i32_1 = arith.constant 0 : i32
    %c0_i32_2 = arith.constant 0 : i32
    return %arg0, %2, %c0_i32_0, %c0_i32_1 : i32, i32, i32, i32
  }
  func.func @transform_2(%arg0: i32, %arg1: i32) -> (i32, i32, i32, i32) {
    %c0_i32 = arith.constant 0 : i32
    %c0_i32_0 = arith.constant 0 : i32
    %c0_i32_1 = arith.constant 0 : i32
    %c0_i32_2 = arith.constant 0 : i32
    %c0_i32_3 = arith.constant 0 : i32
    return %c0_i32, %c0_i32_0, %c0_i32_1, %c0_i32_2 : i32, i32, i32, i32
  }
  func.func @transform_3(%arg0: i32, %arg1: i32) -> (i32, i32) {
    %c0_i32 = arith.constant 0 : i32
    %c0_i32_0 = arith.constant 0 : i32
    %c0_i32_1 = arith.constant 0 : i32
    return %c0_i32, %c0_i32_0 : i32, i32
  }
  func.func @transform_4(%arg0: i32, %arg1: i32) -> (i32, i32, i32, i32) {
    %c0_i32 = arith.constant 0 : i32
    %c0_i32_0 = arith.constant 0 : i32
    %c0_i32_1 = arith.constant 0 : i32
    return %arg0, %arg1, %c0_i32, %c0_i32_0 : i32, i32, i32, i32
  }
}

module attributes {stable_mosaic.version = 11 : i64} {
  func.func @kernel(%arg0: i32, %arg1: i32, %arg2: memref<1x4x5x256xbf16, #tpu.memory_space<vmem>>, %arg3: memref<1x1x5x256xbf16, #tpu.memory_space<vmem>>, %arg4: memref<2x2x256x64xbf16, #tpu.memory_space<vmem>>, %arg5: memref<1x4x4x64xbf16, #tpu.memory_space<vmem>>, %arg6: memref<1x1x1x64xf32, #tpu.memory_space<vmem>>, %arg7: memref<1x1x1x64xf32, #tpu.memory_space<vmem>>) attributes {dimension_semantics = [#tpu.dimension_semantics<parallel>, #tpu.dimension_semantics<parallel>], iteration_bounds = array<i64: 2, 1>, scalar_prefetch = 0 : i64, scratch_operands = 0 : i64, tpu.core_type = #tpu.core_type<tc>, window_params = [{transform_indices = @transform_0, window_bounds = array<i64: 1, 4, 5, 256>}, {transform_indices = @transform_1, window_bounds = array<i64: 1, 1, 5, 256>}, {pipeline_mode = #tpu.pipeline_mode<synchronous>, transform_indices = @transform_2, window_bounds = array<i64: 2, 2, 256, 64>}, {transform_indices = @transform_3, window_bounds = array<i64: 1, 4, 4, 64>}, {transform_indices = @transform_4, window_bounds = array<i64: 1, 1, 1, 64>}, {transform_indices = @transform_5, window_bounds = array<i64: 1, 1, 1, 64>}]} {
    %c0 = arith.constant 0 : index
    %c0_0 = arith.constant 0 : index
    %c0_1 = arith.constant 0 : index
    %c0_2 = arith.constant 0 : index
    %0 = vector.load %arg2[%c0, %c0_0, %c0_1, %c0_2] : memref<1x4x5x256xbf16, #tpu.memory_space<vmem>>, vector<1x4x5x256xbf16>
    %1 = vector.shape_cast %0 : vector<1x4x5x256xbf16> to vector<4x5x256xbf16>
    %c0_3 = arith.constant 0 : index
    %c0_4 = arith.constant 0 : index
    %c0_5 = arith.constant 0 : index
    %c0_6 = arith.constant 0 : index
    %2 = vector.load %arg3[%c0_3, %c0_4, %c0_5, %c0_6] : memref<1x1x5x256xbf16, #tpu.memory_space<vmem>>, vector<1x1x5x256xbf16>
    %3 = vector.shape_cast %2 : vector<1x1x5x256xbf16> to vector<1x5x256xbf16>
    %4 = tpu.concatenate %1, %3 in 0 : vector<4x5x256xbf16>, vector<1x5x256xbf16> -> vector<5x5x256xbf16>
    %c0_7 = arith.constant 0 : index
    %c0_8 = arith.constant 0 : index
    %c0_9 = arith.constant 0 : index
    %c0_10 = arith.constant 0 : index
    %5 = vector.load %arg4[%c0_7, %c0_8, %c0_9, %c0_10] : memref<2x2x256x64xbf16, #tpu.memory_space<vmem>>, vector<2x2x256x64xbf16>
    %6 = vector.extract_strided_slice %4 {offsets = [0, 0, 0], sizes = [5, 4, 256], strides = [1, 1, 1]} : vector<5x5x256xbf16> to vector<5x4x256xbf16>
    %7 = vector.extract_strided_slice %6 {offsets = [0, 0, 0], sizes = [4, 4, 256], strides = [1, 1, 1]} : vector<5x4x256xbf16> to vector<4x4x256xbf16>
    %8 = vector.shape_cast %7 : vector<4x4x256xbf16> to vector<16x256xbf16>
    %9 = vector.extract_strided_slice %5 {offsets = [0, 0, 0, 0], sizes = [1, 1, 256, 64], strides = [1, 1, 1, 1]} : vector<2x2x256x64xbf16> to vector<1x1x256x64xbf16>
    %10 = vector.shape_cast %9 : vector<1x1x256x64xbf16> to vector<256x64xbf16>
    %cst = arith.constant dense<0.000000e+00> : vector<16x64xf32>
    %11 = tpu.matmul %8, %10, %cst {dimension_numbers = #tpu.dot_dimension_numbers<[1], [0], [0], [1], [0, 0, 1, 1], [], []>} : vector<16x256xbf16>, vector<256x64xbf16>, vector<16x64xf32> -> vector<16x64xf32>
    %12 = vector.extract_strided_slice %6 {offsets = [1, 0, 0], sizes = [4, 4, 256], strides = [1, 1, 1]} : vector<5x4x256xbf16> to vector<4x4x256xbf16>
    %13 = vector.shape_cast %12 : vector<4x4x256xbf16> to vector<16x256xbf16>
    %14 = vector.extract_strided_slice %5 {offsets = [1, 0, 0, 0], sizes = [1, 1, 256, 64], strides = [1, 1, 1, 1]} : vector<2x2x256x64xbf16> to vector<1x1x256x64xbf16>
    %15 = vector.shape_cast %14 : vector<1x1x256x64xbf16> to vector<256x64xbf16>
    %cst_11 = arith.constant dense<0.000000e+00> : vector<16x64xf32>
    %16 = tpu.matmul %13, %15, %cst_11 {dimension_numbers = #tpu.dot_dimension_numbers<[1], [0], [0], [1], [0, 0, 1, 1], [], []>} : vector<16x256xbf16>, vector<256x64xbf16>, vector<16x64xf32> -> vector<16x64xf32>
    %17 = vector.extract_strided_slice %4 {offsets = [0, 1, 0], sizes = [5, 4, 256], strides = [1, 1, 1]} : vector<5x5x256xbf16> to vector<5x4x256xbf16>
    %18 = vector.extract_strided_slice %17 {offsets = [0, 0, 0], sizes = [4, 4, 256], strides = [1, 1, 1]} : vector<5x4x256xbf16> to vector<4x4x256xbf16>
    %19 = vector.shape_cast %18 : vector<4x4x256xbf16> to vector<16x256xbf16>
    %20 = vector.extract_strided_slice %5 {offsets = [0, 1, 0, 0], sizes = [1, 1, 256, 64], strides = [1, 1, 1, 1]} : vector<2x2x256x64xbf16> to vector<1x1x256x64xbf16>
    %21 = vector.shape_cast %20 : vector<1x1x256x64xbf16> to vector<256x64xbf16>
    %cst_12 = arith.constant dense<0.000000e+00> : vector<16x64xf32>
    %22 = tpu.matmul %19, %21, %cst_12 {dimension_numbers = #tpu.dot_dimension_numbers<[1], [0], [0], [1], [0, 0, 1, 1], [], []>} : vector<16x256xbf16>, vector<256x64xbf16>, vector<16x64xf32> -> vector<16x64xf32>
    %23 = vector.extract_strided_slice %17 {offsets = [1, 0, 0], sizes = [4, 4, 256], strides = [1, 1, 1]} : vector<5x4x256xbf16> to vector<4x4x256xbf16>
    %24 = vector.shape_cast %23 : vector<4x4x256xbf16> to vector<16x256xbf16>
    %25 = vector.extract_strided_slice %5 {offsets = [1, 1, 0, 0], sizes = [1, 1, 256, 64], strides = [1, 1, 1, 1]} : vector<2x2x256x64xbf16> to vector<1x1x256x64xbf16>
    %26 = vector.shape_cast %25 : vector<1x1x256x64xbf16> to vector<256x64xbf16>
    %cst_13 = arith.constant dense<0.000000e+00> : vector<16x64xf32>
    %27 = tpu.matmul %24, %26, %cst_13 {dimension_numbers = #tpu.dot_dimension_numbers<[1], [0], [0], [1], [0, 0, 1, 1], [], []>} : vector<16x256xbf16>, vector<256x64xbf16>, vector<16x64xf32> -> vector<16x64xf32>
    %28 = arith.addf %11, %16 : vector<16x64xf32>
    %29 = arith.addf %28, %22 : vector<16x64xf32>
    %30 = arith.addf %29, %27 : vector<16x64xf32>
    %31 = vector.shape_cast %30 : vector<16x64xf32> to vector<4x4x64xf32>
    %32 = vector.shape_cast %31 : vector<4x4x64xf32> to vector<1x4x4x64xf32>
    %33 = arith.truncf %32 : vector<1x4x4x64xf32> to vector<1x4x4x64xbf16>
    %c0_14 = arith.constant 0 : index
    %c0_15 = arith.constant 0 : index
    %c0_16 = arith.constant 0 : index
    %c0_17 = arith.constant 0 : index
    %34 = vector.load %arg5[%c0_14, %c0_15, %c0_16, %c0_17] : memref<1x4x4x64xbf16, #tpu.memory_space<vmem>>, vector<1x4x4x64xbf16>
    tpu.vector_store %arg5[%c0_14, %c0_15, %c0_16, %c0_17], %33 {strides = array<i32>} : memref<1x4x4x64xbf16, #tpu.memory_space<vmem>>, vector<1x4x4x64xbf16>,
    %c4_i32 = arith.constant 4 : i32
    %35 = arith.muli %arg1, %c4_i32 : i32
    %c4_i32_18 = arith.constant 4 : i32
    %36 = arith.subi %c4_i32_18, %35 : i32
    %c4_i32_19 = arith.constant 4 : i32
    %37 = arith.minsi %36, %c4_i32_19 : i32
    %c4_i32_20 = arith.constant 4 : i32
    %38 = arith.muli %37, %c4_i32_20 : i32
    %39 = arith.sitofp %38 : i32 to f32
    %40 = tpu.iota {dimensions = array<i32: 0>} : vector<4x4x1xi32>
    %41 = vector.broadcast %37 : i32 to vector<4x4x1xi32>
    %42 = arith.cmpi slt, %40, %41 : vector<4x4x1xi32>
    %cst_21 = arith.constant 0.000000e+00 : f32
    %43 = vector.shape_cast %42 : vector<4x4x1xi1> to vector<4x4x1xi1>
    %44 = vector.broadcast %43 : vector<4x4x1xi1> to vector<4x4x64xi1>
    %45 = vector.broadcast %cst_21 : f32 to vector<4x4x64xf32>
    %46 = arith.select %44, %31, %45 : vector<4x4x64xi1>, vector<4x4x64xf32>
    %cst_22 = arith.constant dense<0.000000e+00> : vector<4x64xf32>
    %47 = vector.multi_reduction <add>, %46, %cst_22 [0] : vector<4x4x64xf32> to vector<4x64xf32>
    %48 = vector.shape_cast %47 : vector<4x64xf32> to vector<1x4x64xf32>
    %cst_23 = arith.constant dense<0.000000e+00> : vector<1x64xf32>
    %49 = vector.multi_reduction <add>, %48, %cst_23 [1] : vector<1x4x64xf32> to vector<1x64xf32>
    %50 = vector.shape_cast %49 : vector<1x64xf32> to vector<1x1x64xf32>
    %51 = vector.broadcast %39 : f32 to vector<1x1x64xf32>
    %52 = arith.divf %50, %51 : vector<1x1x64xf32>
    %53 = vector.broadcast %52 : vector<1x1x64xf32> to vector<4x4x64xf32>
    %54 = arith.subf %31, %53 : vector<4x4x64xf32>
    %cst_24 = arith.constant 0.000000e+00 : f32
    %55 = vector.shape_cast %42 : vector<4x4x1xi1> to vector<4x4x1xi1>
    %56 = vector.broadcast %55 : vector<4x4x1xi1> to vector<4x4x64xi1>
    %57 = vector.broadcast %cst_24 : f32 to vector<4x4x64xf32>
    %58 = arith.select %56, %54, %57 : vector<4x4x64xi1>, vector<4x4x64xf32>
    %59 = arith.mulf %58, %58 : vector<4x4x64xf32>
    %cst_25 = arith.constant dense<0.000000e+00> : vector<4x64xf32>
    %60 = vector.multi_reduction <add>, %59, %cst_25 [0] : vector<4x4x64xf32> to vector<4x64xf32>
    %61 = vector.shape_cast %60 : vector<4x64xf32> to vector<1x4x64xf32>
    %cst_26 = arith.constant dense<0.000000e+00> : vector<1x64xf32>
    %62 = vector.multi_reduction <add>, %61, %cst_26 [1] : vector<1x4x64xf32> to vector<1x64xf32>
    %63 = vector.shape_cast %62 : vector<1x64xf32> to vector<1x1x64xf32>
    %64 = vector.shape_cast %50 : vector<1x1x64xf32> to vector<1x1x1x64xf32>
    %c0_27 = arith.constant 0 : index
    %c0_28 = arith.constant 0 : index
    %c0_29 = arith.constant 0 : index
    %c0_30 = arith.constant 0 : index
    %65 = vector.load %arg6[%c0_27, %c0_28, %c0_29, %c0_30] : memref<1x1x1x64xf32, #tpu.memory_space<vmem>>, vector<1x1x1x64xf32>
    tpu.vector_store %arg6[%c0_27, %c0_28, %c0_29, %c0_30], %64 {strides = array<i32>} : memref<1x1x1x64xf32, #tpu.memory_space<vmem>>, vector<1x1x1x64xf32>,
    %66 = vector.shape_cast %63 : vector<1x1x64xf32> to vector<1x1x1x64xf32>
    %c0_31 = arith.constant 0 : index
    %c0_32 = arith.constant 0 : index
    %c0_33 = arith.constant 0 : index
    %c0_34 = arith.constant 0 : index
    %67 = vector.load %arg7[%c0_31, %c0_32, %c0_33, %c0_34] : memref<1x1x1x64xf32, #tpu.memory_space<vmem>>, vector<1x1x1x64xf32>
    tpu.vector_store %arg7[%c0_31, %c0_32, %c0_33, %c0_34], %66 {strides = array<i32>} : memref<1x1x1x64xf32, #tpu.memory_space<vmem>>, vector<1x1x1x64xf32>,
    return
  }
  func.func @transform_0(%arg0: i32, %arg1: i32) -> (i32, i32, i32, i32) {
    %c0_i32 = arith.constant 0 : i32
    %c0_i32_0 = arith.constant 0 : i32
    %c0_i32_1 = arith.constant 0 : i32
    return %arg0, %arg1, %c0_i32, %c0_i32_0 : i32, i32, i32, i32
  }
  func.func @transform_1(%arg0: i32, %arg1: i32) -> (i32, i32, i32, i32) {
    %c1_i32 = arith.constant 1 : i32
    %0 = arith.addi %arg1, %c1_i32 : i32
    %c4_i32 = arith.constant 4 : i32
    %1 = arith.muli %c4_i32, %0 : i32
    %c0_i32 = arith.constant 0 : i32
    %2 = arith.addi %1, %c0_i32 : i32
    %c0_i32_0 = arith.constant 0 : i32
    %c0_i32_1 = arith.constant 0 : i32
    %c0_i32_2 = arith.constant 0 : i32
    return %arg0, %2, %c0_i32_0, %c0_i32_1 : i32, i32, i32, i32
  }
  func.func @transform_2(%arg0: i32, %arg1: i32) -> (i32, i32, i32, i32) {
    %c0_i32 = arith.constant 0 : i32
    %c0_i32_0 = arith.constant 0 : i32
    %c0_i32_1 = arith.constant 0 : i32
    %c0_i32_2 = arith.constant 0 : i32
    %c0_i32_3 = arith.constant 0 : i32
    return %c0_i32, %c0_i32_0, %c0_i32_1, %c0_i32_2 : i32, i32, i32, i32
  }
  func.func @transform_3(%arg0: i32, %arg1: i32) -> (i32, i32, i32, i32) {
    %c0_i32 = arith.constant 0 : i32
    %c0_i32_0 = arith.constant 0 : i32
    %c0_i32_1 = arith.constant 0 : i32
    return %arg0, %arg1, %c0_i32, %c0_i32_0 : i32, i32, i32, i32
  }
  func.func @transform_4(%arg0: i32, %arg1: i32) -> (i32, i32, i32, i32) {
    %c0_i32 = arith.constant 0 : i32
    %c0_i32_0 = arith.constant 0 : i32
    %c0_i32_1 = arith.constant 0 : i32
    return %arg0, %arg1, %c0_i32, %c0_i32_0 : i32, i32, i32, i32
  }
  func.func @transform_5(%arg0: i32, %arg1: i32) -> (i32, i32, i32, i32) {
    %c0_i32 = arith.constant 0 : i32
    %c0_i32_0 = arith.constant 0 : i32
    %c0_i32_1 = arith.constant 0 : i32
    return %arg0, %arg1, %c0_i32, %c0_i32_0 : i32, i32, i32, i32
  }
}

module attributes {stable_mosaic.version = 11 : i64} {
  func.func @kernel(%arg0: i32, %arg1: i32, %arg2: memref<1x2x3x256xbf16, #tpu.memory_space<vmem>>, %arg3: memref<1x1x3x256xbf16, #tpu.memory_space<vmem>>, %arg4: memref<2x2x256x64xbf16, #tpu.memory_space<vmem>>, %arg5: memref<1x2x2x64xbf16, #tpu.memory_space<vmem>>, %arg6: memref<1x1x1x64xf32, #tpu.memory_space<vmem>>, %arg7: memref<1x1x1x64xf32, #tpu.memory_space<vmem>>) attributes {dimension_semantics = [#tpu.dimension_semantics<parallel>, #tpu.dimension_semantics<parallel>], iteration_bounds = array<i64: 2, 1>, scalar_prefetch = 0 : i64, scratch_operands = 0 : i64, tpu.core_type = #tpu.core_type<tc>, window_params = [{transform_indices = @transform_0, window_bounds = array<i64: 1, 2, 3, 256>}, {transform_indices = @transform_1, window_bounds = array<i64: 1, 1, 3, 256>}, {pipeline_mode = #tpu.pipeline_mode<synchronous>, transform_indices = @transform_2, window_bounds = array<i64: 2, 2, 256, 64>}, {transform_indices = @transform_3, window_bounds = array<i64: 1, 2, 2, 64>}, {transform_indices = @transform_4, window_bounds = array<i64: 1, 1, 1, 64>}, {transform_indices = @transform_5, window_bounds = array<i64: 1, 1, 1, 64>}]} {
    %c0 = arith.constant 0 : index
    %c0_0 = arith.constant 0 : index
    %c0_1 = arith.constant 0 : index
    %c0_2 = arith.constant 0 : index
    %0 = vector.load %arg2[%c0, %c0_0, %c0_1, %c0_2] : memref<1x2x3x256xbf16, #tpu.memory_space<vmem>>, vector<1x2x3x256xbf16>
    %1 = vector.shape_cast %0 : vector<1x2x3x256xbf16> to vector<2x3x256xbf16>
    %c0_3 = arith.constant 0 : index
    %c0_4 = arith.constant 0 : index
    %c0_5 = arith.constant 0 : index
    %c0_6 = arith.constant 0 : index
    %2 = vector.load %arg3[%c0_3, %c0_4, %c0_5, %c0_6] : memref<1x1x3x256xbf16, #tpu.memory_space<vmem>>, vector<1x1x3x256xbf16>
    %3 = vector.shape_cast %2 : vector<1x1x3x256xbf16> to vector<1x3x256xbf16>
    %4 = tpu.concatenate %1, %3 in 0 : vector<2x3x256xbf16>, vector<1x3x256xbf16> -> vector<3x3x256xbf16>
    %c0_7 = arith.constant 0 : index
    %c0_8 = arith.constant 0 : index
    %c0_9 = arith.constant 0 : index
    %c0_10 = arith.constant 0 : index
    %5 = vector.load %arg4[%c0_7, %c0_8, %c0_9, %c0_10] : memref<2x2x256x64xbf16, #tpu.memory_space<vmem>>, vector<2x2x256x64xbf16>
    %6 = vector.extract_strided_slice %4 {offsets = [0, 0, 0], sizes = [3, 2, 256], strides = [1, 1, 1]} : vector<3x3x256xbf16> to vector<3x2x256xbf16>
    %7 = vector.extract_strided_slice %6 {offsets = [0, 0, 0], sizes = [2, 2, 256], strides = [1, 1, 1]} : vector<3x2x256xbf16> to vector<2x2x256xbf16>
    %8 = vector.shape_cast %7 : vector<2x2x256xbf16> to vector<4x256xbf16>
    %9 = vector.extract_strided_slice %5 {offsets = [0, 0, 0, 0], sizes = [1, 1, 256, 64], strides = [1, 1, 1, 1]} : vector<2x2x256x64xbf16> to vector<1x1x256x64xbf16>
    %10 = vector.shape_cast %9 : vector<1x1x256x64xbf16> to vector<256x64xbf16>
    %cst = arith.constant dense<0.000000e+00> : vector<4x64xf32>
    %11 = tpu.matmul %8, %10, %cst {dimension_numbers = #tpu.dot_dimension_numbers<[1], [0], [0], [1], [0, 0, 1, 1], [], []>} : vector<4x256xbf16>, vector<256x64xbf16>, vector<4x64xf32> -> vector<4x64xf32>
    %12 = vector.extract_strided_slice %6 {offsets = [1, 0, 0], sizes = [2, 2, 256], strides = [1, 1, 1]} : vector<3x2x256xbf16> to vector<2x2x256xbf16>
    %13 = vector.shape_cast %12 : vector<2x2x256xbf16> to vector<4x256xbf16>
    %14 = vector.extract_strided_slice %5 {offsets = [1, 0, 0, 0], sizes = [1, 1, 256, 64], strides = [1, 1, 1, 1]} : vector<2x2x256x64xbf16> to vector<1x1x256x64xbf16>
    %15 = vector.shape_cast %14 : vector<1x1x256x64xbf16> to vector<256x64xbf16>
    %cst_11 = arith.constant dense<0.000000e+00> : vector<4x64xf32>
    %16 = tpu.matmul %13, %15, %cst_11 {dimension_numbers = #tpu.dot_dimension_numbers<[1], [0], [0], [1], [0, 0, 1, 1], [], []>} : vector<4x256xbf16>, vector<256x64xbf16>, vector<4x64xf32> -> vector<4x64xf32>
    %17 = vector.extract_strided_slice %4 {offsets = [0, 1, 0], sizes = [3, 2, 256], strides = [1, 1, 1]} : vector<3x3x256xbf16> to vector<3x2x256xbf16>
    %18 = vector.extract_strided_slice %17 {offsets = [0, 0, 0], sizes = [2, 2, 256], strides = [1, 1, 1]} : vector<3x2x256xbf16> to vector<2x2x256xbf16>
    %19 = vector.shape_cast %18 : vector<2x2x256xbf16> to vector<4x256xbf16>
    %20 = vector.extract_strided_slice %5 {offsets = [0, 1, 0, 0], sizes = [1, 1, 256, 64], strides = [1, 1, 1, 1]} : vector<2x2x256x64xbf16> to vector<1x1x256x64xbf16>
    %21 = vector.shape_cast %20 : vector<1x1x256x64xbf16> to vector<256x64xbf16>
    %cst_12 = arith.constant dense<0.000000e+00> : vector<4x64xf32>
    %22 = tpu.matmul %19, %21, %cst_12 {dimension_numbers = #tpu.dot_dimension_numbers<[1], [0], [0], [1], [0, 0, 1, 1], [], []>} : vector<4x256xbf16>, vector<256x64xbf16>, vector<4x64xf32> -> vector<4x64xf32>
    %23 = vector.extract_strided_slice %17 {offsets = [1, 0, 0], sizes = [2, 2, 256], strides = [1, 1, 1]} : vector<3x2x256xbf16> to vector<2x2x256xbf16>
    %24 = vector.shape_cast %23 : vector<2x2x256xbf16> to vector<4x256xbf16>
    %25 = vector.extract_strided_slice %5 {offsets = [1, 1, 0, 0], sizes = [1, 1, 256, 64], strides = [1, 1, 1, 1]} : vector<2x2x256x64xbf16> to vector<1x1x256x64xbf16>
    %26 = vector.shape_cast %25 : vector<1x1x256x64xbf16> to vector<256x64xbf16>
    %cst_13 = arith.constant dense<0.000000e+00> : vector<4x64xf32>
    %27 = tpu.matmul %24, %26, %cst_13 {dimension_numbers = #tpu.dot_dimension_numbers<[1], [0], [0], [1], [0, 0, 1, 1], [], []>} : vector<4x256xbf16>, vector<256x64xbf16>, vector<4x64xf32> -> vector<4x64xf32>
    %28 = arith.addf %11, %16 : vector<4x64xf32>
    %29 = arith.addf %28, %22 : vector<4x64xf32>
    %30 = arith.addf %29, %27 : vector<4x64xf32>
    %31 = vector.shape_cast %30 : vector<4x64xf32> to vector<2x2x64xf32>
    %32 = vector.shape_cast %31 : vector<2x2x64xf32> to vector<1x2x2x64xf32>
    %33 = arith.truncf %32 : vector<1x2x2x64xf32> to vector<1x2x2x64xbf16>
    %c0_14 = arith.constant 0 : index
    %c0_15 = arith.constant 0 : index
    %c0_16 = arith.constant 0 : index
    %c0_17 = arith.constant 0 : index
    %34 = vector.load %arg5[%c0_14, %c0_15, %c0_16, %c0_17] : memref<1x2x2x64xbf16, #tpu.memory_space<vmem>>, vector<1x2x2x64xbf16>
    tpu.vector_store %arg5[%c0_14, %c0_15, %c0_16, %c0_17], %33 {strides = array<i32>} : memref<1x2x2x64xbf16, #tpu.memory_space<vmem>>, vector<1x2x2x64xbf16>,
    %c2_i32 = arith.constant 2 : i32
    %35 = arith.muli %arg1, %c2_i32 : i32
    %c2_i32_18 = arith.constant 2 : i32
    %36 = arith.subi %c2_i32_18, %35 : i32
    %c2_i32_19 = arith.constant 2 : i32
    %37 = arith.minsi %36, %c2_i32_19 : i32
    %c2_i32_20 = arith.constant 2 : i32
    %38 = arith.muli %37, %c2_i32_20 : i32
    %39 = arith.sitofp %38 : i32 to f32
    %40 = tpu.iota {dimensions = array<i32: 0>} : vector<2x2x1xi32>
    %41 = vector.broadcast %37 : i32 to vector<2x2x1xi32>
    %42 = arith.cmpi slt, %40, %41 : vector<2x2x1xi32>
    %cst_21 = arith.constant 0.000000e+00 : f32
    %43 = vector.shape_cast %42 : vector<2x2x1xi1> to vector<2x2x1xi1>
    %44 = vector.broadcast %43 : vector<2x2x1xi1> to vector<2x2x64xi1>
    %45 = vector.broadcast %cst_21 : f32 to vector<2x2x64xf32>
    %46 = arith.select %44, %31, %45 : vector<2x2x64xi1>, vector<2x2x64xf32>
    %cst_22 = arith.constant dense<0.000000e+00> : vector<2x64xf32>
    %47 = vector.multi_reduction <add>, %46, %cst_22 [0] : vector<2x2x64xf32> to vector<2x64xf32>
    %48 = vector.shape_cast %47 : vector<2x64xf32> to vector<1x2x64xf32>
    %cst_23 = arith.constant dense<0.000000e+00> : vector<1x64xf32>
    %49 = vector.multi_reduction <add>, %48, %cst_23 [1] : vector<1x2x64xf32> to vector<1x64xf32>
    %50 = vector.shape_cast %49 : vector<1x64xf32> to vector<1x1x64xf32>
    %51 = vector.broadcast %39 : f32 to vector<1x1x64xf32>
    %52 = arith.divf %50, %51 : vector<1x1x64xf32>
    %53 = vector.broadcast %52 : vector<1x1x64xf32> to vector<2x2x64xf32>
    %54 = arith.subf %31, %53 : vector<2x2x64xf32>
    %cst_24 = arith.constant 0.000000e+00 : f32
    %55 = vector.shape_cast %42 : vector<2x2x1xi1> to vector<2x2x1xi1>
    %56 = vector.broadcast %55 : vector<2x2x1xi1> to vector<2x2x64xi1>
    %57 = vector.broadcast %cst_24 : f32 to vector<2x2x64xf32>
    %58 = arith.select %56, %54, %57 : vector<2x2x64xi1>, vector<2x2x64xf32>
    %59 = arith.mulf %58, %58 : vector<2x2x64xf32>
    %cst_25 = arith.constant dense<0.000000e+00> : vector<2x64xf32>
    %60 = vector.multi_reduction <add>, %59, %cst_25 [0] : vector<2x2x64xf32> to vector<2x64xf32>
    %61 = vector.shape_cast %60 : vector<2x64xf32> to vector<1x2x64xf32>
    %cst_26 = arith.constant dense<0.000000e+00> : vector<1x64xf32>
    %62 = vector.multi_reduction <add>, %61, %cst_26 [1] : vector<1x2x64xf32> to vector<1x64xf32>
    %63 = vector.shape_cast %62 : vector<1x64xf32> to vector<1x1x64xf32>
    %64 = vector.shape_cast %50 : vector<1x1x64xf32> to vector<1x1x1x64xf32>
    %c0_27 = arith.constant 0 : index
    %c0_28 = arith.constant 0 : index
    %c0_29 = arith.constant 0 : index
    %c0_30 = arith.constant 0 : index
    %65 = vector.load %arg6[%c0_27, %c0_28, %c0_29, %c0_30] : memref<1x1x1x64xf32, #tpu.memory_space<vmem>>, vector<1x1x1x64xf32>
    tpu.vector_store %arg6[%c0_27, %c0_28, %c0_29, %c0_30], %64 {strides = array<i32>} : memref<1x1x1x64xf32, #tpu.memory_space<vmem>>, vector<1x1x1x64xf32>,
    %66 = vector.shape_cast %63 : vector<1x1x64xf32> to vector<1x1x1x64xf32>
    %c0_31 = arith.constant 0 : index
    %c0_32 = arith.constant 0 : index
    %c0_33 = arith.constant 0 : index
    %c0_34 = arith.constant 0 : index
    %67 = vector.load %arg7[%c0_31, %c0_32, %c0_33, %c0_34] : memref<1x1x1x64xf32, #tpu.memory_space<vmem>>, vector<1x1x1x64xf32>
    tpu.vector_store %arg7[%c0_31, %c0_32, %c0_33, %c0_34], %66 {strides = array<i32>} : memref<1x1x1x64xf32, #tpu.memory_space<vmem>>, vector<1x1x1x64xf32>,
    return
  }
  func.func @transform_0(%arg0: i32, %arg1: i32) -> (i32, i32, i32, i32) {
    %c0_i32 = arith.constant 0 : i32
    %c0_i32_0 = arith.constant 0 : i32
    %c0_i32_1 = arith.constant 0 : i32
    return %arg0, %arg1, %c0_i32, %c0_i32_0 : i32, i32, i32, i32
  }
  func.func @transform_1(%arg0: i32, %arg1: i32) -> (i32, i32, i32, i32) {
    %c1_i32 = arith.constant 1 : i32
    %0 = arith.addi %arg1, %c1_i32 : i32
    %c2_i32 = arith.constant 2 : i32
    %1 = arith.muli %c2_i32, %0 : i32
    %c0_i32 = arith.constant 0 : i32
    %2 = arith.addi %1, %c0_i32 : i32
    %c0_i32_0 = arith.constant 0 : i32
    %c0_i32_1 = arith.constant 0 : i32
    %c0_i32_2 = arith.constant 0 : i32
    return %arg0, %2, %c0_i32_0, %c0_i32_1 : i32, i32, i32, i32
  }
  func.func @transform_2(%arg0: i32, %arg1: i32) -> (i32, i32, i32, i32) {
    %c0_i32 = arith.constant 0 : i32
    %c0_i32_0 = arith.constant 0 : i32
    %c0_i32_1 = arith.constant 0 : i32
    %c0_i32_2 = arith.constant 0 : i32
    %c0_i32_3 = arith.constant 0 : i32
    return %c0_i32, %c0_i32_0, %c0_i32_1, %c0_i32_2 : i32, i32, i32, i32
  }
  func.func @transform_3(%arg0: i32, %arg1: i32) -> (i32, i32, i32, i32) {
    %c0_i32 = arith.constant 0 : i32
    %c0_i32_0 = arith.constant 0 : i32
    %c0_i32_1 = arith.constant 0 : i32
    return %arg0, %arg1, %c0_i32, %c0_i32_0 : i32, i32, i32, i32
  }
  func.func @transform_4(%arg0: i32, %arg1: i32) -> (i32, i32, i32, i32) {
    %c0_i32 = arith.constant 0 : i32
    %c0_i32_0 = arith.constant 0 : i32
    %c0_i32_1 = arith.constant 0 : i32
    return %arg0, %arg1, %c0_i32, %c0_i32_0 : i32, i32, i32, i32
  }
  func.func @transform_5(%arg0: i32, %arg1: i32) -> (i32, i32, i32, i32) {
    %c0_i32 = arith.constant 0 : i32
    %c0_i32_0 = arith.constant 0 : i32
    %c0_i32_1 = arith.constant 0 : i32
    return %arg0, %arg1, %c0_i32, %c0_i32_0 : i32, i32, i32, i32
  }
}

module attributes {stable_mosaic.version = 11 : i64} {
  func.func @kernel(%arg0: i32, %arg1: i32, %arg2: memref<1x1x4x64xbf16, #tpu.memory_space<vmem>>, %arg3: memref<1x1x4x64xbf16, #tpu.memory_space<vmem>>, %arg4: memref<1x1x4x64xbf16, #tpu.memory_space<vmem>>, %arg5: memref<1x1x4x64xbf16, #tpu.memory_space<vmem>>, %arg6: memref<4x4x64x128xbf16, #tpu.memory_space<vmem>>, %arg7: memref<1x128xf32, #tpu.memory_space<vmem>>, %arg8: memref<1x1x1x128xf32, #tpu.memory_space<vmem>>) attributes {dimension_semantics = [#tpu.dimension_semantics<parallel>, #tpu.dimension_semantics<parallel>], iteration_bounds = array<i64: 2, 1>, scalar_prefetch = 0 : i64, scratch_operands = 0 : i64, tpu.core_type = #tpu.core_type<tc>, window_params = [{transform_indices = @transform_0, window_bounds = array<i64: 1, 1, 4, 64>}, {transform_indices = @transform_1, window_bounds = array<i64: 1, 1, 4, 64>}, {transform_indices = @transform_2, window_bounds = array<i64: 1, 1, 4, 64>}, {transform_indices = @transform_3, window_bounds = array<i64: 1, 1, 4, 64>}, {pipeline_mode = #tpu.pipeline_mode<synchronous>, transform_indices = @transform_4, window_bounds = array<i64: 4, 4, 64, 128>}, {pipeline_mode = #tpu.pipeline_mode<synchronous>, transform_indices = @transform_5, window_bounds = array<i64: 1, 128>}, {transform_indices = @transform_6, window_bounds = array<i64: 1, 1, 1, 128>}]} {
    %c0 = arith.constant 0 : index
    %c0_0 = arith.constant 0 : index
    %c0_1 = arith.constant 0 : index
    %c0_2 = arith.constant 0 : index
    %0 = vector.load %arg2[%c0, %c0_0, %c0_1, %c0_2] : memref<1x1x4x64xbf16, #tpu.memory_space<vmem>>, vector<1x1x4x64xbf16>
    %1 = vector.shape_cast %0 : vector<1x1x4x64xbf16> to vector<1x4x64xbf16>
    %c0_3 = arith.constant 0 : index
    %c0_4 = arith.constant 0 : index
    %c0_5 = arith.constant 0 : index
    %c0_6 = arith.constant 0 : index
    %2 = vector.load %arg3[%c0_3, %c0_4, %c0_5, %c0_6] : memref<1x1x4x64xbf16, #tpu.memory_space<vmem>>, vector<1x1x4x64xbf16>
    %3 = vector.shape_cast %2 : vector<1x1x4x64xbf16> to vector<1x4x64xbf16>
    %c0_7 = arith.constant 0 : index
    %c0_8 = arith.constant 0 : index
    %c0_9 = arith.constant 0 : index
    %c0_10 = arith.constant 0 : index
    %4 = vector.load %arg4[%c0_7, %c0_8, %c0_9, %c0_10] : memref<1x1x4x64xbf16, #tpu.memory_space<vmem>>, vector<1x1x4x64xbf16>
    %5 = vector.shape_cast %4 : vector<1x1x4x64xbf16> to vector<1x4x64xbf16>
    %c0_11 = arith.constant 0 : index
    %c0_12 = arith.constant 0 : index
    %c0_13 = arith.constant 0 : index
    %c0_14 = arith.constant 0 : index
    %6 = vector.load %arg5[%c0_11, %c0_12, %c0_13, %c0_14] : memref<1x1x4x64xbf16, #tpu.memory_space<vmem>>, vector<1x1x4x64xbf16>
    %7 = vector.shape_cast %6 : vector<1x1x4x64xbf16> to vector<1x4x64xbf16>
    %8 = tpu.concatenate %1, %3, %5, %7 in 0 : vector<1x4x64xbf16>, vector<1x4x64xbf16>, vector<1x4x64xbf16>, vector<1x4x64xbf16> -> vector<4x4x64xbf16>
    %c0_15 = arith.constant 0 : index
    %c0_16 = arith.constant 0 : index
    %c0_17 = arith.constant 0 : index
    %c0_18 = arith.constant 0 : index
    %9 = vector.load %arg6[%c0_15, %c0_16, %c0_17, %c0_18] : memref<4x4x64x128xbf16, #tpu.memory_space<vmem>>, vector<4x4x64x128xbf16>
    %10 = vector.extract_strided_slice %8 {offsets = [0, 0, 0], sizes = [4, 1, 64], strides = [1, 1, 1]} : vector<4x4x64xbf16> to vector<4x1x64xbf16>
    %11 = vector.extract_strided_slice %10 {offsets = [0, 0, 0], sizes = [1, 1, 64], strides = [1, 1, 1]} : vector<4x1x64xbf16> to vector<1x1x64xbf16>
    %12 = vector.shape_cast %11 : vector<1x1x64xbf16> to vector<1x64xbf16>
    %13 = vector.extract_strided_slice %9 {offsets = [0, 0, 0, 0], sizes = [1, 1, 64, 128], strides = [1, 1, 1, 1]} : vector<4x4x64x128xbf16> to vector<1x1x64x128xbf16>
    %14 = vector.shape_cast %13 : vector<1x1x64x128xbf16> to vector<64x128xbf16>
    %cst = arith.constant dense<0.000000e+00> : vector<1x128xf32>
    %15 = tpu.matmul %12, %14, %cst {dimension_numbers = #tpu.dot_dimension_numbers<[1], [0], [0], [1], [0, 0, 1, 1], [], []>} : vector<1x64xbf16>, vector<64x128xbf16>, vector<1x128xf32> -> vector<1x128xf32>
    %16 = vector.extract_strided_slice %10 {offsets = [1, 0, 0], sizes = [1, 1, 64], strides = [1, 1, 1]} : vector<4x1x64xbf16> to vector<1x1x64xbf16>
    %17 = vector.shape_cast %16 : vector<1x1x64xbf16> to vector<1x64xbf16>
    %18 = vector.extract_strided_slice %9 {offsets = [1, 0, 0, 0], sizes = [1, 1, 64, 128], strides = [1, 1, 1, 1]} : vector<4x4x64x128xbf16> to vector<1x1x64x128xbf16>
    %19 = vector.shape_cast %18 : vector<1x1x64x128xbf16> to vector<64x128xbf16>
    %cst_19 = arith.constant dense<0.000000e+00> : vector<1x128xf32>
    %20 = tpu.matmul %17, %19, %cst_19 {dimension_numbers = #tpu.dot_dimension_numbers<[1], [0], [0], [1], [0, 0, 1, 1], [], []>} : vector<1x64xbf16>, vector<64x128xbf16>, vector<1x128xf32> -> vector<1x128xf32>
    %21 = vector.extract_strided_slice %10 {offsets = [2, 0, 0], sizes = [1, 1, 64], strides = [1, 1, 1]} : vector<4x1x64xbf16> to vector<1x1x64xbf16>
    %22 = vector.shape_cast %21 : vector<1x1x64xbf16> to vector<1x64xbf16>
    %23 = vector.extract_strided_slice %9 {offsets = [2, 0, 0, 0], sizes = [1, 1, 64, 128], strides = [1, 1, 1, 1]} : vector<4x4x64x128xbf16> to vector<1x1x64x128xbf16>
    %24 = vector.shape_cast %23 : vector<1x1x64x128xbf16> to vector<64x128xbf16>
    %cst_20 = arith.constant dense<0.000000e+00> : vector<1x128xf32>
    %25 = tpu.matmul %22, %24, %cst_20 {dimension_numbers = #tpu.dot_dimension_numbers<[1], [0], [0], [1], [0, 0, 1, 1], [], []>} : vector<1x64xbf16>, vector<64x128xbf16>, vector<1x128xf32> -> vector<1x128xf32>
    %26 = vector.extract_strided_slice %10 {offsets = [3, 0, 0], sizes = [1, 1, 64], strides = [1, 1, 1]} : vector<4x1x64xbf16> to vector<1x1x64xbf16>
    %27 = vector.shape_cast %26 : vector<1x1x64xbf16> to vector<1x64xbf16>
    %28 = vector.extract_strided_slice %9 {offsets = [3, 0, 0, 0], sizes = [1, 1, 64, 128], strides = [1, 1, 1, 1]} : vector<4x4x64x128xbf16> to vector<1x1x64x128xbf16>
    %29 = vector.shape_cast %28 : vector<1x1x64x128xbf16> to vector<64x128xbf16>
    %cst_21 = arith.constant dense<0.000000e+00> : vector<1x128xf32>
    %30 = tpu.matmul %27, %29, %cst_21 {dimension_numbers = #tpu.dot_dimension_numbers<[1], [0], [0], [1], [0, 0, 1, 1], [], []>} : vector<1x64xbf16>, vector<64x128xbf16>, vector<1x128xf32> -> vector<1x128xf32>
    %31 = vector.extract_strided_slice %8 {offsets = [0, 1, 0], sizes = [4, 1, 64], strides = [1, 1, 1]} : vector<4x4x64xbf16> to vector<4x1x64xbf16>
    %32 = vector.extract_strided_slice %31 {offsets = [0, 0, 0], sizes = [1, 1, 64], strides = [1, 1, 1]} : vector<4x1x64xbf16> to vector<1x1x64xbf16>
    %33 = vector.shape_cast %32 : vector<1x1x64xbf16> to vector<1x64xbf16>
    %34 = vector.extract_strided_slice %9 {offsets = [0, 1, 0, 0], sizes = [1, 1, 64, 128], strides = [1, 1, 1, 1]} : vector<4x4x64x128xbf16> to vector<1x1x64x128xbf16>
    %35 = vector.shape_cast %34 : vector<1x1x64x128xbf16> to vector<64x128xbf16>
    %cst_22 = arith.constant dense<0.000000e+00> : vector<1x128xf32>
    %36 = tpu.matmul %33, %35, %cst_22 {dimension_numbers = #tpu.dot_dimension_numbers<[1], [0], [0], [1], [0, 0, 1, 1], [], []>} : vector<1x64xbf16>, vector<64x128xbf16>, vector<1x128xf32> -> vector<1x128xf32>
    %37 = vector.extract_strided_slice %31 {offsets = [1, 0, 0], sizes = [1, 1, 64], strides = [1, 1, 1]} : vector<4x1x64xbf16> to vector<1x1x64xbf16>
    %38 = vector.shape_cast %37 : vector<1x1x64xbf16> to vector<1x64xbf16>
    %39 = vector.extract_strided_slice %9 {offsets = [1, 1, 0, 0], sizes = [1, 1, 64, 128], strides = [1, 1, 1, 1]} : vector<4x4x64x128xbf16> to vector<1x1x64x128xbf16>
    %40 = vector.shape_cast %39 : vector<1x1x64x128xbf16> to vector<64x128xbf16>
    %cst_23 = arith.constant dense<0.000000e+00> : vector<1x128xf32>
    %41 = tpu.matmul %38, %40, %cst_23 {dimension_numbers = #tpu.dot_dimension_numbers<[1], [0], [0], [1], [0, 0, 1, 1], [], []>} : vector<1x64xbf16>, vector<64x128xbf16>, vector<1x128xf32> -> vector<1x128xf32>
    %42 = vector.extract_strided_slice %31 {offsets = [2, 0, 0], sizes = [1, 1, 64], strides = [1, 1, 1]} : vector<4x1x64xbf16> to vector<1x1x64xbf16>
    %43 = vector.shape_cast %42 : vector<1x1x64xbf16> to vector<1x64xbf16>
    %44 = vector.extract_strided_slice %9 {offsets = [2, 1, 0, 0], sizes = [1, 1, 64, 128], strides = [1, 1, 1, 1]} : vector<4x4x64x128xbf16> to vector<1x1x64x128xbf16>
    %45 = vector.shape_cast %44 : vector<1x1x64x128xbf16> to vector<64x128xbf16>
    %cst_24 = arith.constant dense<0.000000e+00> : vector<1x128xf32>
    %46 = tpu.matmul %43, %45, %cst_24 {dimension_numbers = #tpu.dot_dimension_numbers<[1], [0], [0], [1], [0, 0, 1, 1], [], []>} : vector<1x64xbf16>, vector<64x128xbf16>, vector<1x128xf32> -> vector<1x128xf32>
    %47 = vector.extract_strided_slice %31 {offsets = [3, 0, 0], sizes = [1, 1, 64], strides = [1, 1, 1]} : vector<4x1x64xbf16> to vector<1x1x64xbf16>
    %48 = vector.shape_cast %47 : vector<1x1x64xbf16> to vector<1x64xbf16>
    %49 = vector.extract_strided_slice %9 {offsets = [3, 1, 0, 0], sizes = [1, 1, 64, 128], strides = [1, 1, 1, 1]} : vector<4x4x64x128xbf16> to vector<1x1x64x128xbf16>
    %50 = vector.shape_cast %49 : vector<1x1x64x128xbf16> to vector<64x128xbf16>
    %cst_25 = arith.constant dense<0.000000e+00> : vector<1x128xf32>
    %51 = tpu.matmul %48, %50, %cst_25 {dimension_numbers = #tpu.dot_dimension_numbers<[1], [0], [0], [1], [0, 0, 1, 1], [], []>} : vector<1x64xbf16>, vector<64x128xbf16>, vector<1x128xf32> -> vector<1x128xf32>
    %52 = vector.extract_strided_slice %8 {offsets = [0, 2, 0], sizes = [4, 1, 64], strides = [1, 1, 1]} : vector<4x4x64xbf16> to vector<4x1x64xbf16>
    %53 = vector.extract_strided_slice %52 {offsets = [0, 0, 0], sizes = [1, 1, 64], strides = [1, 1, 1]} : vector<4x1x64xbf16> to vector<1x1x64xbf16>
    %54 = vector.shape_cast %53 : vector<1x1x64xbf16> to vector<1x64xbf16>
    %55 = vector.extract_strided_slice %9 {offsets = [0, 2, 0, 0], sizes = [1, 1, 64, 128], strides = [1, 1, 1, 1]} : vector<4x4x64x128xbf16> to vector<1x1x64x128xbf16>
    %56 = vector.shape_cast %55 : vector<1x1x64x128xbf16> to vector<64x128xbf16>
    %cst_26 = arith.constant dense<0.000000e+00> : vector<1x128xf32>
    %57 = tpu.matmul %54, %56, %cst_26 {dimension_numbers = #tpu.dot_dimension_numbers<[1], [0], [0], [1], [0, 0, 1, 1], [], []>} : vector<1x64xbf16>, vector<64x128xbf16>, vector<1x128xf32> -> vector<1x128xf32>
    %58 = vector.extract_strided_slice %52 {offsets = [1, 0, 0], sizes = [1, 1, 64], strides = [1, 1, 1]} : vector<4x1x64xbf16> to vector<1x1x64xbf16>
    %59 = vector.shape_cast %58 : vector<1x1x64xbf16> to vector<1x64xbf16>
    %60 = vector.extract_strided_slice %9 {offsets = [1, 2, 0, 0], sizes = [1, 1, 64, 128], strides = [1, 1, 1, 1]} : vector<4x4x64x128xbf16> to vector<1x1x64x128xbf16>
    %61 = vector.shape_cast %60 : vector<1x1x64x128xbf16> to vector<64x128xbf16>
    %cst_27 = arith.constant dense<0.000000e+00> : vector<1x128xf32>
    %62 = tpu.matmul %59, %61, %cst_27 {dimension_numbers = #tpu.dot_dimension_numbers<[1], [0], [0], [1], [0, 0, 1, 1], [], []>} : vector<1x64xbf16>, vector<64x128xbf16>, vector<1x128xf32> -> vector<1x128xf32>
    %63 = vector.extract_strided_slice %52 {offsets = [2, 0, 0], sizes = [1, 1, 64], strides = [1, 1, 1]} : vector<4x1x64xbf16> to vector<1x1x64xbf16>
    %64 = vector.shape_cast %63 : vector<1x1x64xbf16> to vector<1x64xbf16>
    %65 = vector.extract_strided_slice %9 {offsets = [2, 2, 0, 0], sizes = [1, 1, 64, 128], strides = [1, 1, 1, 1]} : vector<4x4x64x128xbf16> to vector<1x1x64x128xbf16>
    %66 = vector.shape_cast %65 : vector<1x1x64x128xbf16> to vector<64x128xbf16>
    %cst_28 = arith.constant dense<0.000000e+00> : vector<1x128xf32>
    %67 = tpu.matmul %64, %66, %cst_28 {dimension_numbers = #tpu.dot_dimension_numbers<[1], [0], [0], [1], [0, 0, 1, 1], [], []>} : vector<1x64xbf16>, vector<64x128xbf16>, vector<1x128xf32> -> vector<1x128xf32>
    %68 = vector.extract_strided_slice %52 {offsets = [3, 0, 0], sizes = [1, 1, 64], strides = [1, 1, 1]} : vector<4x1x64xbf16> to vector<1x1x64xbf16>
    %69 = vector.shape_cast %68 : vector<1x1x64xbf16> to vector<1x64xbf16>
    %70 = vector.extract_strided_slice %9 {offsets = [3, 2, 0, 0], sizes = [1, 1, 64, 128], strides = [1, 1, 1, 1]} : vector<4x4x64x128xbf16> to vector<1x1x64x128xbf16>
    %71 = vector.shape_cast %70 : vector<1x1x64x128xbf16> to vector<64x128xbf16>
    %cst_29 = arith.constant dense<0.000000e+00> : vector<1x128xf32>
    %72 = tpu.matmul %69, %71, %cst_29 {dimension_numbers = #tpu.dot_dimension_numbers<[1], [0], [0], [1], [0, 0, 1, 1], [], []>} : vector<1x64xbf16>, vector<64x128xbf16>, vector<1x128xf32> -> vector<1x128xf32>
    %73 = vector.extract_strided_slice %8 {offsets = [0, 3, 0], sizes = [4, 1, 64], strides = [1, 1, 1]} : vector<4x4x64xbf16> to vector<4x1x64xbf16>
    %74 = vector.extract_strided_slice %73 {offsets = [0, 0, 0], sizes = [1, 1, 64], strides = [1, 1, 1]} : vector<4x1x64xbf16> to vector<1x1x64xbf16>
    %75 = vector.shape_cast %74 : vector<1x1x64xbf16> to vector<1x64xbf16>
    %76 = vector.extract_strided_slice %9 {offsets = [0, 3, 0, 0], sizes = [1, 1, 64, 128], strides = [1, 1, 1, 1]} : vector<4x4x64x128xbf16> to vector<1x1x64x128xbf16>
    %77 = vector.shape_cast %76 : vector<1x1x64x128xbf16> to vector<64x128xbf16>
    %cst_30 = arith.constant dense<0.000000e+00> : vector<1x128xf32>
    %78 = tpu.matmul %75, %77, %cst_30 {dimension_numbers = #tpu.dot_dimension_numbers<[1], [0], [0], [1], [0, 0, 1, 1], [], []>} : vector<1x64xbf16>, vector<64x128xbf16>, vector<1x128xf32> -> vector<1x128xf32>
    %79 = vector.extract_strided_slice %73 {offsets = [1, 0, 0], sizes = [1, 1, 64], strides = [1, 1, 1]} : vector<4x1x64xbf16> to vector<1x1x64xbf16>
    %80 = vector.shape_cast %79 : vector<1x1x64xbf16> to vector<1x64xbf16>
    %81 = vector.extract_strided_slice %9 {offsets = [1, 3, 0, 0], sizes = [1, 1, 64, 128], strides = [1, 1, 1, 1]} : vector<4x4x64x128xbf16> to vector<1x1x64x128xbf16>
    %82 = vector.shape_cast %81 : vector<1x1x64x128xbf16> to vector<64x128xbf16>
    %cst_31 = arith.constant dense<0.000000e+00> : vector<1x128xf32>
    %83 = tpu.matmul %80, %82, %cst_31 {dimension_numbers = #tpu.dot_dimension_numbers<[1], [0], [0], [1], [0, 0, 1, 1], [], []>} : vector<1x64xbf16>, vector<64x128xbf16>, vector<1x128xf32> -> vector<1x128xf32>
    %84 = vector.extract_strided_slice %73 {offsets = [2, 0, 0], sizes = [1, 1, 64], strides = [1, 1, 1]} : vector<4x1x64xbf16> to vector<1x1x64xbf16>
    %85 = vector.shape_cast %84 : vector<1x1x64xbf16> to vector<1x64xbf16>
    %86 = vector.extract_strided_slice %9 {offsets = [2, 3, 0, 0], sizes = [1, 1, 64, 128], strides = [1, 1, 1, 1]} : vector<4x4x64x128xbf16> to vector<1x1x64x128xbf16>
    %87 = vector.shape_cast %86 : vector<1x1x64x128xbf16> to vector<64x128xbf16>
    %cst_32 = arith.constant dense<0.000000e+00> : vector<1x128xf32>
    %88 = tpu.matmul %85, %87, %cst_32 {dimension_numbers = #tpu.dot_dimension_numbers<[1], [0], [0], [1], [0, 0, 1, 1], [], []>} : vector<1x64xbf16>, vector<64x128xbf16>, vector<1x128xf32> -> vector<1x128xf32>
    %89 = vector.extract_strided_slice %73 {offsets = [3, 0, 0], sizes = [1, 1, 64], strides = [1, 1, 1]} : vector<4x1x64xbf16> to vector<1x1x64xbf16>
    %90 = vector.shape_cast %89 : vector<1x1x64xbf16> to vector<1x64xbf16>
    %91 = vector.extract_strided_slice %9 {offsets = [3, 3, 0, 0], sizes = [1, 1, 64, 128], strides = [1, 1, 1, 1]} : vector<4x4x64x128xbf16> to vector<1x1x64x128xbf16>
    %92 = vector.shape_cast %91 : vector<1x1x64x128xbf16> to vector<64x128xbf16>
    %cst_33 = arith.constant dense<0.000000e+00> : vector<1x128xf32>
    %93 = tpu.matmul %90, %92, %cst_33 {dimension_numbers = #tpu.dot_dimension_numbers<[1], [0], [0], [1], [0, 0, 1, 1], [], []>} : vector<1x64xbf16>, vector<64x128xbf16>, vector<1x128xf32> -> vector<1x128xf32>
    %94 = arith.addf %15, %20 : vector<1x128xf32>
    %95 = arith.addf %94, %25 : vector<1x128xf32>
    %96 = arith.addf %95, %30 : vector<1x128xf32>
    %97 = arith.addf %96, %36 : vector<1x128xf32>
    %98 = arith.addf %97, %41 : vector<1x128xf32>
    %99 = arith.addf %98, %46 : vector<1x128xf32>
    %100 = arith.addf %99, %51 : vector<1x128xf32>
    %101 = arith.addf %100, %57 : vector<1x128xf32>
    %102 = arith.addf %101, %62 : vector<1x128xf32>
    %103 = arith.addf %102, %67 : vector<1x128xf32>
    %104 = arith.addf %103, %72 : vector<1x128xf32>
    %105 = arith.addf %104, %78 : vector<1x128xf32>
    %106 = arith.addf %105, %83 : vector<1x128xf32>
    %107 = arith.addf %106, %88 : vector<1x128xf32>
    %108 = arith.addf %107, %93 : vector<1x128xf32>
    %c0_34 = arith.constant 0 : index
    %c0_35 = arith.constant 0 : index
    %109 = vector.load %arg7[%c0_34, %c0_35] : memref<1x128xf32, #tpu.memory_space<vmem>>, vector<1x128xf32>
    %110 = arith.addf %108, %109 : vector<1x128xf32>
    %111 = vector.shape_cast %110 : vector<1x128xf32> to vector<1x1x128xf32>
    %112 = vector.shape_cast %111 : vector<1x1x128xf32> to vector<1x1x1x128xf32>
    %c0_36 = arith.constant 0 : index
    %c0_37 = arith.constant 0 : index
    %c0_38 = arith.constant 0 : index
    %c0_39 = arith.constant 0 : index
    %113 = vector.load %arg8[%c0_36, %c0_37, %c0_38, %c0_39] : memref<1x1x1x128xf32, #tpu.memory_space<vmem>>, vector<1x1x1x128xf32>
    tpu.vector_store %arg8[%c0_36, %c0_37, %c0_38, %c0_39], %112 {strides = array<i32>} : memref<1x1x1x128xf32, #tpu.memory_space<vmem>>, vector<1x1x1x128xf32>,
    return
  }
  func.func @transform_0(%arg0: i32, %arg1: i32) -> (i32, i32, i32, i32) {
    %c0_i32 = arith.constant 0 : i32
    %c0_i32_0 = arith.constant 0 : i32
    %c0_i32_1 = arith.constant 0 : i32
    return %arg0, %arg1, %c0_i32, %c0_i32_0 : i32, i32, i32, i32
  }
  func.func @transform_1(%arg0: i32, %arg1: i32) -> (i32, i32, i32, i32) {
    %c1_i32 = arith.constant 1 : i32
    %0 = arith.addi %arg1, %c1_i32 : i32
    %c1_i32_0 = arith.constant 1 : i32
    %1 = arith.muli %c1_i32_0, %0 : i32
    %c0_i32 = arith.constant 0 : i32
    %2 = arith.addi %1, %c0_i32 : i32
    %c0_i32_1 = arith.constant 0 : i32
    %c0_i32_2 = arith.constant 0 : i32
    %c0_i32_3 = arith.constant 0 : i32
    return %arg0, %2, %c0_i32_1, %c0_i32_2 : i32, i32, i32, i32
  }
  func.func @transform_2(%arg0: i32, %arg1: i32) -> (i32, i32, i32, i32) {
    %c1_i32 = arith.constant 1 : i32
    %0 = arith.addi %arg1, %c1_i32 : i32
    %c1_i32_0 = arith.constant 1 : i32
    %1 = arith.muli %c1_i32_0, %0 : i32
    %c1_i32_1 = arith.constant 1 : i32
    %2 = arith.addi %1, %c1_i32_1 : i32
    %c0_i32 = arith.constant 0 : i32
    %c0_i32_2 = arith.constant 0 : i32
    %c0_i32_3 = arith.constant 0 : i32
    return %arg0, %2, %c0_i32, %c0_i32_2 : i32, i32, i32, i32
  }
  func.func @transform_3(%arg0: i32, %arg1: i32) -> (i32, i32, i32, i32) {
    %c1_i32 = arith.constant 1 : i32
    %0 = arith.addi %arg1, %c1_i32 : i32
    %c1_i32_0 = arith.constant 1 : i32
    %1 = arith.muli %c1_i32_0, %0 : i32
    %c2_i32 = arith.constant 2 : i32
    %2 = arith.addi %1, %c2_i32 : i32
    %c0_i32 = arith.constant 0 : i32
    %c0_i32_1 = arith.constant 0 : i32
    %c0_i32_2 = arith.constant 0 : i32
    return %arg0, %2, %c0_i32, %c0_i32_1 : i32, i32, i32, i32
  }
  func.func @transform_4(%arg0: i32, %arg1: i32) -> (i32, i32, i32, i32) {
    %c0_i32 = arith.constant 0 : i32
    %c0_i32_0 = arith.constant 0 : i32
    %c0_i32_1 = arith.constant 0 : i32
    %c0_i32_2 = arith.constant 0 : i32
    %c0_i32_3 = arith.constant 0 : i32
    return %c0_i32, %c0_i32_0, %c0_i32_1, %c0_i32_2 : i32, i32, i32, i32
  }
  func.func @transform_5(%arg0: i32, %arg1: i32) -> (i32, i32) {
    %c0_i32 = arith.constant 0 : i32
    %c0_i32_0 = arith.constant 0 : i32
    %c0_i32_1 = arith.constant 0 : i32
    return %c0_i32, %c0_i32_0 : i32, i32
  }
  func.func @transform_6(%arg0: i32, %arg1: i32) -> (i32, i32, i32, i32) {
    %c0_i32 = arith.constant 0 : i32
    %c0_i32_0 = arith.constant 0 : i32
    %c0_i32_1 = arith.constant 0 : i32
    return %arg0, %arg1, %c0_i32, %c0_i32_0 : i32, i32, i32, i32
  }
}

</mosaic_0001>

<llo_original>
// kernel: convs_forward.4
$region0: #{convs_forward.4}
  #allocation0 [shape = 'u32[]', space=smem, size = 0x4, offset = 0x4, fixed_abs, tag = 'smem constant byte address 0x4 - core index']
  #allocation1 [shape = 'u32[72,128]{1,0:T(1,128)}', space=vmem, size = 0x9000, scoped, tag = 'internal scratch']
  %s0 = inlined_call_operand.vmem [shape: bf16[2,9,9,12], index: 0, kind: input, shape index: {}, may-alias: {0,1}]
  %s1 = inlined_call_operand.vmem [shape: bf16[2,9,9,12], index: 1, kind: input, shape index: {}, may-alias: {0,1}]
  %s2 = inlined_call_operand.vmem [shape: bf16[2,2,12,64], index: 2, kind: input, shape index: {}]
  %s3 = inlined_call_operand.vmem [shape: f32[1,64], index: 3, kind: input, shape index: {}]
  %s4 = inlined_call_operand.vmem [shape: bf16[2,8,8,64], index: 4, kind: output, shape index: {}]
  %s5 = sld [smem:[#allocation0]]
  $region49: #{convs_forward.4} parent=0
    _
  %s7 = ssub.s32 1, %s5
  %s8 = scalar_select 0, %s7, %s5
  loop: start=0, step=1, limit=4
  $region2: #{convs_forward.4} parent=0 // loop_pre_header
    _
  $region3: #{convs_forward.4} parent=0 // loop_header
    %s10 = sphi 0, %s14
    %p11 = scmp.ge.s32.totalorder %s10, 4
    %s17 = sphi 0, %s29
    %s18 = sphi 0, %s25
    %s19 = sphi 0, %s17
    %s20 = sphi 0, %s18
    %s21 = sphi 0, %s19
    %s22 = sphi 0, %s20
    %s34 = sphi 0, %s36
    %s37 = sphi 0, %s34
    %s38 = sphi 0, %s37
    %s54 = sphi 0, %s38
    %s66 = sphi 0, %s68
    %s69 = sphi 0, %s66
    %s70 = sphi 0, %s69
    %s86 = sphi 0, %s70
    %s90 = sphi 0, %s90
    %s92 = sphi 0, %s90
    %s93 = sphi 0, %s92
    %s107 = sphi 0, %s93
    %s111 = sphi 0, %s111
    %s113 = sphi 0, %s111
    %s114 = sphi 0, %s113
    %s128 = sphi 0, %s114
    %s136 = sphi 0, %s138
    %s139 = sphi 0, %s136
    %s140 = sphi 0, %s139
    %s156 = sphi 0, %s140
  $region4: #{convs_forward.4} parent=0 // loop_header_branch
    %13 = sbr.rel (%p11) target = $region8
  $region5: #{convs_forward.4} parent=0 // loop_body
    %s15 = ssub.s32 %s10, 1
    %s16 = ssub.s32 %s10, 2
    %s23 = sadd.s32 1, %s18
    %p24 = scmp.ge.s32.totalorder %s23, 1
    %s25 = scalar_select %p24, 0, %s23
    %s26 = sadd.s32 1, %s17
    %s27 = scalar_select %p24, %s26, %s17
    %p28 = scmp.ge.s32.totalorder %s27, 2
    %s29 = scalar_select %p28, 0, %s27
    %s30 = ssub.s32 %s17, %s29
    %s31 = ssub.s32 %s18, %s25
    %s32 = sor.u32 %s30, %s31
    %p33 = scmp.eq.s32.totalorder %s32, 0
    %s35 = sadd.s32 %s34, 1
    %s36 = scalar_select %p33, %s34, %s35
    %p39 = pneg %p33
    %p40 = scmp.eq.s32.totalorder %s10, 1
    %p41 = por %p39, %p40
    %p42 = scmp.ne.s32.totalorder %s34, %s37
    %p43 = scmp.eq.s32.totalorder %s10, 0
    %p44 = por %p42, %p43
    %p45 = scmp.ne.s32.totalorder %s34, %s37
    %p46 = scmp.eq.s32.totalorder %s15, 1
    %p47 = por %p45, %p46
    %p48 = scmp.ne.s32.totalorder %s37, %s38
    %p49 = scmp.eq.s32.totalorder %s15, 0
    %p50 = por %p48, %p49
    %p51 = scmp.ne.s32.totalorder %s37, %s38
    %p52 = scmp.eq.s32.totalorder %s16, 1
    %p53 = por %p51, %p52
    %p55 = scmp.ne.s32.totalorder %s38, %s54
    %p56 = scmp.eq.s32.totalorder %s16, 0
    %p57 = por %p55, %p56
    %s58 = sadd.s32 %s18, 1
    %s59 = smul.u32 %s58, 8
    %s60 = sadd.s32 %s25, 1
    %s61 = smul.u32 %s60, 8
    %s62 = ssub.s32 %s17, %s29
    %s63 = ssub.s32 %s59, %s61
    %s64 = sor.u32 %s62, %s63
    %p65 = scmp.eq.s32.totalorder %s64, 0
    %s67 = sadd.s32 %s66, 1
    %s68 = scalar_select %p65, %s66, %s67
    %p71 = pneg %p65
    %p72 = scmp.eq.s32.totalorder %s10, 1
    %p73 = por %p71, %p72
    %p74 = scmp.ne.s32.totalorder %s66, %s69
    %p75 = scmp.eq.s32.totalorder %s10, 0
    %p76 = por %p74, %p75
    %p77 = scmp.ne.s32.totalorder %s66, %s69
    %p78 = scmp.eq.s32.totalorder %s15, 1
    %p79 = por %p77, %p78
    %p80 = scmp.ne.s32.totalorder %s69, %s70
    %p81 = scmp.eq.s32.totalorder %s15, 0
    %p82 = por %p80, %p81
    %p83 = scmp.ne.s32.totalorder %s69, %s70
    %p84 = scmp.eq.s32.totalorder %s16, 1
    %p85 = por %p83, %p84
    %p87 = scmp.ne.s32.totalorder %s70, %s86
    %p88 = scmp.eq.s32.totalorder %s16, 0
    %p89 = por %p87, %p88
    %s91 = sadd.s32 %s90, 1
    %p94 = scmp.eq.s32.totalorder %s10, 1
    %p95 = scmp.ne.s32.totalorder %s90, %s92
    %p96 = scmp.eq.s32.totalorder %s10, 0
    %p97 = por %p95, %p96
    %p98 = scmp.ne.s32.totalorder %s90, %s92
    %p99 = scmp.eq.s32.totalorder %s15, 1
    %p100 = por %p98, %p99
    %p101 = scmp.ne.s32.totalorder %s92, %s93
    %p102 = scmp.eq.s32.totalorder %s15, 0
    %p103 = por %p101, %p102
    %p104 = scmp.ne.s32.totalorder %s92, %s93
    %p105 = scmp.eq.s32.totalorder %s16, 1
    %p106 = por %p104, %p105
    %p108 = scmp.ne.s32.totalorder %s93, %s107
    %p109 = scmp.eq.s32.totalorder %s16, 0
    %p110 = por %p108, %p109
    %s112 = sadd.s32 %s111, 1
    %p115 = scmp.eq.s32.totalorder %s10, 1
    %p116 = scmp.ne.s32.totalorder %s111, %s113
    %p117 = scmp.eq.s32.totalorder %s10, 0
    %p118 = por %p116, %p117
    %p119 = scmp.ne.s32.totalorder %s111, %s113
    %p120 = scmp.eq.s32.totalorder %s15, 1
    %p121 = por %p119, %p120
    %p122 = scmp.ne.s32.totalorder %s113, %s114
    %p123 = scmp.eq.s32.totalorder %s15, 0
    %p124 = por %p122, %p123
    %p125 = scmp.ne.s32.totalorder %s113, %s114
    %p126 = scmp.eq.s32.totalorder %s16, 1
    %p127 = por %p125, %p126
    %p129 = scmp.ne.s32.totalorder %s114, %s128
    %p130 = scmp.eq.s32.totalorder %s16, 0
    %p131 = por %p129, %p130
    %s132 = ssub.s32 %s17, %s29
    %s133 = ssub.s32 %s18, %s25
    %s134 = sor.u32 %s132, %s133
    %p135 = scmp.eq.s32.totalorder %s134, 0
    %s137 = sadd.s32 %s136, 1
    %s138 = scalar_select %p135, %s136, %s137
    %p141 = pneg %p135
    %p142 = scmp.eq.s32.totalorder %s10, 1
    %p143 = por %p141, %p142
    %p144 = scmp.ne.s32.totalorder %s136, %s139
    %p145 = scmp.eq.s32.totalorder %s10, 0
    %p146 = por %p144, %p145
    %p147 = scmp.ne.s32.totalorder %s136, %s139
    %p148 = scmp.eq.s32.totalorder %s15, 1
    %p149 = por %p147, %p148
    %p150 = scmp.ne.s32.totalorder %s139, %s140
    %p151 = scmp.eq.s32.totalorder %s15, 0
    %p152 = por %p150, %p151
    %p153 = scmp.ne.s32.totalorder %s139, %s140
    %p154 = scmp.eq.s32.totalorder %s16, 1
    %p155 = por %p153, %p154
    %p157 = scmp.ne.s32.totalorder %s140, %s156
    %p158 = scmp.eq.s32.totalorder %s16, 0
    %p159 = por %p157, %p158
    %p160 = scmp.le.s32.totalorder 1, %s10
    %p161 = scmp.lt.s32.totalorder %s10, 3
    %p162 = pnand %p160, %p161
    %p163 = pneg %p162
    // Predicated region
    $region9: #{convs_forward.4} parent=5 // pred_check
      _
    $region10: #{convs_forward.4} parent=5 // pred_check_branch
      %165 = sbr.rel (%p162) target = $region12
    $region11: #{convs_forward.4} parent=5 // pred_region
      %s166 = ssub.s32 %s10, 1
      // Predicated region
      $region13: #{convs_forward.4} parent=11 // pred_check
        %p167 = pneg %p103
      $region14: #{convs_forward.4} parent=11 // pred_check_branch
        %169 = sbr.rel (%p167) target = $region16
      $region15: #{convs_forward.4} parent=11 // pred_region
        _
      $region16: #{convs_forward.4} parent=11 // pred_fallthru
        _
      // Predicated region
      $region17: #{convs_forward.4} parent=11 // pred_check
        %p170 = pneg %p124
      $region18: #{convs_forward.4} parent=11 // pred_check_branch
        %172 = sbr.rel (%p170) target = $region20
      $region19: #{convs_forward.4} parent=11 // pred_region
        _
      $region20: #{convs_forward.4} parent=11 // pred_fallthru
        _
    $region12: #{convs_forward.4} parent=5 // pred_fallthru
      _
    %p173 = scmp.lt.s32.totalorder %s10, 2
    // Predicated region
    $region21: #{convs_forward.4} parent=5 // pred_check
      %p174 = pneg %p173
    $region22: #{convs_forward.4} parent=5 // pred_check_branch
      %176 = sbr.rel (%p174) target = $region24
    $region23: #{convs_forward.4} parent=5 // pred_region
      // Predicated region
      $region25: #{convs_forward.4} parent=23 // pred_check
        %p177 = pneg %p44
      $region26: #{convs_forward.4} parent=23 // pred_check_branch
        %179 = sbr.rel (%p177) target = $region28
      $region27: #{convs_forward.4} parent=23 // pred_region
        %s180 = smul.u32 8, %s18
        %s181 = ssub.s32 9, %s180
        %p182 = scmp.lt.s32.totalorder %s181, 8
        %s183 = scalar_select %p182, %s181, 8
        %s184 = smul.u32 4, %s183
        %s185 = smul.u32 %s184, 2
        %p186 = scmp.lt.s32.totalorder %s17, 1
        %s187 = scalar_select %p186, %s17, 1
        %p188 = scmp.lt.s32.totalorder %s180, 8
        %s189 = scalar_select %p188, %s180, 8
        %s190 = smul.addr %s189, 2
        %s191 = smul.addr %s187, 18
        %s192 = sadd.s32 %s190, %s191
        %s193 = smul.addr %s192, 4
        %s194 = scalar_lea.vmem %s0, %s193
        %s195 = smul.u32 8, %s18
        %s196 = ssub.s32 9, %s195
        %p197 = scmp.lt.s32.totalorder %s196, 8
        %s198 = scalar_select %p197, %s196, 8
        %s199 = smul.u32 4, %s198
        %s200 = smul.u32 %s199, 2
      $region28: #{convs_forward.4} parent=23 // pred_fallthru
        _
      // Predicated region
      $region29: #{convs_forward.4} parent=23 // pred_check
        %p201 = pneg %p76
      $region30: #{convs_forward.4} parent=23 // pred_check_branch
        %203 = sbr.rel (%p201) target = $region32
      $region31: #{convs_forward.4} parent=23 // pred_region
        %s204 = sadd.s32 %s18, 1
        %s205 = smul.u32 %s204, 8
        %p206 = scmp.lt.s32.totalorder %s17, 1
        %s207 = scalar_select %p206, %s17, 1
        %p208 = scmp.lt.s32.totalorder %s205, 8
        %s209 = scalar_select %p208, %s205, 8
        %s210 = smul.addr %s209, 2
        %s211 = smul.addr %s207, 18
        %s212 = sadd.s32 %s210, %s211
        %s213 = smul.addr %s212, 4
        %s214 = scalar_lea.vmem %s1, %s213
        %s215 = sadd.s32 %s18, 1
        %s216 = smul.u32 %s215, 8
      $region32: #{convs_forward.4} parent=23 // pred_fallthru
        _
    $region24: #{convs_forward.4} parent=5 // pred_fallthru
      _
    %p217 = scmp.le.s32.totalorder 1, %s10
    %p218 = scmp.lt.s32.totalorder %s10, 3
    %p219 = pnand %p217, %p218
    %p220 = pneg %p219
    // Predicated region
    $region33: #{convs_forward.4} parent=5 // pred_check
      _
    $region34: #{convs_forward.4} parent=5 // pred_check_branch
      %222 = sbr.rel (%p219) target = $region36
    $region35: #{convs_forward.4} parent=5 // pred_region
      %s223 = ssub.s32 %s10, 1
      %s224 = smul.u32 8, %s20
      %s225 = ssub.s32 9, %s224
      %p226 = scmp.lt.s32.totalorder %s225, 8
      %s227 = scalar_select %p226, %s225, 8
      %s228 = smul.u32 4, %s227
      %s229 = smul.u32 %s228, 2
      %p230 = scmp.lt.s32.totalorder %s19, 1
      %s231 = scalar_select %p230, %s19, 1
      %p232 = scmp.lt.s32.totalorder %s224, 8
      %s233 = scalar_select %p232, %s224, 8
      %s234 = smul.addr %s233, 2
      %s235 = smul.addr %s231, 18
      %s236 = sadd.s32 %s234, %s235
      %s237 = smul.addr %s236, 4
      %s238 = scalar_lea.vmem %s0, %s237
      %p239 = pneg %p50
      %p240 = pneg %p47
      %s241 = sadd.s32 %s20, 1
      %s242 = smul.u32 %s241, 8
      %p243 = scmp.lt.s32.totalorder %s19, 1
      %s244 = scalar_select %p243, %s19, 1
      %p245 = scmp.lt.s32.totalorder %s242, 8
      %s246 = scalar_select %p245, %s242, 8
      %s247 = smul.addr %s246, 2
      %s248 = smul.addr %s244, 18
      %s249 = sadd.s32 %s247, %s248
      %s250 = smul.addr %s249, 4
      %s251 = scalar_lea.vmem %s1, %s250
      %p252 = pneg %p82
      %p253 = pneg %p79
      %p254 = pneg %p103
      %p255 = pneg %p100
      %p256 = pneg %p124
      %p257 = pneg %p121
      %p258 = pneg %p152
      %p259 = pneg %p149
      %s260 = smul.u32 8, %s20
      %p261 = scmp.lt.s32.totalorder %s19, 1
      %s262 = scalar_select %p261, %s19, 1
      %p263 = scmp.lt.s32.totalorder %s260, 7
      %s264 = scalar_select %p263, %s260, 7
      %s265 = smul.addr %s262, 8
      %s266 = sadd.s32 %s264, %s265
      %s267 = smul.addr %s266, 4
      %s268 = scalar_lea.vmem %s4, %s267
      %s269 = smul.u32 8, %s20
      %s270 = ssub.s32 9, %s269
      %p271 = scmp.lt.s32.totalorder %s270, 8
      %s272 = scalar_select %p271, %s270, 8
      %s273 = smul.u32 4, %s272
      %s274 = smul.u32 %s273, 2
      %p275 = scmp.lt.s32.totalorder %s19, 1
      %s276 = scalar_select %p275, %s19, 1
      %p277 = scmp.lt.s32.totalorder %s269, 8
      %s278 = scalar_select %p277, %s269, 8
      %s279 = smul.addr %s278, 2
      %s280 = smul.addr %s276, 18
      %s281 = sadd.s32 %s279, %s280
      %s282 = smul.addr %s281, 4
      %s283 = scalar_lea.vmem %s0, %s282
      %s284 = smul.u32 8, %s20
      %s285 = ssub.s32 9, %s284
      %p286 = scmp.lt.s32.totalorder %s285, 8
      %s287 = scalar_select %p286, %s285, 8
      %s288 = smul.u32 4, %s287
      %s289 = smul.u32 %s288, 2
      %s290 = sadd.s32 %s20, 1
      %s291 = smul.u32 %s290, 8
      %p292 = scmp.lt.s32.totalorder %s19, 1
      %s293 = scalar_select %p292, %s19, 1
      %p294 = scmp.lt.s32.totalorder %s291, 8
      %s295 = scalar_select %p294, %s291, 8
      %s296 = smul.addr %s295, 2
      %s297 = smul.addr %s293, 18
      %s298 = sadd.s32 %s296, %s297
      %s299 = smul.addr %s298, 4
      %s300 = scalar_lea.vmem %s1, %s299
      %s301 = sadd.s32 %s20, 1
      %s302 = smul.u32 %s301, 8
      %s303 = smul.u32 8, %s20
      %p304 = scmp.lt.s32.totalorder %s19, 1
      %s305 = scalar_select %p304, %s19, 1
      %p306 = scmp.lt.s32.totalorder %s303, 7
      %s307 = scalar_select %p306, %s303, 7
      %s308 = smul.addr %s305, 8
      %s309 = sadd.s32 %s307, %s308
      %s310 = smul.addr %s309, 4
      %s311 = scalar_lea.vmem %s4, %s310
      %s312 = smul.u32 8, %s20
      %v314 = vld [vmem:[%s283] sm:$0xf]
      %v315 = vld [vmem:[%s283 + $0x4] sm:$0x1]
      %v316 = vld [vmem:[%s283 + $0x8] sm:$0xf]
      %v317 = vld [vmem:[%s283 + $0xc] sm:$0x1]
      %v318 = vld [vmem:[%s283 + $0x10] sm:$0xf]
      %v319 = vld [vmem:[%s283 + $0x14] sm:$0x1]
      %v320 = vld [vmem:[%s283 + $0x18] sm:$0xf]
      %v321 = vld [vmem:[%s283 + $0x1c] sm:$0x1]
      %v322 = vld [vmem:[%s283 + $0x20] sm:$0xf]
      %v323 = vld [vmem:[%s283 + $0x24] sm:$0x1]
      %v324 = vld [vmem:[%s283 + $0x28] sm:$0xf]
      %v325 = vld [vmem:[%s283 + $0x2c] sm:$0x1]
      %v326 = vld [vmem:[%s283 + $0x30] sm:$0xf]
      %v327 = vld [vmem:[%s283 + $0x34] sm:$0x1]
      %v328 = vld [vmem:[%s283 + $0x38] sm:$0xf]
      %v329 = vld [vmem:[%s283 + $0x3c] sm:$0x1]
      %v330 = vld [vmem:[%s300] sm:$0xf]
      %v331 = vld [vmem:[%s300 + $0x4] sm:$0x1]
      %v332 = vld [vmem:[%s2] sm:$0xf]
      %v333 = vld [vmem:[%s2 + $0x4] sm:$0x3]
      %v334 = vld [vmem:[%s2 + $0x8] sm:$0xf]
      %v335 = vld [vmem:[%s2 + $0xc] sm:$0x3]
      %v336 = vld [vmem:[%s2 + $0x10] sm:$0xf]
      %v337 = vld [vmem:[%s2 + $0x14] sm:$0x3]
      %v338 = vld [vmem:[%s2 + $0x18] sm:$0xf]
      %v339 = vld [vmem:[%s2 + $0x1c] sm:$0x3]
      %v348 = vunpack.c.l.b16 %v316
      %v349 = vunpack.c.l.b16 %v318
      %v350 = vunpack.c.l.b16 %v320
      %v351 = vunpack.c.l.b16 %v322
      %v352 = vunpack.c.l.b16 %v324
      %v353 = vunpack.c.l.b16 %v326
      %v354 = vunpack.c.l.b16 %v328
      %v355 = vunpack.c.l.b16 %v330
      %v356 = vpack.c.b16 %v349, %v348
      %v357 = vpack.c.b16 %v351, %v350
      %v358 = vpack.c.b16 %v353, %v352
      %v359 = vpack.c.b16 %v355, %v354
      %v362 = vunpack.c.l.b16 %v336
      %v363 = vunpack.c.l.b16 %v337
      %v364 = vpack.c.b16 %v363, %v362
      %vm365 = vcmask 97280
      %v367 = vsel %vm365, %v356, 0
      %v370 = vsel %vm365, %v357, 0
      %v373 = vsel %vm365, %v358, 0
      %v376 = vsel %vm365, %v359, 0
      %vm378 = vcmask 1045504
      %v380 = vsel %vm378, %v364, 0
      %382 = vmatpush.bf16.msra.mxu0 0
      %383 = vmatpush.bf16.msra.mxu0 0
      %384 = vmatpush.bf16.msra.mxu0 0
      %385 = vmatpush.bf16.msra.mxu0 0
      %386 = vmatpush.bf16.msra.mxu0 0
      %387 = vmatpush.bf16.msra.mxu0 0
      %388 = vmatpush.bf16.msra.mxu0 0
      %389 = vmatpush.bf16.msra.mxu0 %v380
      %390 = vmatmul.bf16.gmra.mxu0 %v367
      %v391 = vpop.f32.mrf.mxu0
      %v392 = vadd.f32 0.0, %v391
      %v393 = vpop.f32.mrf.mxu0
      %v394 = vadd.f32 0.0, %v393
      %395 = vmatmul.bf16.gmra.mxu0 %v370
      %v396 = vpop.f32.mrf.mxu0
      %v397 = vadd.f32 0.0, %v396
      %v398 = vpop.f32.mrf.mxu0
      %v399 = vadd.f32 0.0, %v398
      %400 = vmatmul.bf16.gmra.mxu0 %v373
      %v401 = vpop.f32.mrf.mxu0
      %v402 = vadd.f32 0.0, %v401
      %v403 = vpop.f32.mrf.mxu0
      %v404 = vadd.f32 0.0, %v403
      %405 = vmatmul.bf16.gmra.mxu0 %v376
      %v406 = vpop.f32.mrf.mxu0
      %v407 = vadd.f32 0.0, %v406
      %v408 = vpop.f32.mrf.mxu0
      %v409 = vadd.f32 0.0, %v408
      %410 = vdwg.mxu0
      %vm411 = vsmask.f32 3328
      %vm412 = vsmask.f32 7440
      %vm413 = vmor %vm411, %vm412
      %v415 = vshrl.u32 %v314, 16
      %v417 = vrot.slane %v415, 4
      %v418 = vshll.u32 %v314, 16
      %v420 = vrot.slane %v418, 5
      %v421 = vor.u32 %v417, %v420
      %v422 = vrot.slane %v421, 4
      %v424 = vshll.u32 %v315, 16
      %v426 = vrot.slane %v424, 5
      %v427 = vsel %vm413, %v422, %v426
      %v429 = vshrl.u32 %v316, 16
      %v431 = vrot.slane %v429, 4
      %v432 = vshll.u32 %v316, 16
      %v434 = vrot.slane %v432, 5
      %v435 = vor.u32 %v431, %v434
      %v436 = vrot.slane %v435, 4
      %v438 = vshll.u32 %v317, 16
      %v440 = vrot.slane %v438, 5
      %v441 = vsel %vm413, %v436, %v440
      %v443 = vshrl.u32 %v318, 16
      %v445 = vrot.slane %v443, 4
      %v446 = vshll.u32 %v318, 16
      %v448 = vrot.slane %v446, 5
      %v449 = vor.u32 %v445, %v448
      %v450 = vrot.slane %v449, 4
      %v452 = vshll.u32 %v319, 16
      %v454 = vrot.slane %v452, 5
      %v455 = vsel %vm413, %v450, %v454
      %v457 = vshrl.u32 %v320, 16
      %v459 = vrot.slane %v457, 4
      %v460 = vshll.u32 %v320, 16
      %v462 = vrot.slane %v460, 5
      %v463 = vor.u32 %v459, %v462
      %v464 = vrot.slane %v463, 4
      %v466 = vshll.u32 %v321, 16
      %v468 = vrot.slane %v466, 5
      %v469 = vsel %vm413, %v464, %v468
      %v471 = vshrl.u32 %v322, 16
      %v473 = vrot.slane %v471, 4
      %v474 = vshll.u32 %v322, 16
      %v476 = vrot.slane %v474, 5
      %v477 = vor.u32 %v473, %v476
      %v478 = vrot.slane %v477, 4
      %v480 = vshll.u32 %v323, 16
      %v482 = vrot.slane %v480, 5
      %v483 = vsel %vm413, %v478, %v482
      %v485 = vshrl.u32 %v324, 16
      %v487 = vrot.slane %v485, 4
      %v488 = vshll.u32 %v324, 16
      %v490 = vrot.slane %v488, 5
      %v491 = vor.u32 %v487, %v490
      %v492 = vrot.slane %v491, 4
      %v494 = vshll.u32 %v325, 16
      %v496 = vrot.slane %v494, 5
      %v497 = vsel %vm413, %v492, %v496
      %v499 = vshrl.u32 %v326, 16
      %v501 = vrot.slane %v499, 4
      %v502 = vshll.u32 %v326, 16
      %v504 = vrot.slane %v502, 5
      %v505 = vor.u32 %v501, %v504
      %v506 = vrot.slane %v505, 4
      %v508 = vshll.u32 %v327, 16
      %v510 = vrot.slane %v508, 5
      %v511 = vsel %vm413, %v506, %v510
      %v513 = vshrl.u32 %v328, 16
      %v515 = vrot.slane %v513, 4
      %v516 = vshll.u32 %v328, 16
      %v518 = vrot.slane %v516, 5
      %v519 = vor.u32 %v515, %v518
      %v520 = vrot.slane %v519, 4
      %v522 = vshll.u32 %v329, 16
      %v524 = vrot.slane %v522, 5
      %v525 = vsel %vm413, %v520, %v524
      %v526 = vunpack.c.l.b16 %v427
      %v527 = vunpack.c.l.b16 %v441
      %v528 = vunpack.c.l.b16 %v455
      %v529 = vunpack.c.l.b16 %v469
      %v530 = vunpack.c.l.b16 %v483
      %v531 = vunpack.c.l.b16 %v497
      %v532 = vunpack.c.l.b16 %v511
      %v533 = vunpack.c.l.b16 %v525
      %v534 = vpack.c.b16 %v527, %v526
      %v535 = vpack.c.b16 %v529, %v528
      %v536 = vpack.c.b16 %v531, %v530
      %v537 = vpack.c.b16 %v533, %v532
      %v540 = vunpack.c.l.b16 %v334
      %v541 = vunpack.c.l.b16 %v335
      %v542 = vpack.c.b16 %v541, %v540
      %v544 = vsel %vm365, %v534, 0
      %v547 = vsel %vm365, %v535, 0
      %v550 = vsel %vm365, %v536, 0
      %v553 = vsel %vm365, %v537, 0
      %v556 = vsel %vm378, %v542, 0
      %558 = vmatpush.bf16.msra.mxu0 0
      %559 = vmatpush.bf16.msra.mxu0 0
      %560 = vmatpush.bf16.msra.mxu0 0
      %561 = vmatpush.bf16.msra.mxu0 0
      %562 = vmatpush.bf16.msra.mxu0 0
      %563 = vmatpush.bf16.msra.mxu0 0
      %564 = vmatpush.bf16.msra.mxu0 0
      %565 = vmatpush.bf16.msra.mxu0 %v556
      %566 = vmatmul.bf16.gmra.mxu0 %v544
      %v567 = vpop.f32.mrf.mxu0
      %v568 = vadd.f32 0.0, %v567
      %v569 = vpop.f32.mrf.mxu0
      %v570 = vadd.f32 0.0, %v569
      %571 = vmatmul.bf16.gmra.mxu0 %v547
      %v572 = vpop.f32.mrf.mxu0
      %v573 = vadd.f32 0.0, %v572
      %v574 = vpop.f32.mrf.mxu0
      %v575 = vadd.f32 0.0, %v574
      %576 = vmatmul.bf16.gmra.mxu0 %v550
      %v577 = vpop.f32.mrf.mxu0
      %v578 = vadd.f32 0.0, %v577
      %v579 = vpop.f32.mrf.mxu0
      %v580 = vadd.f32 0.0, %v579
      %581 = vmatmul.bf16.gmra.mxu0 %v553
      %v582 = vpop.f32.mrf.mxu0
      %v583 = vadd.f32 0.0, %v582
      %v584 = vpop.f32.mrf.mxu0
      %v585 = vadd.f32 0.0, %v584
      %586 = vdwg.mxu0
      %v588 = vshrl.u32 %v330, 16
      %v590 = vrot.slane %v588, 4
      %v591 = vshll.u32 %v330, 16
      %v593 = vrot.slane %v591, 5
      %v594 = vor.u32 %v590, %v593
      %v595 = vrot.slane %v594, 4
      %v597 = vshll.u32 %v331, 16
      %v599 = vrot.slane %v597, 5
      %v600 = vsel %vm413, %v595, %v599
      %v601 = vunpack.c.l.b16 %v600
      %v602 = vpack.c.b16 %v528, %v527
      %v603 = vpack.c.b16 %v530, %v529
      %v604 = vpack.c.b16 %v532, %v531
      %v605 = vpack.c.b16 %v601, %v533
      %v608 = vunpack.c.l.b16 %v338
      %v609 = vunpack.c.l.b16 %v339
      %v610 = vpack.c.b16 %v609, %v608
      %v612 = vsel %vm365, %v602, 0
      %v615 = vsel %vm365, %v603, 0
      %v618 = vsel %vm365, %v604, 0
      %v621 = vsel %vm365, %v605, 0
      %v624 = vsel %vm378, %v610, 0
      %626 = vmatpush.bf16.msra.mxu0 0
      %627 = vmatpush.bf16.msra.mxu0 0
      %628 = vmatpush.bf16.msra.mxu0 0
      %629 = vmatpush.bf16.msra.mxu0 0
      %630 = vmatpush.bf16.msra.mxu0 0
      %631 = vmatpush.bf16.msra.mxu0 0
      %632 = vmatpush.bf16.msra.mxu0 0
      %633 = vmatpush.bf16.msra.mxu0 %v624
      %634 = vmatmul.bf16.gmra.mxu0 %v612
      %v635 = vpop.f32.mrf.mxu0
      %v636 = vadd.f32 0.0, %v635
      %v637 = vpop.f32.mrf.mxu0
      %v638 = vadd.f32 0.0, %v637
      %639 = vmatmul.bf16.gmra.mxu0 %v615
      %v640 = vpop.f32.mrf.mxu0
      %v641 = vadd.f32 0.0, %v640
      %v642 = vpop.f32.mrf.mxu0
      %v643 = vadd.f32 0.0, %v642
      %644 = vmatmul.bf16.gmra.mxu0 %v618
      %v645 = vpop.f32.mrf.mxu0
      %v646 = vadd.f32 0.0, %v645
      %v647 = vpop.f32.mrf.mxu0
      %v648 = vadd.f32 0.0, %v647
      %649 = vmatmul.bf16.gmra.mxu0 %v621
      %v650 = vpop.f32.mrf.mxu0
      %v651 = vadd.f32 0.0, %v650
      %v652 = vpop.f32.mrf.mxu0
      %v653 = vadd.f32 0.0, %v652
      %654 = vdwg.mxu0
      %v656 = vunpack.c.l.b16 %v314
      %v657 = vpack.c.b16 %v348, %v656
      %v658 = vpack.c.b16 %v350, %v349
      %v659 = vpack.c.b16 %v352, %v351
      %v660 = vpack.c.b16 %v354, %v353
      %v663 = vunpack.c.l.b16 %v332
      %v664 = vunpack.c.l.b16 %v333
      %v665 = vpack.c.b16 %v664, %v663
      %v667 = vsel %vm365, %v657, 0
      %v670 = vsel %vm365, %v658, 0
      %v673 = vsel %vm365, %v659, 0
      %v676 = vsel %vm365, %v660, 0
      %v679 = vsel %vm378, %v665, 0
      %681 = vmatpush.bf16.msra.mxu0 0
      %682 = vmatpush.bf16.msra.mxu0 0
      %683 = vmatpush.bf16.msra.mxu0 0
      %684 = vmatpush.bf16.msra.mxu0 0
      %685 = vmatpush.bf16.msra.mxu0 0
      %686 = vmatpush.bf16.msra.mxu0 0
      %687 = vmatpush.bf16.msra.mxu0 0
      %688 = vmatpush.bf16.msra.mxu0 %v679
      %689 = vmatmul.bf16.gmra.mxu0 %v667
      %v690 = vpop.f32.mrf.mxu0
      %v691 = vadd.f32 %v392, %v690
      %v692 = vpop.f32.mrf.mxu0
      %v693 = vadd.f32 %v394, %v692
      %694 = vmatmul.bf16.gmra.mxu0 %v670
      %v695 = vpop.f32.mrf.mxu0
      %v696 = vadd.f32 %v397, %v695
      %v697 = vpop.f32.mrf.mxu0
      %v698 = vadd.f32 %v399, %v697
      %699 = vmatmul.bf16.gmra.mxu0 %v673
      %v700 = vpop.f32.mrf.mxu0
      %v701 = vadd.f32 %v402, %v700
      %v702 = vpop.f32.mrf.mxu0
      %v703 = vadd.f32 %v404, %v702
      %704 = vmatmul.bf16.gmra.mxu0 %v676
      %v705 = vpop.f32.mrf.mxu0
      %v706 = vadd.f32 %v407, %v705
      %v707 = vpop.f32.mrf.mxu0
      %v708 = vadd.f32 %v409, %v707
      %709 = vdwg.mxu0
      %v710 = vadd.f32 %v691, %v568
      %v711 = vadd.f32 %v693, %v570
      %v712 = vadd.f32 %v696, %v573
      %v713 = vadd.f32 %v698, %v575
      %v714 = vadd.f32 %v701, %v578
      %v715 = vadd.f32 %v703, %v580
      %v716 = vadd.f32 %v706, %v583
      %v717 = vadd.f32 %v708, %v585
      %v718 = vadd.f32 %v710, %v636
      %v719 = vadd.f32 %v711, %v638
      %v720 = vadd.f32 %v712, %v641
      %v721 = vadd.f32 %v713, %v643
      %v722 = vadd.f32 %v714, %v646
      %v723 = vadd.f32 %v715, %v648
      %v724 = vadd.f32 %v716, %v651
      %v725 = vadd.f32 %v717, %v653
      %v726 = vld [vmem:[%s3] sm:$0x1]
      %v728 = vperm.slane %v726, 0
      %v730 = vadd.f32 %v718, %v728
      %v731 = vadd.f32 %v719, %v728
      %v732 = vadd.f32 %v720, %v728
      %v733 = vadd.f32 %v721, %v728
      %v734 = vadd.f32 %v722, %v728
      %v735 = vadd.f32 %v723, %v728
      %v736 = vadd.f32 %v724, %v728
      %v737 = vadd.f32 %v725, %v728
      %vm738 = vcmp.ge.f32.partialorder %v730, 0.0
      %vm739 = vcmp.ge.f32.partialorder %v731, 0.0
      %vm740 = vcmp.ge.f32.partialorder %v732, 0.0
      %vm741 = vcmp.ge.f32.partialorder %v733, 0.0
      %vm742 = vcmp.ge.f32.partialorder %v734, 0.0
      %vm743 = vcmp.ge.f32.partialorder %v735, 0.0
      %vm744 = vcmp.ge.f32.partialorder %v736, 0.0
      %vm745 = vcmp.ge.f32.partialorder %v737, 0.0
      %v746 = vmul.f32 %v730, 0.2
      %v747 = vmul.f32 %v731, 0.2
      %v748 = vmul.f32 %v732, 0.2
      %v749 = vmul.f32 %v733, 0.2
      %v750 = vmul.f32 %v734, 0.2
      %v751 = vmul.f32 %v735, 0.2
      %v752 = vmul.f32 %v736, 0.2
      %v753 = vmul.f32 %v737, 0.2
      %v754 = vsel %vm738, %v730, %v746
      %v755 = vsel %vm739, %v731, %v747
      %v756 = vsel %vm740, %v732, %v748
      %v757 = vsel %vm741, %v733, %v749
      %v758 = vsel %vm742, %v734, %v750
      %v759 = vsel %vm743, %v735, %v751
      %v760 = vsel %vm744, %v736, %v752
      %v761 = vsel %vm745, %v737, %v753
      %v762 = vpack.c.bf16 %v754, %v754
      %v763 = vpack.c.bf16 %v755, %v755
      %v764 = vpack.c.bf16 %v756, %v756
      %v765 = vpack.c.bf16 %v757, %v757
      %v766 = vpack.c.bf16 %v758, %v758
      %v767 = vpack.c.bf16 %v759, %v759
      %v768 = vpack.c.bf16 %v760, %v760
      %v769 = vpack.c.bf16 %v761, %v761
      %vm770 = vcmask 519168
      %771 = vst.msk [vmem:[%s311] sm:$0xf] %vm770, %v762
      %772 = vst.msk [vmem:[%s311 + $0x4] sm:$0xf] %vm770, %v763
      %773 = vst.msk [vmem:[%s311 + $0x8] sm:$0xf] %vm770, %v764
      %774 = vst.msk [vmem:[%s311 + $0xc] sm:$0xf] %vm770, %v765
      %775 = vst.msk [vmem:[%s311 + $0x10] sm:$0xf] %vm770, %v766
      %776 = vst.msk [vmem:[%s311 + $0x14] sm:$0xf] %vm770, %v767
      %777 = vst.msk [vmem:[%s311 + $0x18] sm:$0xf] %vm770, %v768
      %778 = vst.msk [vmem:[%s311 + $0x1c] sm:$0xf] %vm770, %v769
      %s779 = smul.u32 8, %s20
      %p780 = scmp.lt.s32.totalorder %s19, 1
      %s781 = scalar_select %p780, %s19, 1
      %p782 = scmp.lt.s32.totalorder %s779, 7
      %s783 = scalar_select %p782, %s779, 7
      %s784 = smul.addr %s781, 8
      %s785 = sadd.s32 %s783, %s784
      %s786 = smul.addr %s785, 4
      %s787 = scalar_lea.vmem %s4, %s786
      // Predicated region
      $region37: #{convs_forward.4} parent=35 // pred_check
        %p788 = pneg %p149
      $region38: #{convs_forward.4} parent=35 // pred_check_branch
        %790 = sbr.rel (%p788) target = $region40
      $region39: #{convs_forward.4} parent=35 // pred_region
        %s791 = smul.u32 8, %s20
      $region40: #{convs_forward.4} parent=35 // pred_fallthru
        _
    $region36: #{convs_forward.4} parent=5 // pred_fallthru
      _
    %p792 = scmp.le.s32.totalorder 2, %s10
    // Predicated region
    $region41: #{convs_forward.4} parent=5 // pred_check
      %p793 = pneg %p792
    $region42: #{convs_forward.4} parent=5 // pred_check_branch
      %795 = sbr.rel (%p793) target = $region44
    $region43: #{convs_forward.4} parent=5 // pred_region
      %s796 = ssub.s32 %s10, 2
      // Predicated region
      $region45: #{convs_forward.4} parent=43 // pred_check
        %p797 = pneg %p155
      $region46: #{convs_forward.4} parent=43 // pred_check_branch
        %799 = sbr.rel (%p797) target = $region48
      $region47: #{convs_forward.4} parent=43 // pred_region
        %s800 = smul.u32 8, %s22
        %p801 = scmp.lt.s32.totalorder %s21, 1
        %s802 = scalar_select %p801, %s21, 1
        %p803 = scmp.lt.s32.totalorder %s800, 7
        %s804 = scalar_select %p803, %s800, 7
        %s805 = smul.addr %s802, 8
        %s806 = sadd.s32 %s804, %s805
        %s807 = smul.addr %s806, 4
        %s808 = scalar_lea.vmem %s4, %s807
      $region48: #{convs_forward.4} parent=43 // pred_fallthru
        _
    $region44: #{convs_forward.4} parent=5 // pred_fallthru
      _
  $region6: #{convs_forward.4} parent=0 // loop_footer
    %s14 = sadd.s32 1, %s10
  $region7: #{convs_forward.4} parent=0 // loop_footer_branch
    %9 = sbr.rel target = $region3
  $region8: #{convs_forward.4} parent=0 // loop_exit
    _

// kernel: convs_forward.5
$region0: #{convs_forward.5}
  #allocation0 [shape = 'u32[]', space=smem, size = 0x4, offset = 0x4, fixed_abs, tag = 'smem constant byte address 0x4 - core index']
  #allocation1 [shape = 'u32[72,128]{1,0:T(1,128)}', space=vmem, size = 0x9000, scoped, tag = 'internal scratch']
  %s0 = inlined_call_operand.vmem [shape: bf16[2,5,5,256], index: 0, kind: input, shape index: {}, may-alias: {0,1}]
  %s1 = inlined_call_operand.vmem [shape: bf16[2,5,5,256], index: 1, kind: input, shape index: {}, may-alias: {0,1}]
  %s2 = inlined_call_operand.vmem [shape: bf16[2,2,256,64], index: 2, kind: input, shape index: {}]
  %s3 = inlined_call_operand.vmem [shape: bf16[2,4,4,64], index: 3, kind: output, shape index: {0}]
  %s4 = inlined_call_operand.vmem [shape: f32[2,1,1,64], index: 4, kind: output, shape index: {1}]
  %s5 = inlined_call_operand.vmem [shape: f32[2,1,1,64], index: 5, kind: output, shape index: {2}]
  %6 = xla_tuple %s3, %s4, %s5
  %s7 = sld [smem:[#allocation0]]
  $region61: #{convs_forward.5} parent=0
    _
  %s9 = ssub.s32 1, %s7
  %s10 = scalar_select 0, %s9, %s7
  loop: start=0, step=1, limit=4
  $region2: #{convs_forward.5} parent=0 // loop_pre_header
    _
  $region3: #{convs_forward.5} parent=0 // loop_header
    %s12 = sphi 0, %s16
    %p13 = scmp.ge.s32.totalorder %s12, 4
    %s19 = sphi 0, %s31
    %s20 = sphi 0, %s27
    %s21 = sphi 0, %s19
    %s22 = sphi 0, %s20
    %s23 = sphi 0, %s21
    %s24 = sphi 0, %s22
    %s36 = sphi 0, %s38
    %s39 = sphi 0, %s36
    %s40 = sphi 0, %s39
    %s56 = sphi 0, %s40
    %s68 = sphi 0, %s70
    %s71 = sphi 0, %s68
    %s72 = sphi 0, %s71
    %s88 = sphi 0, %s72
    %s92 = sphi 0, %s92
    %s94 = sphi 0, %s92
    %s95 = sphi 0, %s94
    %s109 = sphi 0, %s95
    %s117 = sphi 0, %s119
    %s120 = sphi 0, %s117
    %s121 = sphi 0, %s120
    %s137 = sphi 0, %s121
    %s145 = sphi 0, %s147
    %s148 = sphi 0, %s145
    %s149 = sphi 0, %s148
    %s165 = sphi 0, %s149
    %s173 = sphi 0, %s175
    %s176 = sphi 0, %s173
    %s177 = sphi 0, %s176
    %s193 = sphi 0, %s177
  $region4: #{convs_forward.5} parent=0 // loop_header_branch
    %15 = sbr.rel (%p13) target = $region8
  $region5: #{convs_forward.5} parent=0 // loop_body
    %s17 = ssub.s32 %s12, 1
    %s18 = ssub.s32 %s12, 2
    %s25 = sadd.s32 1, %s20
    %p26 = scmp.ge.s32.totalorder %s25, 1
    %s27 = scalar_select %p26, 0, %s25
    %s28 = sadd.s32 1, %s19
    %s29 = scalar_select %p26, %s28, %s19
    %p30 = scmp.ge.s32.totalorder %s29, 2
    %s31 = scalar_select %p30, 0, %s29
    %s32 = ssub.s32 %s19, %s31
    %s33 = ssub.s32 %s20, %s27
    %s34 = sor.u32 %s32, %s33
    %p35 = scmp.eq.s32.totalorder %s34, 0
    %s37 = sadd.s32 %s36, 1
    %s38 = scalar_select %p35, %s36, %s37
    %p41 = pneg %p35
    %p42 = scmp.eq.s32.totalorder %s12, 1
    %p43 = por %p41, %p42
    %p44 = scmp.ne.s32.totalorder %s36, %s39
    %p45 = scmp.eq.s32.totalorder %s12, 0
    %p46 = por %p44, %p45
    %p47 = scmp.ne.s32.totalorder %s36, %s39
    %p48 = scmp.eq.s32.totalorder %s17, 1
    %p49 = por %p47, %p48
    %p50 = scmp.ne.s32.totalorder %s39, %s40
    %p51 = scmp.eq.s32.totalorder %s17, 0
    %p52 = por %p50, %p51
    %p53 = scmp.ne.s32.totalorder %s39, %s40
    %p54 = scmp.eq.s32.totalorder %s18, 1
    %p55 = por %p53, %p54
    %p57 = scmp.ne.s32.totalorder %s40, %s56
    %p58 = scmp.eq.s32.totalorder %s18, 0
    %p59 = por %p57, %p58
    %s60 = sadd.s32 %s20, 1
    %s61 = smul.u32 %s60, 4
    %s62 = sadd.s32 %s27, 1
    %s63 = smul.u32 %s62, 4
    %s64 = ssub.s32 %s19, %s31
    %s65 = ssub.s32 %s61, %s63
    %s66 = sor.u32 %s64, %s65
    %p67 = scmp.eq.s32.totalorder %s66, 0
    %s69 = sadd.s32 %s68, 1
    %s70 = scalar_select %p67, %s68, %s69
    %p73 = pneg %p67
    %p74 = scmp.eq.s32.totalorder %s12, 1
    %p75 = por %p73, %p74
    %p76 = scmp.ne.s32.totalorder %s68, %s71
    %p77 = scmp.eq.s32.totalorder %s12, 0
    %p78 = por %p76, %p77
    %p79 = scmp.ne.s32.totalorder %s68, %s71
    %p80 = scmp.eq.s32.totalorder %s17, 1
    %p81 = por %p79, %p80
    %p82 = scmp.ne.s32.totalorder %s71, %s72
    %p83 = scmp.eq.s32.totalorder %s17, 0
    %p84 = por %p82, %p83
    %p85 = scmp.ne.s32.totalorder %s71, %s72
    %p86 = scmp.eq.s32.totalorder %s18, 1
    %p87 = por %p85, %p86
    %p89 = scmp.ne.s32.totalorder %s72, %s88
    %p90 = scmp.eq.s32.totalorder %s18, 0
    %p91 = por %p89, %p90
    %s93 = sadd.s32 %s92, 1
    %p96 = scmp.eq.s32.totalorder %s12, 1
    %p97 = scmp.ne.s32.totalorder %s92, %s94
    %p98 = scmp.eq.s32.totalorder %s12, 0
    %p99 = por %p97, %p98
    %p100 = scmp.ne.s32.totalorder %s92, %s94
    %p101 = scmp.eq.s32.totalorder %s17, 1
    %p102 = por %p100, %p101
    %p103 = scmp.ne.s32.totalorder %s94, %s95
    %p104 = scmp.eq.s32.totalorder %s17, 0
    %p105 = por %p103, %p104
    %p106 = scmp.ne.s32.totalorder %s94, %s95
    %p107 = scmp.eq.s32.totalorder %s18, 1
    %p108 = por %p106, %p107
    %p110 = scmp.ne.s32.totalorder %s95, %s109
    %p111 = scmp.eq.s32.totalorder %s18, 0
    %p112 = por %p110, %p111
    %s113 = ssub.s32 %s19, %s31
    %s114 = ssub.s32 %s20, %s27
    %s115 = sor.u32 %s113, %s114
    %p116 = scmp.eq.s32.totalorder %s115, 0
    %s118 = sadd.s32 %s117, 1
    %s119 = scalar_select %p116, %s117, %s118
    %p122 = pneg %p116
    %p123 = scmp.eq.s32.totalorder %s12, 1
    %p124 = por %p122, %p123
    %p125 = scmp.ne.s32.totalorder %s117, %s120
    %p126 = scmp.eq.s32.totalorder %s12, 0
    %p127 = por %p125, %p126
    %p128 = scmp.ne.s32.totalorder %s117, %s120
    %p129 = scmp.eq.s32.totalorder %s17, 1
    %p130 = por %p128, %p129
    %p131 = scmp.ne.s32.totalorder %s120, %s121
    %p132 = scmp.eq.s32.totalorder %s17, 0
    %p133 = por %p131, %p132
    %p134 = scmp.ne.s32.totalorder %s120, %s121
    %p135 = scmp.eq.s32.totalorder %s18, 1
    %p136 = por %p134, %p135
    %p138 = scmp.ne.s32.totalorder %s121, %s137
    %p139 = scmp.eq.s32.totalorder %s18, 0
    %p140 = por %p138, %p139
    %s141 = ssub.s32 %s19, %s31
    %s142 = ssub.s32 %s20, %s27
    %s143 = sor.u32 %s141, %s142
    %p144 = scmp.eq.s32.totalorder %s143, 0
    %s146 = sadd.s32 %s145, 1
    %s147 = scalar_select %p144, %s145, %s146
    %p150 = pneg %p144
    %p151 = scmp.eq.s32.totalorder %s12, 1
    %p152 = por %p150, %p151
    %p153 = scmp.ne.s32.totalorder %s145, %s148
    %p154 = scmp.eq.s32.totalorder %s12, 0
    %p155 = por %p153, %p154
    %p156 = scmp.ne.s32.totalorder %s145, %s148
    %p157 = scmp.eq.s32.totalorder %s17, 1
    %p158 = por %p156, %p157
    %p159 = scmp.ne.s32.totalorder %s148, %s149
    %p160 = scmp.eq.s32.totalorder %s17, 0
    %p161 = por %p159, %p160
    %p162 = scmp.ne.s32.totalorder %s148, %s149
    %p163 = scmp.eq.s32.totalorder %s18, 1
    %p164 = por %p162, %p163
    %p166 = scmp.ne.s32.totalorder %s149, %s165
    %p167 = scmp.eq.s32.totalorder %s18, 0
    %p168 = por %p166, %p167
    %s169 = ssub.s32 %s19, %s31
    %s170 = ssub.s32 %s20, %s27
    %s171 = sor.u32 %s169, %s170
    %p172 = scmp.eq.s32.totalorder %s171, 0
    %s174 = sadd.s32 %s173, 1
    %s175 = scalar_select %p172, %s173, %s174
    %p178 = pneg %p172
    %p179 = scmp.eq.s32.totalorder %s12, 1
    %p180 = por %p178, %p179
    %p181 = scmp.ne.s32.totalorder %s173, %s176
    %p182 = scmp.eq.s32.totalorder %s12, 0
    %p183 = por %p181, %p182
    %p184 = scmp.ne.s32.totalorder %s173, %s176
    %p185 = scmp.eq.s32.totalorder %s17, 1
    %p186 = por %p184, %p185
    %p187 = scmp.ne.s32.totalorder %s176, %s177
    %p188 = scmp.eq.s32.totalorder %s17, 0
    %p189 = por %p187, %p188
    %p190 = scmp.ne.s32.totalorder %s176, %s177
    %p191 = scmp.eq.s32.totalorder %s18, 1
    %p192 = por %p190, %p191
    %p194 = scmp.ne.s32.totalorder %s177, %s193
    %p195 = scmp.eq.s32.totalorder %s18, 0
    %p196 = por %p194, %p195
    %p197 = scmp.le.s32.totalorder 1, %s12
    %p198 = scmp.lt.s32.totalorder %s12, 3
    %p199 = pnand %p197, %p198
    %p200 = pneg %p199
    // Predicated region
    $region9: #{convs_forward.5} parent=5 // pred_check
      _
    $region10: #{convs_forward.5} parent=5 // pred_check_branch
      %202 = sbr.rel (%p199) target = $region12
    $region11: #{convs_forward.5} parent=5 // pred_region
      %s203 = ssub.s32 %s12, 1
      // Predicated region
      $region13: #{convs_forward.5} parent=11 // pred_check
        %p204 = pneg %p105
      $region14: #{convs_forward.5} parent=11 // pred_check_branch
        %206 = sbr.rel (%p204) target = $region16
      $region15: #{convs_forward.5} parent=11 // pred_region
        _
      $region16: #{convs_forward.5} parent=11 // pred_fallthru
        _
    $region12: #{convs_forward.5} parent=5 // pred_fallthru
      _
    %p207 = scmp.lt.s32.totalorder %s12, 2
    // Predicated region
    $region17: #{convs_forward.5} parent=5 // pred_check
      %p208 = pneg %p207
    $region18: #{convs_forward.5} parent=5 // pred_check_branch
      %210 = sbr.rel (%p208) target = $region20
    $region19: #{convs_forward.5} parent=5 // pred_region
      // Predicated region
      $region21: #{convs_forward.5} parent=19 // pred_check
        %p211 = pneg %p46
      $region22: #{convs_forward.5} parent=19 // pred_check_branch
        %213 = sbr.rel (%p211) target = $region24
      $region23: #{convs_forward.5} parent=19 // pred_region
        %s214 = smul.u32 4, %s20
        %s215 = ssub.s32 5, %s214
        %p216 = scmp.lt.s32.totalorder %s215, 4
        %s217 = scalar_select %p216, %s215, 4
        %s218 = smul.u32 4, %s217
        %s219 = smul.u32 %s218, 2
        %p220 = scmp.lt.s32.totalorder %s19, 1
        %s221 = scalar_select %p220, %s19, 1
        %p222 = scmp.lt.s32.totalorder %s214, 4
        %s223 = scalar_select %p222, %s214, 4
        %s224 = smul.addr %s223, 2
        %s225 = smul.addr %s221, 10
        %s226 = sadd.s32 %s224, %s225
        %s227 = smul.addr %s226, 4
        %s228 = scalar_lea.vmem %s0, %s227
        %s229 = smul.u32 4, %s20
        %s230 = ssub.s32 5, %s229
        %p231 = scmp.lt.s32.totalorder %s230, 4
        %s232 = scalar_select %p231, %s230, 4
        %s233 = smul.u32 4, %s232
        %s234 = smul.u32 %s233, 2
      $region24: #{convs_forward.5} parent=19 // pred_fallthru
        _
      // Predicated region
      $region25: #{convs_forward.5} parent=19 // pred_check
        %p235 = pneg %p78
      $region26: #{convs_forward.5} parent=19 // pred_check_branch
        %237 = sbr.rel (%p235) target = $region28
      $region27: #{convs_forward.5} parent=19 // pred_region
        %s238 = sadd.s32 %s20, 1
        %s239 = smul.u32 %s238, 4
        %p240 = scmp.lt.s32.totalorder %s19, 1
        %s241 = scalar_select %p240, %s19, 1
        %p242 = scmp.lt.s32.totalorder %s239, 4
        %s243 = scalar_select %p242, %s239, 4
        %s244 = smul.addr %s243, 2
        %s245 = smul.addr %s241, 10
        %s246 = sadd.s32 %s244, %s245
        %s247 = smul.addr %s246, 4
        %s248 = scalar_lea.vmem %s1, %s247
        %s249 = sadd.s32 %s20, 1
        %s250 = smul.u32 %s249, 4
      $region28: #{convs_forward.5} parent=19 // pred_fallthru
        _
    $region20: #{convs_forward.5} parent=5 // pred_fallthru
      _
    %p251 = scmp.le.s32.totalorder 1, %s12
    %p252 = scmp.lt.s32.totalorder %s12, 3
    %p253 = pnand %p251, %p252
    %p254 = pneg %p253
    // Predicated region
    $region29: #{convs_forward.5} parent=5 // pred_check
      _
    $region30: #{convs_forward.5} parent=5 // pred_check_branch
      %256 = sbr.rel (%p253) target = $region32
    $region31: #{convs_forward.5} parent=5 // pred_region
      %s257 = ssub.s32 %s12, 1
      %s258 = smul.u32 4, %s22
      %s259 = ssub.s32 5, %s258
      %p260 = scmp.lt.s32.totalorder %s259, 4
      %s261 = scalar_select %p260, %s259, 4
      %s262 = smul.u32 4, %s261
      %s263 = smul.u32 %s262, 2
      %p264 = scmp.lt.s32.totalorder %s21, 1
      %s265 = scalar_select %p264, %s21, 1
      %p266 = scmp.lt.s32.totalorder %s258, 4
      %s267 = scalar_select %p266, %s258, 4
      %s268 = smul.addr %s267, 2
      %s269 = smul.addr %s265, 10
      %s270 = sadd.s32 %s268, %s269
      %s271 = smul.addr %s270, 4
      %s272 = scalar_lea.vmem %s0, %s271
      %p273 = pneg %p52
      %p274 = pneg %p49
      %s275 = sadd.s32 %s22, 1
      %s276 = smul.u32 %s275, 4
      %p277 = scmp.lt.s32.totalorder %s21, 1
      %s278 = scalar_select %p277, %s21, 1
      %p279 = scmp.lt.s32.totalorder %s276, 4
      %s280 = scalar_select %p279, %s276, 4
      %s281 = smul.addr %s280, 2
      %s282 = smul.addr %s278, 10
      %s283 = sadd.s32 %s281, %s282
      %s284 = smul.addr %s283, 4
      %s285 = scalar_lea.vmem %s1, %s284
      %p286 = pneg %p84
      %p287 = pneg %p81
      %p288 = pneg %p105
      %p289 = pneg %p102
      %p290 = pneg %p133
      %p291 = pneg %p130
      %s292 = smul.u32 4, %s22
      %p293 = scmp.lt.s32.totalorder %s21, 1
      %s294 = scalar_select %p293, %s21, 1
      %p295 = scmp.lt.s32.totalorder %s292, 3
      %s296 = scalar_select %p295, %s292, 3
      %s297 = smul.addr %s294, 4
      %s298 = sadd.s32 %s296, %s297
      %s299 = smul.addr %s298, 2
      %s300 = scalar_lea.vmem %s3, %s299
      %p301 = pneg %p161
      %p302 = pneg %p158
      %p303 = scmp.lt.s32.totalorder %s21, 1
      %s304 = scalar_select %p303, %s21, 1
      %p305 = scmp.lt.s32.totalorder %s22, 0
      %s306 = scalar_select %p305, %s22, 0
      %s307 = sadd.s32 %s306, %s304
      %s308 = scalar_lea.vmem %s4, %s307
      %p309 = pneg %p189
      %p310 = pneg %p186
      %p311 = scmp.lt.s32.totalorder %s21, 1
      %s312 = scalar_select %p311, %s21, 1
      %p313 = scmp.lt.s32.totalorder %s22, 0
      %s314 = scalar_select %p313, %s22, 0
      %s315 = sadd.s32 %s314, %s312
      %s316 = scalar_lea.vmem %s5, %s315
      %s317 = smul.u32 4, %s22
      %s318 = ssub.s32 5, %s317
      %p319 = scmp.lt.s32.totalorder %s318, 4
      %s320 = scalar_select %p319, %s318, 4
      %s321 = smul.u32 4, %s320
      %s322 = smul.u32 %s321, 2
      %p323 = scmp.lt.s32.totalorder %s21, 1
      %s324 = scalar_select %p323, %s21, 1
      %p325 = scmp.lt.s32.totalorder %s317, 4
      %s326 = scalar_select %p325, %s317, 4
      %s327 = smul.addr %s326, 2
      %s328 = smul.addr %s324, 10
      %s329 = sadd.s32 %s327, %s328
      %s330 = smul.addr %s329, 4
      %s331 = scalar_lea.vmem %s0, %s330
      %s332 = smul.u32 4, %s22
      %s333 = ssub.s32 5, %s332
      %p334 = scmp.lt.s32.totalorder %s333, 4
      %s335 = scalar_select %p334, %s333, 4
      %s336 = smul.u32 4, %s335
      %s337 = smul.u32 %s336, 2
      %s338 = sadd.s32 %s22, 1
      %s339 = smul.u32 %s338, 4
      %p340 = scmp.lt.s32.totalorder %s21, 1
      %s341 = scalar_select %p340, %s21, 1
      %p342 = scmp.lt.s32.totalorder %s339, 4
      %s343 = scalar_select %p342, %s339, 4
      %s344 = smul.addr %s343, 2
      %s345 = smul.addr %s341, 10
      %s346 = sadd.s32 %s344, %s345
      %s347 = smul.addr %s346, 4
      %s348 = scalar_lea.vmem %s1, %s347
      %s349 = sadd.s32 %s22, 1
      %s350 = smul.u32 %s349, 4
      %s351 = smul.u32 4, %s22
      %p352 = scmp.lt.s32.totalorder %s21, 1
      %s353 = scalar_select %p352, %s21, 1
      %p354 = scmp.lt.s32.totalorder %s351, 3
      %s355 = scalar_select %p354, %s351, 3
      %s356 = smul.addr %s353, 4
      %s357 = sadd.s32 %s355, %s356
      %s358 = smul.addr %s357, 2
      %s359 = scalar_lea.vmem %s3, %s358
      %s360 = smul.u32 4, %s22
      %p361 = scmp.lt.s32.totalorder %s21, 1
      %s362 = scalar_select %p361, %s21, 1
      %p363 = scmp.lt.s32.totalorder %s22, 0
      %s364 = scalar_select %p363, %s22, 0
      %s365 = sadd.s32 %s364, %s362
      %s366 = scalar_lea.vmem %s4, %s365
      %p367 = scmp.lt.s32.totalorder %s21, 1
      %s368 = scalar_select %p367, %s21, 1
      %p369 = scmp.lt.s32.totalorder %s22, 0
      %s370 = scalar_select %p369, %s22, 0
      %s371 = sadd.s32 %s370, %s368
      %s372 = scalar_lea.vmem %s5, %s371
      %v373 = vld [vmem:[%s331] sm:$0x77]
      %v374 = vld [vmem:[%s331 + $0x8] sm:$0x77]
      %v375 = vld [vmem:[%s331 + $0x10] sm:$0x77]
      %v376 = vld [vmem:[%s331 + $0x18] sm:$0x77]
      %v377 = vld [vmem:[%s348] sm:$0x77]
      %v378 = vld [vmem:[%s2] sm:$0xf]
      %v379 = vld [vmem:[%s2 + $0x4] sm:$0xf]
      %v380 = vld [vmem:[%s2 + $0x8] sm:$0xf]
      %v381 = vld [vmem:[%s2 + $0xc] sm:$0xf]
      %v382 = vld [vmem:[%s2 + $0x10] sm:$0xf]
      %v383 = vld [vmem:[%s2 + $0x14] sm:$0xf]
      %v384 = vld [vmem:[%s2 + $0x18] sm:$0xf]
      %v385 = vld [vmem:[%s2 + $0x1c] sm:$0xf]
      %v386 = vld [vmem:[%s2 + $0x20] sm:$0xf]
      %v387 = vld [vmem:[%s2 + $0x24] sm:$0xf]
      %v388 = vld [vmem:[%s2 + $0x28] sm:$0xf]
      %v389 = vld [vmem:[%s2 + $0x2c] sm:$0xf]
      %v390 = vld [vmem:[%s2 + $0x30] sm:$0xf]
      %v391 = vld [vmem:[%s2 + $0x34] sm:$0xf]
      %v392 = vld [vmem:[%s2 + $0x38] sm:$0xf]
      %v393 = vld [vmem:[%s2 + $0x3c] sm:$0xf]
      %v394 = vld [vmem:[%s2 + $0x40] sm:$0xf]
      %v395 = vld [vmem:[%s2 + $0x44] sm:$0xf]
      %v396 = vld [vmem:[%s2 + $0x48] sm:$0xf]
      %v397 = vld [vmem:[%s2 + $0x4c] sm:$0xf]
      %v398 = vld [vmem:[%s2 + $0x50] sm:$0xf]
      %v399 = vld [vmem:[%s2 + $0x54] sm:$0xf]
      %v400 = vld [vmem:[%s2 + $0x58] sm:$0xf]
      %v401 = vld [vmem:[%s2 + $0x5c] sm:$0xf]
      %v402 = vld [vmem:[%s2 + $0x60] sm:$0xf]
      %v403 = vld [vmem:[%s2 + $0x64] sm:$0xf]
      %v404 = vld [vmem:[%s2 + $0x68] sm:$0xf]
      %v405 = vld [vmem:[%s2 + $0x6c] sm:$0xf]
      %v406 = vld [vmem:[%s2 + $0x70] sm:$0xf]
      %v407 = vld [vmem:[%s2 + $0x74] sm:$0xf]
      %v408 = vld [vmem:[%s2 + $0x78] sm:$0xf]
      %v409 = vld [vmem:[%s2 + $0x7c] sm:$0xf]
      %v410 = vld [vmem:[%s2 + $0x80] sm:$0xf]
      %v411 = vld [vmem:[%s2 + $0x84] sm:$0xf]
      %v412 = vld [vmem:[%s2 + $0x88] sm:$0xf]
      %v413 = vld [vmem:[%s2 + $0x8c] sm:$0xf]
      %v414 = vld [vmem:[%s2 + $0x90] sm:$0xf]
      %v415 = vld [vmem:[%s2 + $0x94] sm:$0xf]
      %v416 = vld [vmem:[%s2 + $0x98] sm:$0xf]
      %v417 = vld [vmem:[%s2 + $0x9c] sm:$0xf]
      %v418 = vld [vmem:[%s2 + $0xa0] sm:$0xf]
      %v419 = vld [vmem:[%s2 + $0xa4] sm:$0xf]
      %v420 = vld [vmem:[%s2 + $0xa8] sm:$0xf]
      %v421 = vld [vmem:[%s2 + $0xac] sm:$0xf]
      %v422 = vld [vmem:[%s2 + $0xb0] sm:$0xf]
      %v423 = vld [vmem:[%s2 + $0xb4] sm:$0xf]
      %v424 = vld [vmem:[%s2 + $0xb8] sm:$0xf]
      %v425 = vld [vmem:[%s2 + $0xbc] sm:$0xf]
      %v426 = vld [vmem:[%s2 + $0xc0] sm:$0xf]
      %v427 = vld [vmem:[%s2 + $0xc4] sm:$0xf]
      %v428 = vld [vmem:[%s2 + $0xc8] sm:$0xf]
      %v429 = vld [vmem:[%s2 + $0xcc] sm:$0xf]
      %v430 = vld [vmem:[%s2 + $0xd0] sm:$0xf]
      %v431 = vld [vmem:[%s2 + $0xd4] sm:$0xf]
      %v432 = vld [vmem:[%s2 + $0xd8] sm:$0xf]
      %v433 = vld [vmem:[%s2 + $0xdc] sm:$0xf]
      %v434 = vld [vmem:[%s2 + $0xe0] sm:$0xf]
      %v435 = vld [vmem:[%s2 + $0xe4] sm:$0xf]
      %v436 = vld [vmem:[%s2 + $0xe8] sm:$0xf]
      %v437 = vld [vmem:[%s2 + $0xec] sm:$0xf]
      %v438 = vld [vmem:[%s2 + $0xf0] sm:$0xf]
      %v439 = vld [vmem:[%s2 + $0xf4] sm:$0xf]
      %v440 = vld [vmem:[%s2 + $0xf8] sm:$0xf]
      %v441 = vld [vmem:[%s2 + $0xfc] sm:$0xf]
      %v442 = vld [vmem:[%s2 + $0x100] sm:$0xf]
      %v443 = vld [vmem:[%s2 + $0x104] sm:$0xf]
      %v444 = vld [vmem:[%s2 + $0x108] sm:$0xf]
      %v445 = vld [vmem:[%s2 + $0x10c] sm:$0xf]
      %v446 = vld [vmem:[%s2 + $0x110] sm:$0xf]
      %v447 = vld [vmem:[%s2 + $0x114] sm:$0xf]
      %v448 = vld [vmem:[%s2 + $0x118] sm:$0xf]
      %v449 = vld [vmem:[%s2 + $0x11c] sm:$0xf]
      %v450 = vld [vmem:[%s2 + $0x120] sm:$0xf]
      %v451 = vld [vmem:[%s2 + $0x124] sm:$0xf]
      %v452 = vld [vmem:[%s2 + $0x128] sm:$0xf]
      %v453 = vld [vmem:[%s2 + $0x12c] sm:$0xf]
      %v454 = vld [vmem:[%s2 + $0x130] sm:$0xf]
      %v455 = vld [vmem:[%s2 + $0x134] sm:$0xf]
      %v456 = vld [vmem:[%s2 + $0x138] sm:$0xf]
      %v457 = vld [vmem:[%s2 + $0x13c] sm:$0xf]
      %v458 = vld [vmem:[%s2 + $0x140] sm:$0xf]
      %v459 = vld [vmem:[%s2 + $0x144] sm:$0xf]
      %v460 = vld [vmem:[%s2 + $0x148] sm:$0xf]
      %v461 = vld [vmem:[%s2 + $0x14c] sm:$0xf]
      %v462 = vld [vmem:[%s2 + $0x150] sm:$0xf]
      %v463 = vld [vmem:[%s2 + $0x154] sm:$0xf]
      %v464 = vld [vmem:[%s2 + $0x158] sm:$0xf]
      %v465 = vld [vmem:[%s2 + $0x15c] sm:$0xf]
      %v466 = vld [vmem:[%s2 + $0x160] sm:$0xf]
      %v467 = vld [vmem:[%s2 + $0x164] sm:$0xf]
      %v468 = vld [vmem:[%s2 + $0x168] sm:$0xf]
      %v469 = vld [vmem:[%s2 + $0x16c] sm:$0xf]
      %v470 = vld [vmem:[%s2 + $0x170] sm:$0xf]
      %v471 = vld [vmem:[%s2 + $0x174] sm:$0xf]
      %v472 = vld [vmem:[%s2 + $0x178] sm:$0xf]
      %v473 = vld [vmem:[%s2 + $0x17c] sm:$0xf]
      %v474 = vld [vmem:[%s2 + $0x180] sm:$0xf]
      %v475 = vld [vmem:[%s2 + $0x184] sm:$0xf]
      %v476 = vld [vmem:[%s2 + $0x188] sm:$0xf]
      %v477 = vld [vmem:[%s2 + $0x18c] sm:$0xf]
      %v478 = vld [vmem:[%s2 + $0x190] sm:$0xf]
      %v479 = vld [vmem:[%s2 + $0x194] sm:$0xf]
      %v480 = vld [vmem:[%s2 + $0x198] sm:$0xf]
      %v481 = vld [vmem:[%s2 + $0x19c] sm:$0xf]
      %v482 = vld [vmem:[%s2 + $0x1a0] sm:$0xf]
      %v483 = vld [vmem:[%s2 + $0x1a4] sm:$0xf]
      %v484 = vld [vmem:[%s2 + $0x1a8] sm:$0xf]
      %v485 = vld [vmem:[%s2 + $0x1ac] sm:$0xf]
      %v486 = vld [vmem:[%s2 + $0x1b0] sm:$0xf]
      %v487 = vld [vmem:[%s2 + $0x1b4] sm:$0xf]
      %v488 = vld [vmem:[%s2 + $0x1b8] sm:$0xf]
      %v489 = vld [vmem:[%s2 + $0x1bc] sm:$0xf]
      %v490 = vld [vmem:[%s2 + $0x1c0] sm:$0xf]
      %v491 = vld [vmem:[%s2 + $0x1c4] sm:$0xf]
      %v492 = vld [vmem:[%s2 + $0x1c8] sm:$0xf]
      %v493 = vld [vmem:[%s2 + $0x1cc] sm:$0xf]
      %v494 = vld [vmem:[%s2 + $0x1d0] sm:$0xf]
      %v495 = vld [vmem:[%s2 + $0x1d4] sm:$0xf]
      %v496 = vld [vmem:[%s2 + $0x1d8] sm:$0xf]
      %v497 = vld [vmem:[%s2 + $0x1dc] sm:$0xf]
      %v498 = vld [vmem:[%s2 + $0x1e0] sm:$0xf]
      %v499 = vld [vmem:[%s2 + $0x1e4] sm:$0xf]
      %v500 = vld [vmem:[%s2 + $0x1e8] sm:$0xf]
      %v501 = vld [vmem:[%s2 + $0x1ec] sm:$0xf]
      %v502 = vld [vmem:[%s2 + $0x1f0] sm:$0xf]
      %v503 = vld [vmem:[%s2 + $0x1f4] sm:$0xf]
      %v504 = vld [vmem:[%s2 + $0x1f8] sm:$0xf]
      %v505 = vld [vmem:[%s2 + $0x1fc] sm:$0xf]
      %v510 = vrot.slane %v373, 2
      %v511 = vrot.slane %v374, 2
      %v512 = vrot.slane %v375, 2
      %v513 = vrot.slane %v376, 2
      %vm514 = vcmask 1041408
      %v517 = vsel %vm514, %v373, %v510
      %v520 = vsel %vm514, %v374, %v511
      %v523 = vsel %vm514, %v375, %v512
      %v526 = vsel %vm514, %v376, %v513
      %v528 = vrot.slane %v377, 2
      %v531 = vsel %vm514, %v377, %v528
      %532 = vst [vmem:[#allocation1] ss:$4 sm:$0xff] %v520
      %s533 = scalar_lea.vmem [#allocation1], 1
      %534 = vst [vmem:[%s533] ss:$4 sm:$0xff] %v523
      %s535 = scalar_lea.vmem [#allocation1], 2
      %536 = vst [vmem:[%s535] ss:$4 sm:$0xff] %v526
      %s537 = scalar_lea.vmem [#allocation1], 3
      %538 = vst [vmem:[%s537] ss:$4 sm:$0xff] %v531
      %v539 = vld.sshfl [vmem:[#allocation1] sm:$0xff pattern:$0x73625140]
      %v540 = vld.sshfl [vmem:[#allocation1 + $0x8] sm:$0xff pattern:$0x73625140]
      %v575 = vunpack.c.l.b16 %v442
      %v576 = vunpack.c.l.b16 %v443
      %v577 = vunpack.c.l.b16 %v444
      %v578 = vunpack.c.l.b16 %v445
      %v579 = vunpack.c.l.b16 %v446
      %v580 = vunpack.c.l.b16 %v447
      %v581 = vunpack.c.l.b16 %v448
      %v582 = vunpack.c.l.b16 %v449
      %v583 = vunpack.c.l.b16 %v450
      %v584 = vunpack.c.l.b16 %v451
      %v585 = vunpack.c.l.b16 %v452
      %v586 = vunpack.c.l.b16 %v453
      %v587 = vunpack.c.l.b16 %v454
      %v588 = vunpack.c.l.b16 %v455
      %v589 = vunpack.c.l.b16 %v456
      %v590 = vunpack.c.l.b16 %v457
      %v591 = vunpack.c.l.b16 %v458
      %v592 = vunpack.c.l.b16 %v459
      %v593 = vunpack.c.l.b16 %v460
      %v594 = vunpack.c.l.b16 %v461
      %v595 = vunpack.c.l.b16 %v462
      %v596 = vunpack.c.l.b16 %v463
      %v597 = vunpack.c.l.b16 %v464
      %v598 = vunpack.c.l.b16 %v465
      %v599 = vunpack.c.l.b16 %v466
      %v600 = vunpack.c.l.b16 %v467
      %v601 = vunpack.c.l.b16 %v468
      %v602 = vunpack.c.l.b16 %v469
      %v603 = vunpack.c.l.b16 %v470
      %v604 = vunpack.c.l.b16 %v471
      %v605 = vunpack.c.l.b16 %v472
      %v606 = vunpack.c.l.b16 %v473
      %v607 = vpack.c.b16 %v576, %v575
      %v608 = vpack.c.b16 %v578, %v577
      %v609 = vpack.c.b16 %v580, %v579
      %v610 = vpack.c.b16 %v582, %v581
      %v611 = vpack.c.b16 %v584, %v583
      %v612 = vpack.c.b16 %v586, %v585
      %v613 = vpack.c.b16 %v588, %v587
      %v614 = vpack.c.b16 %v590, %v589
      %v615 = vpack.c.b16 %v592, %v591
      %v616 = vpack.c.b16 %v594, %v593
      %v617 = vpack.c.b16 %v596, %v595
      %v618 = vpack.c.b16 %v598, %v597
      %v619 = vpack.c.b16 %v600, %v599
      %v620 = vpack.c.b16 %v602, %v601
      %v621 = vpack.c.b16 %v604, %v603
      %v622 = vpack.c.b16 %v606, %v605
      %639 = vmatpush.bf16.msra.mxu0 %v614
      %640 = vmatpush.bf16.msra.mxu0 %v613
      %641 = vmatpush.bf16.msra.mxu0 %v612
      %642 = vmatpush.bf16.msra.mxu0 %v611
      %643 = vmatpush.bf16.msra.mxu0 %v610
      %644 = vmatpush.bf16.msra.mxu0 %v609
      %645 = vmatpush.bf16.msra.mxu0 %v608
      %646 = vmatpush.bf16.msra.mxu0 %v607
      %647 = vmatmul.bf16.gmra.mxu0 %v539
      %v648 = vpop.f32.mrf.mxu0
      %v649 = vadd.f32 0.0, %v648
      %v650 = vpop.f32.mrf.mxu0
      %v651 = vadd.f32 0.0, %v650
      %652 = vdwg.mxu0
      %653 = vmatpush.bf16.msra.mxu0 %v622
      %654 = vmatpush.bf16.msra.mxu0 %v621
      %655 = vmatpush.bf16.msra.mxu0 %v620
      %656 = vmatpush.bf16.msra.mxu0 %v619
      %657 = vmatpush.bf16.msra.mxu0 %v618
      %658 = vmatpush.bf16.msra.mxu0 %v617
      %659 = vmatpush.bf16.msra.mxu0 %v616
      %660 = vmatpush.bf16.msra.mxu0 %v615
      %661 = vmatmul.bf16.gmra.mxu0 %v540
      %v662 = vpop.f32.mrf.mxu0
      %v663 = vadd.f32 %v649, %v662
      %v664 = vpop.f32.mrf.mxu0
      %v665 = vadd.f32 %v651, %v664
      %666 = vdwg.mxu0
      %vm667 = vcmask 1043458
      %v668 = vsel %vm667, %v373, %v510
      %v670 = vrot.slane %v668, 2
      %v671 = vsel %vm667, %v374, %v511
      %v673 = vrot.slane %v671, 2
      %v674 = vsel %vm667, %v375, %v512
      %v676 = vrot.slane %v674, 2
      %v677 = vsel %vm667, %v376, %v513
      %v679 = vrot.slane %v677, 2
      %vm680 = vsmask.f32 1280
      %vm681 = vsmask.f32 3336
      %vm682 = vmor %vm680, %vm681
      %vm683 = vsmask.f32 5392
      %vm684 = vmor %vm682, %vm683
      %vm685 = vsmask.f32 7448
      %vm686 = vmor %vm684, %vm685
      %v687 = vshrl.u32 %v517, 16
      %v689 = vrot.slane %v687, 6
      %v690 = vshll.u32 %v517, 16
      %v692 = vrot.slane %v690, 7
      %v693 = vor.u32 %v689, %v692
      %v694 = vrot.slane %v693, 2
      %v696 = vshll.u32 %v670, 16
      %v698 = vrot.slane %v696, 7
      %v699 = vsel %vm686, %v694, %v698
      %v700 = vshrl.u32 %v520, 16
      %v702 = vrot.slane %v700, 6
      %v703 = vshll.u32 %v520, 16
      %v705 = vrot.slane %v703, 7
      %v706 = vor.u32 %v702, %v705
      %v707 = vrot.slane %v706, 2
      %v709 = vshll.u32 %v673, 16
      %v711 = vrot.slane %v709, 7
      %v712 = vsel %vm686, %v707, %v711
      %v713 = vshrl.u32 %v523, 16
      %v715 = vrot.slane %v713, 6
      %v716 = vshll.u32 %v523, 16
      %v718 = vrot.slane %v716, 7
      %v719 = vor.u32 %v715, %v718
      %v720 = vrot.slane %v719, 2
      %v722 = vshll.u32 %v676, 16
      %v724 = vrot.slane %v722, 7
      %v725 = vsel %vm686, %v720, %v724
      %v726 = vshrl.u32 %v526, 16
      %v728 = vrot.slane %v726, 6
      %v729 = vshll.u32 %v526, 16
      %v731 = vrot.slane %v729, 7
      %v732 = vor.u32 %v728, %v731
      %v733 = vrot.slane %v732, 2
      %v735 = vshll.u32 %v679, 16
      %v737 = vrot.slane %v735, 7
      %v738 = vsel %vm686, %v733, %v737
      %740 = vst [vmem:[#allocation1] ss:$4 sm:$0xff] %v699
      %s742 = scalar_lea.vmem [#allocation1], 1
      %743 = vst [vmem:[%s742] ss:$4 sm:$0xff] %v712
      %s745 = scalar_lea.vmem [#allocation1], 2
      %746 = vst [vmem:[%s745] ss:$4 sm:$0xff] %v725
      %s748 = scalar_lea.vmem [#allocation1], 3
      %749 = vst [vmem:[%s748] ss:$4 sm:$0xff] %v738
      %v750 = vld.sshfl [vmem:[#allocation1] sm:$0xff pattern:$0x73625140]
      %v751 = vld.sshfl [vmem:[#allocation1 + $0x8] sm:$0xff pattern:$0x73625140]
      %v786 = vunpack.c.l.b16 %v410
      %v787 = vunpack.c.l.b16 %v411
      %v788 = vunpack.c.l.b16 %v412
      %v789 = vunpack.c.l.b16 %v413
      %v790 = vunpack.c.l.b16 %v414
      %v791 = vunpack.c.l.b16 %v415
      %v792 = vunpack.c.l.b16 %v416
      %v793 = vunpack.c.l.b16 %v417
      %v794 = vunpack.c.l.b16 %v418
      %v795 = vunpack.c.l.b16 %v419
      %v796 = vunpack.c.l.b16 %v420
      %v797 = vunpack.c.l.b16 %v421
      %v798 = vunpack.c.l.b16 %v422
      %v799 = vunpack.c.l.b16 %v423
      %v800 = vunpack.c.l.b16 %v424
      %v801 = vunpack.c.l.b16 %v425
      %v802 = vunpack.c.l.b16 %v426
      %v803 = vunpack.c.l.b16 %v427
      %v804 = vunpack.c.l.b16 %v428
      %v805 = vunpack.c.l.b16 %v429
      %v806 = vunpack.c.l.b16 %v430
      %v807 = vunpack.c.l.b16 %v431
      %v808 = vunpack.c.l.b16 %v432
      %v809 = vunpack.c.l.b16 %v433
      %v810 = vunpack.c.l.b16 %v434
      %v811 = vunpack.c.l.b16 %v435
      %v812 = vunpack.c.l.b16 %v436
      %v813 = vunpack.c.l.b16 %v437
      %v814 = vunpack.c.l.b16 %v438
      %v815 = vunpack.c.l.b16 %v439
      %v816 = vunpack.c.l.b16 %v440
      %v817 = vunpack.c.l.b16 %v441
      %v818 = vpack.c.b16 %v787, %v786
      %v819 = vpack.c.b16 %v789, %v788
      %v820 = vpack.c.b16 %v791, %v790
      %v821 = vpack.c.b16 %v793, %v792
      %v822 = vpack.c.b16 %v795, %v794
      %v823 = vpack.c.b16 %v797, %v796
      %v824 = vpack.c.b16 %v799, %v798
      %v825 = vpack.c.b16 %v801, %v800
      %v826 = vpack.c.b16 %v803, %v802
      %v827 = vpack.c.b16 %v805, %v804
      %v828 = vpack.c.b16 %v807, %v806
      %v829 = vpack.c.b16 %v809, %v808
      %v830 = vpack.c.b16 %v811, %v810
      %v831 = vpack.c.b16 %v813, %v812
      %v832 = vpack.c.b16 %v815, %v814
      %v833 = vpack.c.b16 %v817, %v816
      %850 = vmatpush.bf16.msra.mxu0 %v825
      %851 = vmatpush.bf16.msra.mxu0 %v824
      %852 = vmatpush.bf16.msra.mxu0 %v823
      %853 = vmatpush.bf16.msra.mxu0 %v822
      %854 = vmatpush.bf16.msra.mxu0 %v821
      %855 = vmatpush.bf16.msra.mxu0 %v820
      %856 = vmatpush.bf16.msra.mxu0 %v819
      %857 = vmatpush.bf16.msra.mxu0 %v818
      %858 = vmatmul.bf16.gmra.mxu0 %v750
      %v859 = vpop.f32.mrf.mxu0
      %v860 = vadd.f32 0.0, %v859
      %v861 = vpop.f32.mrf.mxu0
      %v862 = vadd.f32 0.0, %v861
      %863 = vdwg.mxu0
      %864 = vmatpush.bf16.msra.mxu0 %v833
      %865 = vmatpush.bf16.msra.mxu0 %v832
      %866 = vmatpush.bf16.msra.mxu0 %v831
      %867 = vmatpush.bf16.msra.mxu0 %v830
      %868 = vmatpush.bf16.msra.mxu0 %v829
      %869 = vmatpush.bf16.msra.mxu0 %v828
      %870 = vmatpush.bf16.msra.mxu0 %v827
      %871 = vmatpush.bf16.msra.mxu0 %v826
      %872 = vmatmul.bf16.gmra.mxu0 %v751
      %v873 = vpop.f32.mrf.mxu0
      %v874 = vadd.f32 %v860, %v873
      %v875 = vpop.f32.mrf.mxu0
      %v876 = vadd.f32 %v862, %v875
      %877 = vdwg.mxu0
      %v878 = vsel %vm667, %v377, %v528
      %v880 = vrot.slane %v878, 2
      %v881 = vshrl.u32 %v531, 16
      %v883 = vrot.slane %v881, 6
      %v884 = vshll.u32 %v531, 16
      %v886 = vrot.slane %v884, 7
      %v887 = vor.u32 %v883, %v886
      %v888 = vrot.slane %v887, 2
      %v890 = vshll.u32 %v880, 16
      %v892 = vrot.slane %v890, 7
      %v893 = vsel %vm686, %v888, %v892
      %894 = vst [vmem:[#allocation1] ss:$4 sm:$0xff] %v712
      %s895 = scalar_lea.vmem [#allocation1], 1
      %896 = vst [vmem:[%s895] ss:$4 sm:$0xff] %v725
      %s897 = scalar_lea.vmem [#allocation1], 2
      %898 = vst [vmem:[%s897] ss:$4 sm:$0xff] %v738
      %s900 = scalar_lea.vmem [#allocation1], 3
      %901 = vst [vmem:[%s900] ss:$4 sm:$0xff] %v893
      %v902 = vld.sshfl [vmem:[#allocation1] sm:$0xff pattern:$0x73625140]
      %v903 = vld.sshfl [vmem:[#allocation1 + $0x8] sm:$0xff pattern:$0x73625140]
      %v938 = vunpack.c.l.b16 %v474
      %v939 = vunpack.c.l.b16 %v475
      %v940 = vunpack.c.l.b16 %v476
      %v941 = vunpack.c.l.b16 %v477
      %v942 = vunpack.c.l.b16 %v478
      %v943 = vunpack.c.l.b16 %v479
      %v944 = vunpack.c.l.b16 %v480
      %v945 = vunpack.c.l.b16 %v481
      %v946 = vunpack.c.l.b16 %v482
      %v947 = vunpack.c.l.b16 %v483
      %v948 = vunpack.c.l.b16 %v484
      %v949 = vunpack.c.l.b16 %v485
      %v950 = vunpack.c.l.b16 %v486
      %v951 = vunpack.c.l.b16 %v487
      %v952 = vunpack.c.l.b16 %v488
      %v953 = vunpack.c.l.b16 %v489
      %v954 = vunpack.c.l.b16 %v490
      %v955 = vunpack.c.l.b16 %v491
      %v956 = vunpack.c.l.b16 %v492
      %v957 = vunpack.c.l.b16 %v493
      %v958 = vunpack.c.l.b16 %v494
      %v959 = vunpack.c.l.b16 %v495
      %v960 = vunpack.c.l.b16 %v496
      %v961 = vunpack.c.l.b16 %v497
      %v962 = vunpack.c.l.b16 %v498
      %v963 = vunpack.c.l.b16 %v499
      %v964 = vunpack.c.l.b16 %v500
      %v965 = vunpack.c.l.b16 %v501
      %v966 = vunpack.c.l.b16 %v502
      %v967 = vunpack.c.l.b16 %v503
      %v968 = vunpack.c.l.b16 %v504
      %v969 = vunpack.c.l.b16 %v505
      %v970 = vpack.c.b16 %v939, %v938
      %v971 = vpack.c.b16 %v941, %v940
      %v972 = vpack.c.b16 %v943, %v942
      %v973 = vpack.c.b16 %v945, %v944
      %v974 = vpack.c.b16 %v947, %v946
      %v975 = vpack.c.b16 %v949, %v948
      %v976 = vpack.c.b16 %v951, %v950
      %v977 = vpack.c.b16 %v953, %v952
      %v978 = vpack.c.b16 %v955, %v954
      %v979 = vpack.c.b16 %v957, %v956
      %v980 = vpack.c.b16 %v959, %v958
      %v981 = vpack.c.b16 %v961, %v960
      %v982 = vpack.c.b16 %v963, %v962
      %v983 = vpack.c.b16 %v965, %v964
      %v984 = vpack.c.b16 %v967, %v966
      %v985 = vpack.c.b16 %v969, %v968
      %1002 = vmatpush.bf16.msra.mxu0 %v977
      %1003 = vmatpush.bf16.msra.mxu0 %v976
      %1004 = vmatpush.bf16.msra.mxu0 %v975
      %1005 = vmatpush.bf16.msra.mxu0 %v974
      %1006 = vmatpush.bf16.msra.mxu0 %v973
      %1007 = vmatpush.bf16.msra.mxu0 %v972
      %1008 = vmatpush.bf16.msra.mxu0 %v971
      %1009 = vmatpush.bf16.msra.mxu0 %v970
      %1010 = vmatmul.bf16.gmra.mxu0 %v902
      %v1011 = vpop.f32.mrf.mxu0
      %v1012 = vadd.f32 0.0, %v1011
      %v1013 = vpop.f32.mrf.mxu0
      %v1014 = vadd.f32 0.0, %v1013
      %1015 = vdwg.mxu0
      %1016 = vmatpush.bf16.msra.mxu0 %v985
      %1017 = vmatpush.bf16.msra.mxu0 %v984
      %1018 = vmatpush.bf16.msra.mxu0 %v983
      %1019 = vmatpush.bf16.msra.mxu0 %v982
      %1020 = vmatpush.bf16.msra.mxu0 %v981
      %1021 = vmatpush.bf16.msra.mxu0 %v980
      %1022 = vmatpush.bf16.msra.mxu0 %v979
      %1023 = vmatpush.bf16.msra.mxu0 %v978
      %1024 = vmatmul.bf16.gmra.mxu0 %v903
      %v1025 = vpop.f32.mrf.mxu0
      %v1026 = vadd.f32 %v1012, %v1025
      %v1027 = vpop.f32.mrf.mxu0
      %v1028 = vadd.f32 %v1014, %v1027
      %1029 = vdwg.mxu0
      %1030 = vst [vmem:[#allocation1] ss:$4 sm:$0xff] %v517
      %s1031 = scalar_lea.vmem [#allocation1], 1
      %1032 = vst [vmem:[%s1031] ss:$4 sm:$0xff] %v520
      %s1033 = scalar_lea.vmem [#allocation1], 2
      %1034 = vst [vmem:[%s1033] ss:$4 sm:$0xff] %v523
      %s1035 = scalar_lea.vmem [#allocation1], 3
      %1036 = vst [vmem:[%s1035] ss:$4 sm:$0xff] %v526
      %v1037 = vld.sshfl [vmem:[#allocation1] sm:$0xff pattern:$0x73625140]
      %v1038 = vld.sshfl [vmem:[#allocation1 + $0x8] sm:$0xff pattern:$0x73625140]
      %v1073 = vunpack.c.l.b16 %v378
      %v1074 = vunpack.c.l.b16 %v379
      %v1075 = vunpack.c.l.b16 %v380
      %v1076 = vunpack.c.l.b16 %v381
      %v1077 = vunpack.c.l.b16 %v382
      %v1078 = vunpack.c.l.b16 %v383
      %v1079 = vunpack.c.l.b16 %v384
      %v1080 = vunpack.c.l.b16 %v385
      %v1081 = vunpack.c.l.b16 %v386
      %v1082 = vunpack.c.l.b16 %v387
      %v1083 = vunpack.c.l.b16 %v388
      %v1084 = vunpack.c.l.b16 %v389
      %v1085 = vunpack.c.l.b16 %v390
      %v1086 = vunpack.c.l.b16 %v391
      %v1087 = vunpack.c.l.b16 %v392
      %v1088 = vunpack.c.l.b16 %v393
      %v1089 = vunpack.c.l.b16 %v394
      %v1090 = vunpack.c.l.b16 %v395
      %v1091 = vunpack.c.l.b16 %v396
      %v1092 = vunpack.c.l.b16 %v397
      %v1093 = vunpack.c.l.b16 %v398
      %v1094 = vunpack.c.l.b16 %v399
      %v1095 = vunpack.c.l.b16 %v400
      %v1096 = vunpack.c.l.b16 %v401
      %v1097 = vunpack.c.l.b16 %v402
      %v1098 = vunpack.c.l.b16 %v403
      %v1099 = vunpack.c.l.b16 %v404
      %v1100 = vunpack.c.l.b16 %v405
      %v1101 = vunpack.c.l.b16 %v406
      %v1102 = vunpack.c.l.b16 %v407
      %v1103 = vunpack.c.l.b16 %v408
      %v1104 = vunpack.c.l.b16 %v409
      %v1105 = vpack.c.b16 %v1074, %v1073
      %v1106 = vpack.c.b16 %v1076, %v1075
      %v1107 = vpack.c.b16 %v1078, %v1077
      %v1108 = vpack.c.b16 %v1080, %v1079
      %v1109 = vpack.c.b16 %v1082, %v1081
      %v1110 = vpack.c.b16 %v1084, %v1083
      %v1111 = vpack.c.b16 %v1086, %v1085
      %v1112 = vpack.c.b16 %v1088, %v1087
      %v1113 = vpack.c.b16 %v1090, %v1089
      %v1114 = vpack.c.b16 %v1092, %v1091
      %v1115 = vpack.c.b16 %v1094, %v1093
      %v1116 = vpack.c.b16 %v1096, %v1095
      %v1117 = vpack.c.b16 %v1098, %v1097
      %v1118 = vpack.c.b16 %v1100, %v1099
      %v1119 = vpack.c.b16 %v1102, %v1101
      %v1120 = vpack.c.b16 %v1104, %v1103
      %1137 = vmatpush.bf16.msra.mxu0 %v1112
      %1138 = vmatpush.bf16.msra.mxu0 %v1111
      %1139 = vmatpush.bf16.msra.mxu0 %v1110
      %1140 = vmatpush.bf16.msra.mxu0 %v1109
      %1141 = vmatpush.bf16.msra.mxu0 %v1108
      %1142 = vmatpush.bf16.msra.mxu0 %v1107
      %1143 = vmatpush.bf16.msra.mxu0 %v1106
      %1144 = vmatpush.bf16.msra.mxu0 %v1105
      %1145 = vmatmul.bf16.gmra.mxu0 %v1037
      %v1146 = vpop.f32.mrf.mxu0
      %v1147 = vadd.f32 %v663, %v1146
      %v1148 = vpop.f32.mrf.mxu0
      %v1149 = vadd.f32 %v665, %v1148
      %1150 = vdwg.mxu0
      %1151 = vmatpush.bf16.msra.mxu0 %v1120
      %1152 = vmatpush.bf16.msra.mxu0 %v1119
      %1153 = vmatpush.bf16.msra.mxu0 %v1118
      %1154 = vmatpush.bf16.msra.mxu0 %v1117
      %1155 = vmatpush.bf16.msra.mxu0 %v1116
      %1156 = vmatpush.bf16.msra.mxu0 %v1115
      %1157 = vmatpush.bf16.msra.mxu0 %v1114
      %1158 = vmatpush.bf16.msra.mxu0 %v1113
      %1159 = vmatmul.bf16.gmra.mxu0 %v1038
      %v1160 = vpop.f32.mrf.mxu0
      %v1161 = vadd.f32 %v1147, %v1160
      %v1162 = vpop.f32.mrf.mxu0
      %v1163 = vadd.f32 %v1149, %v1162
      %1164 = vdwg.mxu0
      %v1165 = vadd.f32 %v1161, %v874
      %v1166 = vadd.f32 %v1163, %v876
      %v1167 = vadd.f32 %v1165, %v1026
      %v1168 = vadd.f32 %v1166, %v1028
      %v1171 = vrot.slane %v1167, 4
      %v1172 = vrot.slane %v1168, 4
      %v1175 = vpack.c.bf16 %v1167, %v1167
      %v1176 = vpack.c.bf16 %v1171, %v1171
      %v1177 = vpack.c.bf16 %v1168, %v1168
      %v1178 = vpack.c.bf16 %v1172, %v1172
      %vm1179 = vcmask 517120
      %1180 = vst.msk [vmem:[%s359] sm:$0x3] %vm1179, %v1175
      %1181 = vst.msk [vmem:[%s359 + $0x2] sm:$0x3] %vm1179, %v1176
      %1182 = vst.msk [vmem:[%s359 + $0x4] sm:$0x3] %vm1179, %v1177
      %1183 = vst.msk [vmem:[%s359 + $0x6] sm:$0x3] %vm1179, %v1178
      %s1184 = smul.u32 %s22, 4
      %s1185 = ssub.s32 4, %s1184
      %p1186 = scmp.lt.s32.totalorder %s1185, 4
      %s1187 = scalar_select %p1186, %s1185, 4
      %s1188 = smul.u32 %s1187, 4
      %s1189 = scvt.s32.f32 %s1188
      %v1190 = vstv %s1187
      %vm1191 = vcmp.gt.s32.totalorder %v1190, 0
      %vm1192 = vcmp.gt.s32.totalorder %v1190, 1
      %vm1193 = vcmp.gt.s32.totalorder %v1190, 2
      %vm1194 = vcmp.gt.s32.totalorder %v1190, 3
      %v1195 = vsel %vm1191, 1, 0
      %v1196 = vsel %vm1192, 1, 0
      %v1197 = vsel %vm1193, 1, 0
      %v1198 = vsel %vm1194, 1, 0
      %vm1199 = vcmp.eq.s32.totalorder %v1195, 1
      %vm1200 = vcmp.eq.s32.totalorder %v1196, 1
      %vm1201 = vcmp.eq.s32.totalorder %v1197, 1
      %vm1202 = vcmp.eq.s32.totalorder %v1198, 1
      %v1203 = vsel %vm1199, %v1167, 0.0
      %v1204 = vsel %vm1200, %v1171, 0.0
      %v1205 = vsel %vm1201, %v1168, 0.0
      %v1206 = vsel %vm1202, %v1172, 0.0
      %vm1207 = vcmask 519168
      %v1208 = vsel %vm1207, %v1203, 0.0
      %v1209 = vsel %vm1207, %v1204, 0.0
      %v1210 = vadd.f32 %v1208, %v1209
      %v1211 = vsel %vm1207, %v1205, 0.0
      %v1212 = vadd.f32 %v1210, %v1211
      %v1213 = vsel %vm1207, %v1206, 0.0
      %v1214 = vadd.f32 %v1212, %v1213
      %v1215 = vsel %vm1207, %v1214, 0.0
      %v1216 = vrot.slane %v1215, 4
      %v1217 = vadd.f32 %v1215, %v1216
      %v1218 = vrot.slane %v1217, 2
      %v1219 = vadd.f32 %v1217, %v1218
      %v1220 = vrot.slane %v1219, 1
      %v1221 = vadd.f32 %v1219, %v1220
      %v1222 = vstv %s1189
      %v1223 = vrcp.pop %v1222
      %v1224 = vmul.f32 %v1222, %v1223
      %v1225 = vsub.f32 1.0, %v1224
      %v1226 = vmul.f32 %v1223, %v1225
      %v1227 = vadd.f32 %v1223, %v1226
      %vm1228 = vweird.f32 %v1222
      %vm1229 = vweird.f32 %v1223
      %vm1230 = vmor %vm1228, %vm1229
      %v1231 = vsel %vm1230, %v1223, %v1227
      %v1232 = vand.u32 2147483647, %v1222
      %vm1233 = vcmp.eq.f32.partialorder %v1232, 8.507059e+37
      %v1234 = vand.u32 %v1222, 2147483648
      %v1235 = vor.u32 1.1754944e-38, %v1234
      %v1236 = vsel %vm1233, %v1235, %v1231
      %v1237 = vmul.f32 %v1221, %v1236
      %v1238 = vsub.f32 %v1167, %v1237
      %v1239 = vsub.f32 %v1171, %v1237
      %v1240 = vsub.f32 %v1168, %v1237
      %v1241 = vsub.f32 %v1172, %v1237
      %v1242 = vsel %vm1199, %v1238, 0.0
      %v1243 = vsel %vm1200, %v1239, 0.0
      %v1244 = vsel %vm1201, %v1240, 0.0
      %v1245 = vsel %vm1202, %v1241, 0.0
      %v1246 = vmul.f32 %v1242, %v1242
      %v1247 = vmul.f32 %v1243, %v1243
      %v1248 = vmul.f32 %v1244, %v1244
      %v1249 = vmul.f32 %v1245, %v1245
      %v1250 = vsel %vm1207, %v1246, 0.0
      %v1251 = vsel %vm1207, %v1247, 0.0
      %v1252 = vadd.f32 %v1250, %v1251
      %v1253 = vsel %vm1207, %v1248, 0.0
      %v1254 = vadd.f32 %v1252, %v1253
      %v1255 = vsel %vm1207, %v1249, 0.0
      %v1256 = vadd.f32 %v1254, %v1255
      %v1257 = vsel %vm1207, %v1256, 0.0
      %v1258 = vrot.slane %v1257, 4
      %v1259 = vadd.f32 %v1257, %v1258
      %v1260 = vrot.slane %v1259, 2
      %v1261 = vadd.f32 %v1259, %v1260
      %v1262 = vrot.slane %v1261, 1
      %v1263 = vadd.f32 %v1261, %v1262
      %vm1264 = vcmask 516096
      %1265 = vst.msk [vmem:[%s366] sm:$0x1] %vm1264, %v1221
      %1266 = vst.msk [vmem:[%s372] sm:$0x1] %vm1264, %v1263
      %s1267 = smul.u32 4, %s22
      %p1268 = scmp.lt.s32.totalorder %s21, 1
      %s1269 = scalar_select %p1268, %s21, 1
      %p1270 = scmp.lt.s32.totalorder %s1267, 3
      %s1271 = scalar_select %p1270, %s1267, 3
      %s1272 = smul.addr %s1269, 4
      %s1273 = sadd.s32 %s1271, %s1272
      %s1274 = smul.addr %s1273, 2
      %s1275 = scalar_lea.vmem %s3, %s1274
      %p1276 = scmp.lt.s32.totalorder %s21, 1
      %s1277 = scalar_select %p1276, %s21, 1
      %p1278 = scmp.lt.s32.totalorder %s22, 0
      %s1279 = scalar_select %p1278, %s22, 0
      %s1280 = sadd.s32 %s1279, %s1277
      %s1281 = scalar_lea.vmem %s4, %s1280
      %p1282 = scmp.lt.s32.totalorder %s21, 1
      %s1283 = scalar_select %p1282, %s21, 1
      %p1284 = scmp.lt.s32.totalorder %s22, 0
      %s1285 = scalar_select %p1284, %s22, 0
      %s1286 = sadd.s32 %s1285, %s1283
      %s1287 = scalar_lea.vmem %s5, %s1286
      // Predicated region
      $region33: #{convs_forward.5} parent=31 // pred_check
        %p1288 = pneg %p130
      $region34: #{convs_forward.5} parent=31 // pred_check_branch
        %1290 = sbr.rel (%p1288) target = $region36
      $region35: #{convs_forward.5} parent=31 // pred_region
        %s1291 = smul.u32 4, %s22
      $region36: #{convs_forward.5} parent=31 // pred_fallthru
        _
      // Predicated region
      $region37: #{convs_forward.5} parent=31 // pred_check
        %p1292 = pneg %p158
      $region38: #{convs_forward.5} parent=31 // pred_check_branch
        %1294 = sbr.rel (%p1292) target = $region40
      $region39: #{convs_forward.5} parent=31 // pred_region
        _
      $region40: #{convs_forward.5} parent=31 // pred_fallthru
        _
      // Predicated region
      $region41: #{convs_forward.5} parent=31 // pred_check
        %p1295 = pneg %p186
      $region42: #{convs_forward.5} parent=31 // pred_check_branch
        %1297 = sbr.rel (%p1295) target = $region44
      $region43: #{convs_forward.5} parent=31 // pred_region
        _
      $region44: #{convs_forward.5} parent=31 // pred_fallthru
        _
    $region32: #{convs_forward.5} parent=5 // pred_fallthru
      _
    %p1298 = scmp.le.s32.totalorder 2, %s12
    // Predicated region
    $region45: #{convs_forward.5} parent=5 // pred_check
      %p1299 = pneg %p1298
    $region46: #{convs_forward.5} parent=5 // pred_check_branch
      %1301 = sbr.rel (%p1299) target = $region48
    $region47: #{convs_forward.5} parent=5 // pred_region
      %s1302 = ssub.s32 %s12, 2
      // Predicated region
      $region49: #{convs_forward.5} parent=47 // pred_check
        %p1303 = pneg %p136
      $region50: #{convs_forward.5} parent=47 // pred_check_branch
        %1305 = sbr.rel (%p1303) target = $region52
      $region51: #{convs_forward.5} parent=47 // pred_region
        %s1306 = smul.u32 4, %s24
        %p1307 = scmp.lt.s32.totalorder %s23, 1
        %s1308 = scalar_select %p1307, %s23, 1
        %p1309 = scmp.lt.s32.totalorder %s1306, 3
        %s1310 = scalar_select %p1309, %s1306, 3
        %s1311 = smul.addr %s1308, 4
        %s1312 = sadd.s32 %s1310, %s1311
        %s1313 = smul.addr %s1312, 2
        %s1314 = scalar_lea.vmem %s3, %s1313
      $region52: #{convs_forward.5} parent=47 // pred_fallthru
        _
      // Predicated region
      $region53: #{convs_forward.5} parent=47 // pred_check
        %p1315 = pneg %p164
      $region54: #{convs_forward.5} parent=47 // pred_check_branch
        %1317 = sbr.rel (%p1315) target = $region56
      $region55: #{convs_forward.5} parent=47 // pred_region
        %p1318 = scmp.lt.s32.totalorder %s23, 1
        %s1319 = scalar_select %p1318, %s23, 1
        %p1320 = scmp.lt.s32.totalorder %s24, 0
        %s1321 = scalar_select %p1320, %s24, 0
        %s1322 = sadd.s32 %s1321, %s1319
        %s1323 = scalar_lea.vmem %s4, %s1322
      $region56: #{convs_forward.5} parent=47 // pred_fallthru
        _
      // Predicated region
      $region57: #{convs_forward.5} parent=47 // pred_check
        %p1324 = pneg %p192
      $region58: #{convs_forward.5} parent=47 // pred_check_branch
        %1326 = sbr.rel (%p1324) target = $region60
      $region59: #{convs_forward.5} parent=47 // pred_region
        %p1327 = scmp.lt.s32.totalorder %s23, 1
        %s1328 = scalar_select %p1327, %s23, 1
        %p1329 = scmp.lt.s32.totalorder %s24, 0
        %s1330 = scalar_select %p1329, %s24, 0
        %s1331 = sadd.s32 %s1330, %s1328
        %s1332 = scalar_lea.vmem %s5, %s1331
      $region60: #{convs_forward.5} parent=47 // pred_fallthru
        _
    $region48: #{convs_forward.5} parent=5 // pred_fallthru
      _
  $region6: #{convs_forward.5} parent=0 // loop_footer
    %s16 = sadd.s32 1, %s12
  $region7: #{convs_forward.5} parent=0 // loop_footer_branch
    %11 = sbr.rel target = $region3
  $region8: #{convs_forward.5} parent=0 // loop_exit
    _

// kernel: convs_forward.6
$region0: #{convs_forward.6}
  #allocation0 [shape = 'u32[]', space=smem, size = 0x4, offset = 0x4, fixed_abs, tag = 'smem constant byte address 0x4 - core index']
  #allocation1 [shape = 'u32[72,128]{1,0:T(1,128)}', space=vmem, size = 0x9000, scoped, tag = 'internal scratch']
  %s0 = inlined_call_operand.vmem [shape: bf16[2,3,3,256], index: 0, kind: input, shape index: {}, may-alias: {0,1}]
  %s1 = inlined_call_operand.vmem [shape: bf16[2,3,3,256], index: 1, kind: input, shape index: {}, may-alias: {0,1}]
  %s2 = inlined_call_operand.vmem [shape: bf16[2,2,256,64], index: 2, kind: input, shape index: {}]
  %s3 = inlined_call_operand.vmem [shape: bf16[2,2,2,64], index: 3, kind: output, shape index: {0}]
  %s4 = inlined_call_operand.vmem [shape: f32[2,1,1,64], index: 4, kind: output, shape index: {1}]
  %s5 = inlined_call_operand.vmem [shape: f32[2,1,1,64], index: 5, kind: output, shape index: {2}]
  %6 = xla_tuple %s3, %s4, %s5
  %s7 = sld [smem:[#allocation0]]
  $region61: #{convs_forward.6} parent=0
    _
  %s9 = ssub.s32 1, %s7
  %s10 = scalar_select 0, %s9, %s7
  loop: start=0, step=1, limit=4
  $region2: #{convs_forward.6} parent=0 // loop_pre_header
    _
  $region3: #{convs_forward.6} parent=0 // loop_header
    %s12 = sphi 0, %s16
    %p13 = scmp.ge.s32.totalorder %s12, 4
    %s19 = sphi 0, %s31
    %s20 = sphi 0, %s27
    %s21 = sphi 0, %s19
    %s22 = sphi 0, %s20
    %s23 = sphi 0, %s21
    %s24 = sphi 0, %s22
    %s36 = sphi 0, %s38
    %s39 = sphi 0, %s36
    %s40 = sphi 0, %s39
    %s56 = sphi 0, %s40
    %s68 = sphi 0, %s70
    %s71 = sphi 0, %s68
    %s72 = sphi 0, %s71
    %s88 = sphi 0, %s72
    %s92 = sphi 0, %s92
    %s94 = sphi 0, %s92
    %s95 = sphi 0, %s94
    %s109 = sphi 0, %s95
    %s117 = sphi 0, %s119
    %s120 = sphi 0, %s117
    %s121 = sphi 0, %s120
    %s137 = sphi 0, %s121
    %s145 = sphi 0, %s147
    %s148 = sphi 0, %s145
    %s149 = sphi 0, %s148
    %s165 = sphi 0, %s149
    %s173 = sphi 0, %s175
    %s176 = sphi 0, %s173
    %s177 = sphi 0, %s176
    %s193 = sphi 0, %s177
  $region4: #{convs_forward.6} parent=0 // loop_header_branch
    %15 = sbr.rel (%p13) target = $region8
  $region5: #{convs_forward.6} parent=0 // loop_body
    %s17 = ssub.s32 %s12, 1
    %s18 = ssub.s32 %s12, 2
    %s25 = sadd.s32 1, %s20
    %p26 = scmp.ge.s32.totalorder %s25, 1
    %s27 = scalar_select %p26, 0, %s25
    %s28 = sadd.s32 1, %s19
    %s29 = scalar_select %p26, %s28, %s19
    %p30 = scmp.ge.s32.totalorder %s29, 2
    %s31 = scalar_select %p30, 0, %s29
    %s32 = ssub.s32 %s19, %s31
    %s33 = ssub.s32 %s20, %s27
    %s34 = sor.u32 %s32, %s33
    %p35 = scmp.eq.s32.totalorder %s34, 0
    %s37 = sadd.s32 %s36, 1
    %s38 = scalar_select %p35, %s36, %s37
    %p41 = pneg %p35
    %p42 = scmp.eq.s32.totalorder %s12, 1
    %p43 = por %p41, %p42
    %p44 = scmp.ne.s32.totalorder %s36, %s39
    %p45 = scmp.eq.s32.totalorder %s12, 0
    %p46 = por %p44, %p45
    %p47 = scmp.ne.s32.totalorder %s36, %s39
    %p48 = scmp.eq.s32.totalorder %s17, 1
    %p49 = por %p47, %p48
    %p50 = scmp.ne.s32.totalorder %s39, %s40
    %p51 = scmp.eq.s32.totalorder %s17, 0
    %p52 = por %p50, %p51
    %p53 = scmp.ne.s32.totalorder %s39, %s40
    %p54 = scmp.eq.s32.totalorder %s18, 1
    %p55 = por %p53, %p54
    %p57 = scmp.ne.s32.totalorder %s40, %s56
    %p58 = scmp.eq.s32.totalorder %s18, 0
    %p59 = por %p57, %p58
    %s60 = sadd.s32 %s20, 1
    %s61 = smul.u32 %s60, 2
    %s62 = sadd.s32 %s27, 1
    %s63 = smul.u32 %s62, 2
    %s64 = ssub.s32 %s19, %s31
    %s65 = ssub.s32 %s61, %s63
    %s66 = sor.u32 %s64, %s65
    %p67 = scmp.eq.s32.totalorder %s66, 0
    %s69 = sadd.s32 %s68, 1
    %s70 = scalar_select %p67, %s68, %s69
    %p73 = pneg %p67
    %p74 = scmp.eq.s32.totalorder %s12, 1
    %p75 = por %p73, %p74
    %p76 = scmp.ne.s32.totalorder %s68, %s71
    %p77 = scmp.eq.s32.totalorder %s12, 0
    %p78 = por %p76, %p77
    %p79 = scmp.ne.s32.totalorder %s68, %s71
    %p80 = scmp.eq.s32.totalorder %s17, 1
    %p81 = por %p79, %p80
    %p82 = scmp.ne.s32.totalorder %s71, %s72
    %p83 = scmp.eq.s32.totalorder %s17, 0
    %p84 = por %p82, %p83
    %p85 = scmp.ne.s32.totalorder %s71, %s72
    %p86 = scmp.eq.s32.totalorder %s18, 1
    %p87 = por %p85, %p86
    %p89 = scmp.ne.s32.totalorder %s72, %s88
    %p90 = scmp.eq.s32.totalorder %s18, 0
    %p91 = por %p89, %p90
    %s93 = sadd.s32 %s92, 1
    %p96 = scmp.eq.s32.totalorder %s12, 1
    %p97 = scmp.ne.s32.totalorder %s92, %s94
    %p98 = scmp.eq.s32.totalorder %s12, 0
    %p99 = por %p97, %p98
    %p100 = scmp.ne.s32.totalorder %s92, %s94
    %p101 = scmp.eq.s32.totalorder %s17, 1
    %p102 = por %p100, %p101
    %p103 = scmp.ne.s32.totalorder %s94, %s95
    %p104 = scmp.eq.s32.totalorder %s17, 0
    %p105 = por %p103, %p104
    %p106 = scmp.ne.s32.totalorder %s94, %s95
    %p107 = scmp.eq.s32.totalorder %s18, 1
    %p108 = por %p106, %p107
    %p110 = scmp.ne.s32.totalorder %s95, %s109
    %p111 = scmp.eq.s32.totalorder %s18, 0
    %p112 = por %p110, %p111
    %s113 = ssub.s32 %s19, %s31
    %s114 = ssub.s32 %s20, %s27
    %s115 = sor.u32 %s113, %s114
    %p116 = scmp.eq.s32.totalorder %s115, 0
    %s118 = sadd.s32 %s117, 1
    %s119 = scalar_select %p116, %s117, %s118
    %p122 = pneg %p116
    %p123 = scmp.eq.s32.totalorder %s12, 1
    %p124 = por %p122, %p123
    %p125 = scmp.ne.s32.totalorder %s117, %s120
    %p126 = scmp.eq.s32.totalorder %s12, 0
    %p127 = por %p125, %p126
    %p128 = scmp.ne.s32.totalorder %s117, %s120
    %p129 = scmp.eq.s32.totalorder %s17, 1
    %p130 = por %p128, %p129
    %p131 = scmp.ne.s32.totalorder %s120, %s121
    %p132 = scmp.eq.s32.totalorder %s17, 0
    %p133 = por %p131, %p132
    %p134 = scmp.ne.s32.totalorder %s120, %s121
    %p135 = scmp.eq.s32.totalorder %s18, 1
    %p136 = por %p134, %p135
    %p138 = scmp.ne.s32.totalorder %s121, %s137
    %p139 = scmp.eq.s32.totalorder %s18, 0
    %p140 = por %p138, %p139
    %s141 = ssub.s32 %s19, %s31
    %s142 = ssub.s32 %s20, %s27
    %s143 = sor.u32 %s141, %s142
    %p144 = scmp.eq.s32.totalorder %s143, 0
    %s146 = sadd.s32 %s145, 1
    %s147 = scalar_select %p144, %s145, %s146
    %p150 = pneg %p144
    %p151 = scmp.eq.s32.totalorder %s12, 1
    %p152 = por %p150, %p151
    %p153 = scmp.ne.s32.totalorder %s145, %s148
    %p154 = scmp.eq.s32.totalorder %s12, 0
    %p155 = por %p153, %p154
    %p156 = scmp.ne.s32.totalorder %s145, %s148
    %p157 = scmp.eq.s32.totalorder %s17, 1
    %p158 = por %p156, %p157
    %p159 = scmp.ne.s32.totalorder %s148, %s149
    %p160 = scmp.eq.s32.totalorder %s17, 0
    %p161 = por %p159, %p160
    %p162 = scmp.ne.s32.totalorder %s148, %s149
    %p163 = scmp.eq.s32.totalorder %s18, 1
    %p164 = por %p162, %p163
    %p166 = scmp.ne.s32.totalorder %s149, %s165
    %p167 = scmp.eq.s32.totalorder %s18, 0
    %p168 = por %p166, %p167
    %s169 = ssub.s32 %s19, %s31
    %s170 = ssub.s32 %s20, %s27
    %s171 = sor.u32 %s169, %s170
    %p172 = scmp.eq.s32.totalorder %s171, 0
    %s174 = sadd.s32 %s173, 1
    %s175 = scalar_select %p172, %s173, %s174
    %p178 = pneg %p172
    %p179 = scmp.eq.s32.totalorder %s12, 1
    %p180 = por %p178, %p179
    %p181 = scmp.ne.s32.totalorder %s173, %s176
    %p182 = scmp.eq.s32.totalorder %s12, 0
    %p183 = por %p181, %p182
    %p184 = scmp.ne.s32.totalorder %s173, %s176
    %p185 = scmp.eq.s32.totalorder %s17, 1
    %p186 = por %p184, %p185
    %p187 = scmp.ne.s32.totalorder %s176, %s177
    %p188 = scmp.eq.s32.totalorder %s17, 0
    %p189 = por %p187, %p188
    %p190 = scmp.ne.s32.totalorder %s176, %s177
    %p191 = scmp.eq.s32.totalorder %s18, 1
    %p192 = por %p190, %p191
    %p194 = scmp.ne.s32.totalorder %s177, %s193
    %p195 = scmp.eq.s32.totalorder %s18, 0
    %p196 = por %p194, %p195
    %p197 = scmp.le.s32.totalorder 1, %s12
    %p198 = scmp.lt.s32.totalorder %s12, 3
    %p199 = pnand %p197, %p198
    %p200 = pneg %p199
    // Predicated region
    $region9: #{convs_forward.6} parent=5 // pred_check
      _
    $region10: #{convs_forward.6} parent=5 // pred_check_branch
      %202 = sbr.rel (%p199) target = $region12
    $region11: #{convs_forward.6} parent=5 // pred_region
      %s203 = ssub.s32 %s12, 1
      // Predicated region
      $region13: #{convs_forward.6} parent=11 // pred_check
        %p204 = pneg %p105
      $region14: #{convs_forward.6} parent=11 // pred_check_branch
        %206 = sbr.rel (%p204) target = $region16
      $region15: #{convs_forward.6} parent=11 // pred_region
        _
      $region16: #{convs_forward.6} parent=11 // pred_fallthru
        _
    $region12: #{convs_forward.6} parent=5 // pred_fallthru
      _
    %p207 = scmp.lt.s32.totalorder %s12, 2
    // Predicated region
    $region17: #{convs_forward.6} parent=5 // pred_check
      %p208 = pneg %p207
    $region18: #{convs_forward.6} parent=5 // pred_check_branch
      %210 = sbr.rel (%p208) target = $region20
    $region19: #{convs_forward.6} parent=5 // pred_region
      // Predicated region
      $region21: #{convs_forward.6} parent=19 // pred_check
        %p211 = pneg %p46
      $region22: #{convs_forward.6} parent=19 // pred_check_branch
        %213 = sbr.rel (%p211) target = $region24
      $region23: #{convs_forward.6} parent=19 // pred_region
        %s214 = smul.u32 2, %s20
        %s215 = ssub.s32 3, %s214
        %p216 = scmp.lt.s32.totalorder %s215, 2
        %s217 = scalar_select %p216, %s215, 2
        %s218 = smul.u32 2, %s217
        %s219 = smul.u32 %s218, 2
        %p220 = scmp.lt.s32.totalorder %s19, 1
        %s221 = scalar_select %p220, %s19, 1
        %p222 = scmp.lt.s32.totalorder %s214, 2
        %s223 = scalar_select %p222, %s214, 2
        %s224 = smul.addr %s223, 2
        %s225 = smul.addr %s221, 6
        %s226 = sadd.s32 %s224, %s225
        %s227 = smul.addr %s226, 2
        %s228 = scalar_lea.vmem %s0, %s227
        %s229 = smul.u32 2, %s20
        %s230 = ssub.s32 3, %s229
        %p231 = scmp.lt.s32.totalorder %s230, 2
        %s232 = scalar_select %p231, %s230, 2
        %s233 = smul.u32 2, %s232
        %s234 = smul.u32 %s233, 2
      $region24: #{convs_forward.6} parent=19 // pred_fallthru
        _
      // Predicated region
      $region25: #{convs_forward.6} parent=19 // pred_check
        %p235 = pneg %p78
      $region26: #{convs_forward.6} parent=19 // pred_check_branch
        %237 = sbr.rel (%p235) target = $region28
      $region27: #{convs_forward.6} parent=19 // pred_region
        %s238 = sadd.s32 %s20, 1
        %s239 = smul.u32 %s238, 2
        %p240 = scmp.lt.s32.totalorder %s19, 1
        %s241 = scalar_select %p240, %s19, 1
        %p242 = scmp.lt.s32.totalorder %s239, 2
        %s243 = scalar_select %p242, %s239, 2
        %s244 = smul.addr %s243, 2
        %s245 = smul.addr %s241, 6
        %s246 = sadd.s32 %s244, %s245
        %s247 = smul.addr %s246, 2
        %s248 = scalar_lea.vmem %s1, %s247
        %s249 = sadd.s32 %s20, 1
        %s250 = smul.u32 %s249, 2
      $region28: #{convs_forward.6} parent=19 // pred_fallthru
        _
    $region20: #{convs_forward.6} parent=5 // pred_fallthru
      _
    %p251 = scmp.le.s32.totalorder 1, %s12
    %p252 = scmp.lt.s32.totalorder %s12, 3
    %p253 = pnand %p251, %p252
    %p254 = pneg %p253
    // Predicated region
    $region29: #{convs_forward.6} parent=5 // pred_check
      _
    $region30: #{convs_forward.6} parent=5 // pred_check_branch
      %256 = sbr.rel (%p253) target = $region32
    $region31: #{convs_forward.6} parent=5 // pred_region
      %s257 = ssub.s32 %s12, 1
      %s258 = smul.u32 2, %s22
      %s259 = ssub.s32 3, %s258
      %p260 = scmp.lt.s32.totalorder %s259, 2
      %s261 = scalar_select %p260, %s259, 2
      %s262 = smul.u32 2, %s261
      %s263 = smul.u32 %s262, 2
      %p264 = scmp.lt.s32.totalorder %s21, 1
      %s265 = scalar_select %p264, %s21, 1
      %p266 = scmp.lt.s32.totalorder %s258, 2
      %s267 = scalar_select %p266, %s258, 2
      %s268 = smul.addr %s267, 2
      %s269 = smul.addr %s265, 6
      %s270 = sadd.s32 %s268, %s269
      %s271 = smul.addr %s270, 2
      %s272 = scalar_lea.vmem %s0, %s271
      %p273 = pneg %p52
      %p274 = pneg %p49
      %s275 = sadd.s32 %s22, 1
      %s276 = smul.u32 %s275, 2
      %p277 = scmp.lt.s32.totalorder %s21, 1
      %s278 = scalar_select %p277, %s21, 1
      %p279 = scmp.lt.s32.totalorder %s276, 2
      %s280 = scalar_select %p279, %s276, 2
      %s281 = smul.addr %s280, 2
      %s282 = smul.addr %s278, 6
      %s283 = sadd.s32 %s281, %s282
      %s284 = smul.addr %s283, 2
      %s285 = scalar_lea.vmem %s1, %s284
      %p286 = pneg %p84
      %p287 = pneg %p81
      %p288 = pneg %p105
      %p289 = pneg %p102
      %p290 = pneg %p133
      %p291 = pneg %p130
      %s292 = smul.u32 2, %s22
      %p293 = scmp.lt.s32.totalorder %s21, 1
      %s294 = scalar_select %p293, %s21, 1
      %p295 = scmp.lt.s32.totalorder %s292, 1
      %s296 = scalar_select %p295, %s292, 1
      %s297 = smul.addr %s294, 2
      %s298 = sadd.s32 %s296, %s297
      %s299 = scalar_lea.vmem %s3, %s298
      %p300 = pneg %p161
      %p301 = pneg %p158
      %p302 = scmp.lt.s32.totalorder %s21, 1
      %s303 = scalar_select %p302, %s21, 1
      %p304 = scmp.lt.s32.totalorder %s22, 0
      %s305 = scalar_select %p304, %s22, 0
      %s306 = sadd.s32 %s305, %s303
      %s307 = scalar_lea.vmem %s4, %s306
      %p308 = pneg %p189
      %p309 = pneg %p186
      %p310 = scmp.lt.s32.totalorder %s21, 1
      %s311 = scalar_select %p310, %s21, 1
      %p312 = scmp.lt.s32.totalorder %s22, 0
      %s313 = scalar_select %p312, %s22, 0
      %s314 = sadd.s32 %s313, %s311
      %s315 = scalar_lea.vmem %s5, %s314
      %s316 = smul.u32 2, %s22
      %s317 = ssub.s32 3, %s316
      %p318 = scmp.lt.s32.totalorder %s317, 2
      %s319 = scalar_select %p318, %s317, 2
      %s320 = smul.u32 2, %s319
      %s321 = smul.u32 %s320, 2
      %p322 = scmp.lt.s32.totalorder %s21, 1
      %s323 = scalar_select %p322, %s21, 1
      %p324 = scmp.lt.s32.totalorder %s316, 2
      %s325 = scalar_select %p324, %s316, 2
      %s326 = smul.addr %s325, 2
      %s327 = smul.addr %s323, 6
      %s328 = sadd.s32 %s326, %s327
      %s329 = smul.addr %s328, 2
      %s330 = scalar_lea.vmem %s0, %s329
      %s331 = smul.u32 2, %s22
      %s332 = ssub.s32 3, %s331
      %p333 = scmp.lt.s32.totalorder %s332, 2
      %s334 = scalar_select %p333, %s332, 2
      %s335 = smul.u32 2, %s334
      %s336 = smul.u32 %s335, 2
      %s337 = sadd.s32 %s22, 1
      %s338 = smul.u32 %s337, 2
      %p339 = scmp.lt.s32.totalorder %s21, 1
      %s340 = scalar_select %p339, %s21, 1
      %p341 = scmp.lt.s32.totalorder %s338, 2
      %s342 = scalar_select %p341, %s338, 2
      %s343 = smul.addr %s342, 2
      %s344 = smul.addr %s340, 6
      %s345 = sadd.s32 %s343, %s344
      %s346 = smul.addr %s345, 2
      %s347 = scalar_lea.vmem %s1, %s346
      %s348 = sadd.s32 %s22, 1
      %s349 = smul.u32 %s348, 2
      %s350 = smul.u32 2, %s22
      %p351 = scmp.lt.s32.totalorder %s21, 1
      %s352 = scalar_select %p351, %s21, 1
      %p353 = scmp.lt.s32.totalorder %s350, 1
      %s354 = scalar_select %p353, %s350, 1
      %s355 = smul.addr %s352, 2
      %s356 = sadd.s32 %s354, %s355
      %s357 = scalar_lea.vmem %s3, %s356
      %s358 = smul.u32 2, %s22
      %p359 = scmp.lt.s32.totalorder %s21, 1
      %s360 = scalar_select %p359, %s21, 1
      %p361 = scmp.lt.s32.totalorder %s22, 0
      %s362 = scalar_select %p361, %s22, 0
      %s363 = sadd.s32 %s362, %s360
      %s364 = scalar_lea.vmem %s4, %s363
      %p365 = scmp.lt.s32.totalorder %s21, 1
      %s366 = scalar_select %p365, %s21, 1
      %p367 = scmp.lt.s32.totalorder %s22, 0
      %s368 = scalar_select %p367, %s22, 0
      %s369 = sadd.s32 %s368, %s366
      %s370 = scalar_lea.vmem %s5, %s369
      %v371 = vld [vmem:[%s330] sm:$0xf]
      %v372 = vld [vmem:[%s330 + $0x4] sm:$0xf]
      %v373 = vld [vmem:[%s347] sm:$0xf]
      %v374 = vld [vmem:[%s2] sm:$0xf]
      %v375 = vld [vmem:[%s2 + $0x4] sm:$0xf]
      %v376 = vld [vmem:[%s2 + $0x8] sm:$0xf]
      %v377 = vld [vmem:[%s2 + $0xc] sm:$0xf]
      %v378 = vld [vmem:[%s2 + $0x10] sm:$0xf]
      %v379 = vld [vmem:[%s2 + $0x14] sm:$0xf]
      %v380 = vld [vmem:[%s2 + $0x18] sm:$0xf]
      %v381 = vld [vmem:[%s2 + $0x1c] sm:$0xf]
      %v382 = vld [vmem:[%s2 + $0x20] sm:$0xf]
      %v383 = vld [vmem:[%s2 + $0x24] sm:$0xf]
      %v384 = vld [vmem:[%s2 + $0x28] sm:$0xf]
      %v385 = vld [vmem:[%s2 + $0x2c] sm:$0xf]
      %v386 = vld [vmem:[%s2 + $0x30] sm:$0xf]
      %v387 = vld [vmem:[%s2 + $0x34] sm:$0xf]
      %v388 = vld [vmem:[%s2 + $0x38] sm:$0xf]
      %v389 = vld [vmem:[%s2 + $0x3c] sm:$0xf]
      %v390 = vld [vmem:[%s2 + $0x40] sm:$0xf]
      %v391 = vld [vmem:[%s2 + $0x44] sm:$0xf]
      %v392 = vld [vmem:[%s2 + $0x48] sm:$0xf]
      %v393 = vld [vmem:[%s2 + $0x4c] sm:$0xf]
      %v394 = vld [vmem:[%s2 + $0x50] sm:$0xf]
      %v395 = vld [vmem:[%s2 + $0x54] sm:$0xf]
      %v396 = vld [vmem:[%s2 + $0x58] sm:$0xf]
      %v397 = vld [vmem:[%s2 + $0x5c] sm:$0xf]
      %v398 = vld [vmem:[%s2 + $0x60] sm:$0xf]
      %v399 = vld [vmem:[%s2 + $0x64] sm:$0xf]
      %v400 = vld [vmem:[%s2 + $0x68] sm:$0xf]
      %v401 = vld [vmem:[%s2 + $0x6c] sm:$0xf]
      %v402 = vld [vmem:[%s2 + $0x70] sm:$0xf]
      %v403 = vld [vmem:[%s2 + $0x74] sm:$0xf]
      %v404 = vld [vmem:[%s2 + $0x78] sm:$0xf]
      %v405 = vld [vmem:[%s2 + $0x7c] sm:$0xf]
      %v406 = vld [vmem:[%s2 + $0x80] sm:$0xf]
      %v407 = vld [vmem:[%s2 + $0x84] sm:$0xf]
      %v408 = vld [vmem:[%s2 + $0x88] sm:$0xf]
      %v409 = vld [vmem:[%s2 + $0x8c] sm:$0xf]
      %v410 = vld [vmem:[%s2 + $0x90] sm:$0xf]
      %v411 = vld [vmem:[%s2 + $0x94] sm:$0xf]
      %v412 = vld [vmem:[%s2 + $0x98] sm:$0xf]
      %v413 = vld [vmem:[%s2 + $0x9c] sm:$0xf]
      %v414 = vld [vmem:[%s2 + $0xa0] sm:$0xf]
      %v415 = vld [vmem:[%s2 + $0xa4] sm:$0xf]
      %v416 = vld [vmem:[%s2 + $0xa8] sm:$0xf]
      %v417 = vld [vmem:[%s2 + $0xac] sm:$0xf]
      %v418 = vld [vmem:[%s2 + $0xb0] sm:$0xf]
      %v419 = vld [vmem:[%s2 + $0xb4] sm:$0xf]
      %v420 = vld [vmem:[%s2 + $0xb8] sm:$0xf]
      %v421 = vld [vmem:[%s2 + $0xbc] sm:$0xf]
      %v422 = vld [vmem:[%s2 + $0xc0] sm:$0xf]
      %v423 = vld [vmem:[%s2 + $0xc4] sm:$0xf]
      %v424 = vld [vmem:[%s2 + $0xc8] sm:$0xf]
      %v425 = vld [vmem:[%s2 + $0xcc] sm:$0xf]
      %v426 = vld [vmem:[%s2 + $0xd0] sm:$0xf]
      %v427 = vld [vmem:[%s2 + $0xd4] sm:$0xf]
      %v428 = vld [vmem:[%s2 + $0xd8] sm:$0xf]
      %v429 = vld [vmem:[%s2 + $0xdc] sm:$0xf]
      %v430 = vld [vmem:[%s2 + $0xe0] sm:$0xf]
      %v431 = vld [vmem:[%s2 + $0xe4] sm:$0xf]
      %v432 = vld [vmem:[%s2 + $0xe8] sm:$0xf]
      %v433 = vld [vmem:[%s2 + $0xec] sm:$0xf]
      %v434 = vld [vmem:[%s2 + $0xf0] sm:$0xf]
      %v435 = vld [vmem:[%s2 + $0xf4] sm:$0xf]
      %v436 = vld [vmem:[%s2 + $0xf8] sm:$0xf]
      %v437 = vld [vmem:[%s2 + $0xfc] sm:$0xf]
      %v438 = vld [vmem:[%s2 + $0x100] sm:$0xf]
      %v439 = vld [vmem:[%s2 + $0x104] sm:$0xf]
      %v440 = vld [vmem:[%s2 + $0x108] sm:$0xf]
      %v441 = vld [vmem:[%s2 + $0x10c] sm:$0xf]
      %v442 = vld [vmem:[%s2 + $0x110] sm:$0xf]
      %v443 = vld [vmem:[%s2 + $0x114] sm:$0xf]
      %v444 = vld [vmem:[%s2 + $0x118] sm:$0xf]
      %v445 = vld [vmem:[%s2 + $0x11c] sm:$0xf]
      %v446 = vld [vmem:[%s2 + $0x120] sm:$0xf]
      %v447 = vld [vmem:[%s2 + $0x124] sm:$0xf]
      %v448 = vld [vmem:[%s2 + $0x128] sm:$0xf]
      %v449 = vld [vmem:[%s2 + $0x12c] sm:$0xf]
      %v450 = vld [vmem:[%s2 + $0x130] sm:$0xf]
      %v451 = vld [vmem:[%s2 + $0x134] sm:$0xf]
      %v452 = vld [vmem:[%s2 + $0x138] sm:$0xf]
      %v453 = vld [vmem:[%s2 + $0x13c] sm:$0xf]
      %v454 = vld [vmem:[%s2 + $0x140] sm:$0xf]
      %v455 = vld [vmem:[%s2 + $0x144] sm:$0xf]
      %v456 = vld [vmem:[%s2 + $0x148] sm:$0xf]
      %v457 = vld [vmem:[%s2 + $0x14c] sm:$0xf]
      %v458 = vld [vmem:[%s2 + $0x150] sm:$0xf]
      %v459 = vld [vmem:[%s2 + $0x154] sm:$0xf]
      %v460 = vld [vmem:[%s2 + $0x158] sm:$0xf]
      %v461 = vld [vmem:[%s2 + $0x15c] sm:$0xf]
      %v462 = vld [vmem:[%s2 + $0x160] sm:$0xf]
      %v463 = vld [vmem:[%s2 + $0x164] sm:$0xf]
      %v464 = vld [vmem:[%s2 + $0x168] sm:$0xf]
      %v465 = vld [vmem:[%s2 + $0x16c] sm:$0xf]
      %v466 = vld [vmem:[%s2 + $0x170] sm:$0xf]
      %v467 = vld [vmem:[%s2 + $0x174] sm:$0xf]
      %v468 = vld [vmem:[%s2 + $0x178] sm:$0xf]
      %v469 = vld [vmem:[%s2 + $0x17c] sm:$0xf]
      %v470 = vld [vmem:[%s2 + $0x180] sm:$0xf]
      %v471 = vld [vmem:[%s2 + $0x184] sm:$0xf]
      %v472 = vld [vmem:[%s2 + $0x188] sm:$0xf]
      %v473 = vld [vmem:[%s2 + $0x18c] sm:$0xf]
      %v474 = vld [vmem:[%s2 + $0x190] sm:$0xf]
      %v475 = vld [vmem:[%s2 + $0x194] sm:$0xf]
      %v476 = vld [vmem:[%s2 + $0x198] sm:$0xf]
      %v477 = vld [vmem:[%s2 + $0x19c] sm:$0xf]
      %v478 = vld [vmem:[%s2 + $0x1a0] sm:$0xf]
      %v479 = vld [vmem:[%s2 + $0x1a4] sm:$0xf]
      %v480 = vld [vmem:[%s2 + $0x1a8] sm:$0xf]
      %v481 = vld [vmem:[%s2 + $0x1ac] sm:$0xf]
      %v482 = vld [vmem:[%s2 + $0x1b0] sm:$0xf]
      %v483 = vld [vmem:[%s2 + $0x1b4] sm:$0xf]
      %v484 = vld [vmem:[%s2 + $0x1b8] sm:$0xf]
      %v485 = vld [vmem:[%s2 + $0x1bc] sm:$0xf]
      %v486 = vld [vmem:[%s2 + $0x1c0] sm:$0xf]
      %v487 = vld [vmem:[%s2 + $0x1c4] sm:$0xf]
      %v488 = vld [vmem:[%s2 + $0x1c8] sm:$0xf]
      %v489 = vld [vmem:[%s2 + $0x1cc] sm:$0xf]
      %v490 = vld [vmem:[%s2 + $0x1d0] sm:$0xf]
      %v491 = vld [vmem:[%s2 + $0x1d4] sm:$0xf]
      %v492 = vld [vmem:[%s2 + $0x1d8] sm:$0xf]
      %v493 = vld [vmem:[%s2 + $0x1dc] sm:$0xf]
      %v494 = vld [vmem:[%s2 + $0x1e0] sm:$0xf]
      %v495 = vld [vmem:[%s2 + $0x1e4] sm:$0xf]
      %v496 = vld [vmem:[%s2 + $0x1e8] sm:$0xf]
      %v497 = vld [vmem:[%s2 + $0x1ec] sm:$0xf]
      %v498 = vld [vmem:[%s2 + $0x1f0] sm:$0xf]
      %v499 = vld [vmem:[%s2 + $0x1f4] sm:$0xf]
      %v500 = vld [vmem:[%s2 + $0x1f8] sm:$0xf]
      %v501 = vld [vmem:[%s2 + $0x1fc] sm:$0xf]
      %v504 = vrot.slane %v371, 1
      %v505 = vrot.slane %v371, 2
      %v506 = vrot.slane %v371, 3
      %v507 = vrot.slane %v372, 1
      %v508 = vrot.slane %v372, 2
      %v509 = vrot.slane %v372, 3
      %vm510 = vcmask 1040384
      %v513 = vsel %vm510, %v371, %v504
      %vm514 = vcmask 1042434
      %v517 = vsel %vm514, %v505, %v506
      %vm518 = vcmask 1041408
      %v519 = vsel %vm518, %v513, %v517
      %v522 = vsel %vm510, %v372, %v507
      %v525 = vsel %vm514, %v508, %v509
      %v526 = vsel %vm518, %v522, %v525
      %v528 = vrot.slane %v373, 1
      %v529 = vrot.slane %v373, 2
      %v530 = vrot.slane %v373, 3
      %v533 = vsel %vm510, %v373, %v528
      %v536 = vsel %vm514, %v529, %v530
      %v537 = vsel %vm518, %v533, %v536
      %538 = vst [vmem:[#allocation1] ss:$9 sm:$0xff] %v526
      %s539 = scalar_lea.vmem [#allocation1], 1
      %540 = vst [vmem:[%s539] ss:$9 sm:$0xff] %v537
      %v541 = vld [vmem:[#allocation1] sm:$0xff]
      %v542 = vld [vmem:[#allocation1 + $0x9] sm:$0xff]
      %v577 = vunpack.c.l.b16 %v438
      %v578 = vunpack.c.l.b16 %v439
      %v579 = vunpack.c.l.b16 %v440
      %v580 = vunpack.c.l.b16 %v441
      %v581 = vunpack.c.l.b16 %v442
      %v582 = vunpack.c.l.b16 %v443
      %v583 = vunpack.c.l.b16 %v444
      %v584 = vunpack.c.l.b16 %v445
      %v585 = vunpack.c.l.b16 %v446
      %v586 = vunpack.c.l.b16 %v447
      %v587 = vunpack.c.l.b16 %v448
      %v588 = vunpack.c.l.b16 %v449
      %v589 = vunpack.c.l.b16 %v450
      %v590 = vunpack.c.l.b16 %v451
      %v591 = vunpack.c.l.b16 %v452
      %v592 = vunpack.c.l.b16 %v453
      %v593 = vunpack.c.l.b16 %v454
      %v594 = vunpack.c.l.b16 %v455
      %v595 = vunpack.c.l.b16 %v456
      %v596 = vunpack.c.l.b16 %v457
      %v597 = vunpack.c.l.b16 %v458
      %v598 = vunpack.c.l.b16 %v459
      %v599 = vunpack.c.l.b16 %v460
      %v600 = vunpack.c.l.b16 %v461
      %v601 = vunpack.c.l.b16 %v462
      %v602 = vunpack.c.l.b16 %v463
      %v603 = vunpack.c.l.b16 %v464
      %v604 = vunpack.c.l.b16 %v465
      %v605 = vunpack.c.l.b16 %v466
      %v606 = vunpack.c.l.b16 %v467
      %v607 = vunpack.c.l.b16 %v468
      %v608 = vunpack.c.l.b16 %v469
      %v609 = vpack.c.b16 %v578, %v577
      %v610 = vpack.c.b16 %v580, %v579
      %v611 = vpack.c.b16 %v582, %v581
      %v612 = vpack.c.b16 %v584, %v583
      %v613 = vpack.c.b16 %v586, %v585
      %v614 = vpack.c.b16 %v588, %v587
      %v615 = vpack.c.b16 %v590, %v589
      %v616 = vpack.c.b16 %v592, %v591
      %v617 = vpack.c.b16 %v594, %v593
      %v618 = vpack.c.b16 %v596, %v595
      %v619 = vpack.c.b16 %v598, %v597
      %v620 = vpack.c.b16 %v600, %v599
      %v621 = vpack.c.b16 %v602, %v601
      %v622 = vpack.c.b16 %v604, %v603
      %v623 = vpack.c.b16 %v606, %v605
      %v624 = vpack.c.b16 %v608, %v607
      %641 = vmatpush.bf16.msra.mxu0 %v616
      %642 = vmatpush.bf16.msra.mxu0 %v615
      %643 = vmatpush.bf16.msra.mxu0 %v614
      %644 = vmatpush.bf16.msra.mxu0 %v613
      %645 = vmatpush.bf16.msra.mxu0 %v612
      %646 = vmatpush.bf16.msra.mxu0 %v611
      %647 = vmatpush.bf16.msra.mxu0 %v610
      %648 = vmatpush.bf16.msra.mxu0 %v609
      %649 = vmatmul.bf16.gmra.mxu0 %v541
      %v650 = vpop.f32.mrf.mxu0
      %v651 = vadd.f32 0.0, %v650
      %v652 = vpop.f32.mrf.mxu0
      %653 = vdwg.mxu0
      %654 = vmatpush.bf16.msra.mxu0 %v624
      %655 = vmatpush.bf16.msra.mxu0 %v623
      %656 = vmatpush.bf16.msra.mxu0 %v622
      %657 = vmatpush.bf16.msra.mxu0 %v621
      %658 = vmatpush.bf16.msra.mxu0 %v620
      %659 = vmatpush.bf16.msra.mxu0 %v619
      %660 = vmatpush.bf16.msra.mxu0 %v618
      %661 = vmatpush.bf16.msra.mxu0 %v617
      %662 = vmatmul.bf16.gmra.mxu0 %v542
      %v663 = vpop.f32.mrf.mxu0
      %v664 = vadd.f32 %v651, %v663
      %v665 = vpop.f32.mrf.mxu0
      %666 = vdwg.mxu0
      %vm667 = vcmask 1041409
      %v668 = vsel %vm667, %v371, %v504
      %vm669 = vcmask 1043459
      %v670 = vsel %vm669, %v505, %v506
      %vm671 = vcmask 1042433
      %v672 = vsel %vm671, %v668, %v670
      %v674 = vrot.slane %v672, 1
      %v675 = vsel %vm667, %v372, %v507
      %v676 = vsel %vm669, %v508, %v509
      %v677 = vsel %vm671, %v675, %v676
      %v679 = vrot.slane %v677, 1
      %vm680 = vsmask.f32 256
      %vm681 = vsmask.f32 1284
      %vm682 = vmor %vm680, %vm681
      %vm683 = vsmask.f32 2312
      %vm684 = vmor %vm682, %vm683
      %vm685 = vsmask.f32 3340
      %vm686 = vmor %vm684, %vm685
      %vm687 = vsmask.f32 4368
      %vm688 = vmor %vm686, %vm687
      %vm689 = vsmask.f32 5396
      %vm690 = vmor %vm688, %vm689
      %vm691 = vsmask.f32 6424
      %vm692 = vmor %vm690, %vm691
      %vm693 = vsmask.f32 7452
      %vm694 = vmor %vm692, %vm693
      %v695 = vshrl.u32 %v519, 16
      %v697 = vrot.slane %v695, 7
      %v698 = vrot.slane %v697, 1
      %v700 = vshll.u32 %v674, 16
      %v702 = vsel %vm694, %v698, %v700
      %v703 = vshrl.u32 %v526, 16
      %v705 = vrot.slane %v703, 7
      %v706 = vrot.slane %v705, 1
      %v708 = vshll.u32 %v679, 16
      %v710 = vsel %vm694, %v706, %v708
      %712 = vst [vmem:[#allocation1] ss:$9 sm:$0xff] %v702
      %s714 = scalar_lea.vmem [#allocation1], 1
      %715 = vst [vmem:[%s714] ss:$9 sm:$0xff] %v710
      %v716 = vld [vmem:[#allocation1] sm:$0xff]
      %v717 = vld [vmem:[#allocation1 + $0x9] sm:$0xff]
      %v752 = vunpack.c.l.b16 %v406
      %v753 = vunpack.c.l.b16 %v407
      %v754 = vunpack.c.l.b16 %v408
      %v755 = vunpack.c.l.b16 %v409
      %v756 = vunpack.c.l.b16 %v410
      %v757 = vunpack.c.l.b16 %v411
      %v758 = vunpack.c.l.b16 %v412
      %v759 = vunpack.c.l.b16 %v413
      %v760 = vunpack.c.l.b16 %v414
      %v761 = vunpack.c.l.b16 %v415
      %v762 = vunpack.c.l.b16 %v416
      %v763 = vunpack.c.l.b16 %v417
      %v764 = vunpack.c.l.b16 %v418
      %v765 = vunpack.c.l.b16 %v419
      %v766 = vunpack.c.l.b16 %v420
      %v767 = vunpack.c.l.b16 %v421
      %v768 = vunpack.c.l.b16 %v422
      %v769 = vunpack.c.l.b16 %v423
      %v770 = vunpack.c.l.b16 %v424
      %v771 = vunpack.c.l.b16 %v425
      %v772 = vunpack.c.l.b16 %v426
      %v773 = vunpack.c.l.b16 %v427
      %v774 = vunpack.c.l.b16 %v428
      %v775 = vunpack.c.l.b16 %v429
      %v776 = vunpack.c.l.b16 %v430
      %v777 = vunpack.c.l.b16 %v431
      %v778 = vunpack.c.l.b16 %v432
      %v779 = vunpack.c.l.b16 %v433
      %v780 = vunpack.c.l.b16 %v434
      %v781 = vunpack.c.l.b16 %v435
      %v782 = vunpack.c.l.b16 %v436
      %v783 = vunpack.c.l.b16 %v437
      %v784 = vpack.c.b16 %v753, %v752
      %v785 = vpack.c.b16 %v755, %v754
      %v786 = vpack.c.b16 %v757, %v756
      %v787 = vpack.c.b16 %v759, %v758
      %v788 = vpack.c.b16 %v761, %v760
      %v789 = vpack.c.b16 %v763, %v762
      %v790 = vpack.c.b16 %v765, %v764
      %v791 = vpack.c.b16 %v767, %v766
      %v792 = vpack.c.b16 %v769, %v768
      %v793 = vpack.c.b16 %v771, %v770
      %v794 = vpack.c.b16 %v773, %v772
      %v795 = vpack.c.b16 %v775, %v774
      %v796 = vpack.c.b16 %v777, %v776
      %v797 = vpack.c.b16 %v779, %v778
      %v798 = vpack.c.b16 %v781, %v780
      %v799 = vpack.c.b16 %v783, %v782
      %816 = vmatpush.bf16.msra.mxu0 %v791
      %817 = vmatpush.bf16.msra.mxu0 %v790
      %818 = vmatpush.bf16.msra.mxu0 %v789
      %819 = vmatpush.bf16.msra.mxu0 %v788
      %820 = vmatpush.bf16.msra.mxu0 %v787
      %821 = vmatpush.bf16.msra.mxu0 %v786
      %822 = vmatpush.bf16.msra.mxu0 %v785
      %823 = vmatpush.bf16.msra.mxu0 %v784
      %824 = vmatmul.bf16.gmra.mxu0 %v716
      %v825 = vpop.f32.mrf.mxu0
      %v826 = vadd.f32 0.0, %v825
      %v827 = vpop.f32.mrf.mxu0
      %828 = vdwg.mxu0
      %829 = vmatpush.bf16.msra.mxu0 %v799
      %830 = vmatpush.bf16.msra.mxu0 %v798
      %831 = vmatpush.bf16.msra.mxu0 %v797
      %832 = vmatpush.bf16.msra.mxu0 %v796
      %833 = vmatpush.bf16.msra.mxu0 %v795
      %834 = vmatpush.bf16.msra.mxu0 %v794
      %835 = vmatpush.bf16.msra.mxu0 %v793
      %836 = vmatpush.bf16.msra.mxu0 %v792
      %837 = vmatmul.bf16.gmra.mxu0 %v717
      %v838 = vpop.f32.mrf.mxu0
      %v839 = vadd.f32 %v826, %v838
      %v840 = vpop.f32.mrf.mxu0
      %841 = vdwg.mxu0
      %v842 = vsel %vm667, %v373, %v528
      %v843 = vsel %vm669, %v529, %v530
      %v844 = vsel %vm671, %v842, %v843
      %v846 = vrot.slane %v844, 1
      %v847 = vshrl.u32 %v537, 16
      %v849 = vrot.slane %v847, 7
      %v850 = vrot.slane %v849, 1
      %v852 = vshll.u32 %v846, 16
      %v854 = vsel %vm694, %v850, %v852
      %855 = vst [vmem:[#allocation1] ss:$9 sm:$0xff] %v710
      %s857 = scalar_lea.vmem [#allocation1], 1
      %858 = vst [vmem:[%s857] ss:$9 sm:$0xff] %v854
      %v859 = vld [vmem:[#allocation1] sm:$0xff]
      %v860 = vld [vmem:[#allocation1 + $0x9] sm:$0xff]
      %v895 = vunpack.c.l.b16 %v470
      %v896 = vunpack.c.l.b16 %v471
      %v897 = vunpack.c.l.b16 %v472
      %v898 = vunpack.c.l.b16 %v473
      %v899 = vunpack.c.l.b16 %v474
      %v900 = vunpack.c.l.b16 %v475
      %v901 = vunpack.c.l.b16 %v476
      %v902 = vunpack.c.l.b16 %v477
      %v903 = vunpack.c.l.b16 %v478
      %v904 = vunpack.c.l.b16 %v479
      %v905 = vunpack.c.l.b16 %v480
      %v906 = vunpack.c.l.b16 %v481
      %v907 = vunpack.c.l.b16 %v482
      %v908 = vunpack.c.l.b16 %v483
      %v909 = vunpack.c.l.b16 %v484
      %v910 = vunpack.c.l.b16 %v485
      %v911 = vunpack.c.l.b16 %v486
      %v912 = vunpack.c.l.b16 %v487
      %v913 = vunpack.c.l.b16 %v488
      %v914 = vunpack.c.l.b16 %v489
      %v915 = vunpack.c.l.b16 %v490
      %v916 = vunpack.c.l.b16 %v491
      %v917 = vunpack.c.l.b16 %v492
      %v918 = vunpack.c.l.b16 %v493
      %v919 = vunpack.c.l.b16 %v494
      %v920 = vunpack.c.l.b16 %v495
      %v921 = vunpack.c.l.b16 %v496
      %v922 = vunpack.c.l.b16 %v497
      %v923 = vunpack.c.l.b16 %v498
      %v924 = vunpack.c.l.b16 %v499
      %v925 = vunpack.c.l.b16 %v500
      %v926 = vunpack.c.l.b16 %v501
      %v927 = vpack.c.b16 %v896, %v895
      %v928 = vpack.c.b16 %v898, %v897
      %v929 = vpack.c.b16 %v900, %v899
      %v930 = vpack.c.b16 %v902, %v901
      %v931 = vpack.c.b16 %v904, %v903
      %v932 = vpack.c.b16 %v906, %v905
      %v933 = vpack.c.b16 %v908, %v907
      %v934 = vpack.c.b16 %v910, %v909
      %v935 = vpack.c.b16 %v912, %v911
      %v936 = vpack.c.b16 %v914, %v913
      %v937 = vpack.c.b16 %v916, %v915
      %v938 = vpack.c.b16 %v918, %v917
      %v939 = vpack.c.b16 %v920, %v919
      %v940 = vpack.c.b16 %v922, %v921
      %v941 = vpack.c.b16 %v924, %v923
      %v942 = vpack.c.b16 %v926, %v925
      %959 = vmatpush.bf16.msra.mxu0 %v934
      %960 = vmatpush.bf16.msra.mxu0 %v933
      %961 = vmatpush.bf16.msra.mxu0 %v932
      %962 = vmatpush.bf16.msra.mxu0 %v931
      %963 = vmatpush.bf16.msra.mxu0 %v930
      %964 = vmatpush.bf16.msra.mxu0 %v929
      %965 = vmatpush.bf16.msra.mxu0 %v928
      %966 = vmatpush.bf16.msra.mxu0 %v927
      %967 = vmatmul.bf16.gmra.mxu0 %v859
      %v968 = vpop.f32.mrf.mxu0
      %v969 = vadd.f32 0.0, %v968
      %v970 = vpop.f32.mrf.mxu0
      %971 = vdwg.mxu0
      %972 = vmatpush.bf16.msra.mxu0 %v942
      %973 = vmatpush.bf16.msra.mxu0 %v941
      %974 = vmatpush.bf16.msra.mxu0 %v940
      %975 = vmatpush.bf16.msra.mxu0 %v939
      %976 = vmatpush.bf16.msra.mxu0 %v938
      %977 = vmatpush.bf16.msra.mxu0 %v937
      %978 = vmatpush.bf16.msra.mxu0 %v936
      %979 = vmatpush.bf16.msra.mxu0 %v935
      %980 = vmatmul.bf16.gmra.mxu0 %v860
      %v981 = vpop.f32.mrf.mxu0
      %v982 = vadd.f32 %v969, %v981
      %v983 = vpop.f32.mrf.mxu0
      %984 = vdwg.mxu0
      %985 = vst [vmem:[#allocation1] ss:$9 sm:$0xff] %v519
      %s986 = scalar_lea.vmem [#allocation1], 1
      %987 = vst [vmem:[%s986] ss:$9 sm:$0xff] %v526
      %v988 = vld [vmem:[#allocation1] sm:$0xff]
      %v989 = vld [vmem:[#allocation1 + $0x9] sm:$0xff]
      %v1024 = vunpack.c.l.b16 %v374
      %v1025 = vunpack.c.l.b16 %v375
      %v1026 = vunpack.c.l.b16 %v376
      %v1027 = vunpack.c.l.b16 %v377
      %v1028 = vunpack.c.l.b16 %v378
      %v1029 = vunpack.c.l.b16 %v379
      %v1030 = vunpack.c.l.b16 %v380
      %v1031 = vunpack.c.l.b16 %v381
      %v1032 = vunpack.c.l.b16 %v382
      %v1033 = vunpack.c.l.b16 %v383
      %v1034 = vunpack.c.l.b16 %v384
      %v1035 = vunpack.c.l.b16 %v385
      %v1036 = vunpack.c.l.b16 %v386
      %v1037 = vunpack.c.l.b16 %v387
      %v1038 = vunpack.c.l.b16 %v388
      %v1039 = vunpack.c.l.b16 %v389
      %v1040 = vunpack.c.l.b16 %v390
      %v1041 = vunpack.c.l.b16 %v391
      %v1042 = vunpack.c.l.b16 %v392
      %v1043 = vunpack.c.l.b16 %v393
      %v1044 = vunpack.c.l.b16 %v394
      %v1045 = vunpack.c.l.b16 %v395
      %v1046 = vunpack.c.l.b16 %v396
      %v1047 = vunpack.c.l.b16 %v397
      %v1048 = vunpack.c.l.b16 %v398
      %v1049 = vunpack.c.l.b16 %v399
      %v1050 = vunpack.c.l.b16 %v400
      %v1051 = vunpack.c.l.b16 %v401
      %v1052 = vunpack.c.l.b16 %v402
      %v1053 = vunpack.c.l.b16 %v403
      %v1054 = vunpack.c.l.b16 %v404
      %v1055 = vunpack.c.l.b16 %v405
      %v1056 = vpack.c.b16 %v1025, %v1024
      %v1057 = vpack.c.b16 %v1027, %v1026
      %v1058 = vpack.c.b16 %v1029, %v1028
      %v1059 = vpack.c.b16 %v1031, %v1030
      %v1060 = vpack.c.b16 %v1033, %v1032
      %v1061 = vpack.c.b16 %v1035, %v1034
      %v1062 = vpack.c.b16 %v1037, %v1036
      %v1063 = vpack.c.b16 %v1039, %v1038
      %v1064 = vpack.c.b16 %v1041, %v1040
      %v1065 = vpack.c.b16 %v1043, %v1042
      %v1066 = vpack.c.b16 %v1045, %v1044
      %v1067 = vpack.c.b16 %v1047, %v1046
      %v1068 = vpack.c.b16 %v1049, %v1048
      %v1069 = vpack.c.b16 %v1051, %v1050
      %v1070 = vpack.c.b16 %v1053, %v1052
      %v1071 = vpack.c.b16 %v1055, %v1054
      %1088 = vmatpush.bf16.msra.mxu0 %v1063
      %1089 = vmatpush.bf16.msra.mxu0 %v1062
      %1090 = vmatpush.bf16.msra.mxu0 %v1061
      %1091 = vmatpush.bf16.msra.mxu0 %v1060
      %1092 = vmatpush.bf16.msra.mxu0 %v1059
      %1093 = vmatpush.bf16.msra.mxu0 %v1058
      %1094 = vmatpush.bf16.msra.mxu0 %v1057
      %1095 = vmatpush.bf16.msra.mxu0 %v1056
      %1096 = vmatmul.bf16.gmra.mxu0 %v988
      %v1097 = vpop.f32.mrf.mxu0
      %v1098 = vadd.f32 %v664, %v1097
      %v1099 = vpop.f32.mrf.mxu0
      %1100 = vdwg.mxu0
      %1101 = vmatpush.bf16.msra.mxu0 %v1071
      %1102 = vmatpush.bf16.msra.mxu0 %v1070
      %1103 = vmatpush.bf16.msra.mxu0 %v1069
      %1104 = vmatpush.bf16.msra.mxu0 %v1068
      %1105 = vmatpush.bf16.msra.mxu0 %v1067
      %1106 = vmatpush.bf16.msra.mxu0 %v1066
      %1107 = vmatpush.bf16.msra.mxu0 %v1065
      %1108 = vmatpush.bf16.msra.mxu0 %v1064
      %1109 = vmatmul.bf16.gmra.mxu0 %v989
      %v1110 = vpop.f32.mrf.mxu0
      %v1111 = vadd.f32 %v1098, %v1110
      %v1112 = vpop.f32.mrf.mxu0
      %1113 = vdwg.mxu0
      %v1114 = vadd.f32 %v1111, %v839
      %v1115 = vadd.f32 %v1114, %v982
      %v1117 = vrot.slane %v1115, 2
      %v1119 = vpack.c.bf16 %v1115, %v1115
      %v1120 = vpack.c.bf16 %v1117, %v1117
      %vm1121 = vcmask 516096
      %1122 = vst.msk [vmem:[%s357] sm:$0x1] %vm1121, %v1119
      %1123 = vst.msk [vmem:[%s357 + $0x1] sm:$0x1] %vm1121, %v1120
      %s1124 = smul.u32 %s22, 2
      %s1125 = ssub.s32 2, %s1124
      %p1126 = scmp.lt.s32.totalorder %s1125, 2
      %s1127 = scalar_select %p1126, %s1125, 2
      %s1128 = smul.u32 %s1127, 2
      %s1129 = scvt.s32.f32 %s1128
      %v1130 = vstv %s1127
      %vm1131 = vcmp.gt.s32.totalorder %v1130, 0
      %vm1132 = vcmp.gt.s32.totalorder %v1130, 1
      %v1133 = vsel %vm1131, 1, 0
      %v1134 = vsel %vm1132, 1, 0
      %vm1135 = vcmp.eq.s32.totalorder %v1133, 1
      %vm1136 = vcmp.eq.s32.totalorder %v1134, 1
      %v1137 = vsel %vm1135, %v1115, 0.0
      %v1138 = vsel %vm1136, %v1117, 0.0
      %vm1139 = vcmask 517120
      %v1140 = vsel %vm1139, %v1137, 0.0
      %v1141 = vsel %vm1139, %v1138, 0.0
      %v1142 = vadd.f32 %v1140, %v1141
      %v1143 = vsel %vm1139, %v1142, 0.0
      %v1144 = vrot.slane %v1143, 4
      %v1145 = vadd.f32 %v1143, %v1144
      %v1146 = vrot.slane %v1145, 2
      %v1147 = vadd.f32 %v1145, %v1146
      %v1148 = vrot.slane %v1147, 1
      %v1149 = vadd.f32 %v1147, %v1148
      %v1150 = vstv %s1129
      %v1151 = vrcp.pop %v1150
      %v1152 = vmul.f32 %v1150, %v1151
      %v1153 = vsub.f32 1.0, %v1152
      %v1154 = vmul.f32 %v1151, %v1153
      %v1155 = vadd.f32 %v1151, %v1154
      %vm1156 = vweird.f32 %v1150
      %vm1157 = vweird.f32 %v1151
      %vm1158 = vmor %vm1156, %vm1157
      %v1159 = vsel %vm1158, %v1151, %v1155
      %v1160 = vand.u32 2147483647, %v1150
      %vm1161 = vcmp.eq.f32.partialorder %v1160, 8.507059e+37
      %v1162 = vand.u32 %v1150, 2147483648
      %v1163 = vor.u32 1.1754944e-38, %v1162
      %v1164 = vsel %vm1161, %v1163, %v1159
      %v1165 = vmul.f32 %v1149, %v1164
      %v1166 = vsub.f32 %v1115, %v1165
      %v1167 = vsub.f32 %v1117, %v1165
      %v1168 = vsel %vm1135, %v1166, 0.0
      %v1169 = vsel %vm1136, %v1167, 0.0
      %v1170 = vmul.f32 %v1168, %v1168
      %v1171 = vmul.f32 %v1169, %v1169
      %v1172 = vsel %vm1139, %v1170, 0.0
      %v1173 = vsel %vm1139, %v1171, 0.0
      %v1174 = vadd.f32 %v1172, %v1173
      %v1175 = vsel %vm1139, %v1174, 0.0
      %v1176 = vrot.slane %v1175, 4
      %v1177 = vadd.f32 %v1175, %v1176
      %v1178 = vrot.slane %v1177, 2
      %v1179 = vadd.f32 %v1177, %v1178
      %v1180 = vrot.slane %v1179, 1
      %v1181 = vadd.f32 %v1179, %v1180
      %1182 = vst.msk [vmem:[%s364] sm:$0x1] %vm1121, %v1149
      %1183 = vst.msk [vmem:[%s370] sm:$0x1] %vm1121, %v1181
      %s1184 = smul.u32 2, %s22
      %p1185 = scmp.lt.s32.totalorder %s21, 1
      %s1186 = scalar_select %p1185, %s21, 1
      %p1187 = scmp.lt.s32.totalorder %s1184, 1
      %s1188 = scalar_select %p1187, %s1184, 1
      %s1189 = smul.addr %s1186, 2
      %s1190 = sadd.s32 %s1188, %s1189
      %s1191 = scalar_lea.vmem %s3, %s1190
      %p1192 = scmp.lt.s32.totalorder %s21, 1
      %s1193 = scalar_select %p1192, %s21, 1
      %p1194 = scmp.lt.s32.totalorder %s22, 0
      %s1195 = scalar_select %p1194, %s22, 0
      %s1196 = sadd.s32 %s1195, %s1193
      %s1197 = scalar_lea.vmem %s4, %s1196
      %p1198 = scmp.lt.s32.totalorder %s21, 1
      %s1199 = scalar_select %p1198, %s21, 1
      %p1200 = scmp.lt.s32.totalorder %s22, 0
      %s1201 = scalar_select %p1200, %s22, 0
      %s1202 = sadd.s32 %s1201, %s1199
      %s1203 = scalar_lea.vmem %s5, %s1202
      // Predicated region
      $region33: #{convs_forward.6} parent=31 // pred_check
        %p1204 = pneg %p130
      $region34: #{convs_forward.6} parent=31 // pred_check_branch
        %1206 = sbr.rel (%p1204) target = $region36
      $region35: #{convs_forward.6} parent=31 // pred_region
        %s1207 = smul.u32 2, %s22
      $region36: #{convs_forward.6} parent=31 // pred_fallthru
        _
      // Predicated region
      $region37: #{convs_forward.6} parent=31 // pred_check
        %p1208 = pneg %p158
      $region38: #{convs_forward.6} parent=31 // pred_check_branch
        %1210 = sbr.rel (%p1208) target = $region40
      $region39: #{convs_forward.6} parent=31 // pred_region
        _
      $region40: #{convs_forward.6} parent=31 // pred_fallthru
        _
      // Predicated region
      $region41: #{convs_forward.6} parent=31 // pred_check
        %p1211 = pneg %p186
      $region42: #{convs_forward.6} parent=31 // pred_check_branch
        %1213 = sbr.rel (%p1211) target = $region44
      $region43: #{convs_forward.6} parent=31 // pred_region
        _
      $region44: #{convs_forward.6} parent=31 // pred_fallthru
        _
    $region32: #{convs_forward.6} parent=5 // pred_fallthru
      _
    %p1214 = scmp.le.s32.totalorder 2, %s12
    // Predicated region
    $region45: #{convs_forward.6} parent=5 // pred_check
      %p1215 = pneg %p1214
    $region46: #{convs_forward.6} parent=5 // pred_check_branch
      %1217 = sbr.rel (%p1215) target = $region48
    $region47: #{convs_forward.6} parent=5 // pred_region
      %s1218 = ssub.s32 %s12, 2
      // Predicated region
      $region49: #{convs_forward.6} parent=47 // pred_check
        %p1219 = pneg %p136
      $region50: #{convs_forward.6} parent=47 // pred_check_branch
        %1221 = sbr.rel (%p1219) target = $region52
      $region51: #{convs_forward.6} parent=47 // pred_region
        %s1222 = smul.u32 2, %s24
        %p1223 = scmp.lt.s32.totalorder %s23, 1
        %s1224 = scalar_select %p1223, %s23, 1
        %p1225 = scmp.lt.s32.totalorder %s1222, 1
        %s1226 = scalar_select %p1225, %s1222, 1
        %s1227 = smul.addr %s1224, 2
        %s1228 = sadd.s32 %s1226, %s1227
        %s1229 = scalar_lea.vmem %s3, %s1228
      $region52: #{convs_forward.6} parent=47 // pred_fallthru
        _
      // Predicated region
      $region53: #{convs_forward.6} parent=47 // pred_check
        %p1230 = pneg %p164
      $region54: #{convs_forward.6} parent=47 // pred_check_branch
        %1232 = sbr.rel (%p1230) target = $region56
      $region55: #{convs_forward.6} parent=47 // pred_region
        %p1233 = scmp.lt.s32.totalorder %s23, 1
        %s1234 = scalar_select %p1233, %s23, 1
        %p1235 = scmp.lt.s32.totalorder %s24, 0
        %s1236 = scalar_select %p1235, %s24, 0
        %s1237 = sadd.s32 %s1236, %s1234
        %s1238 = scalar_lea.vmem %s4, %s1237
      $region56: #{convs_forward.6} parent=47 // pred_fallthru
        _
      // Predicated region
      $region57: #{convs_forward.6} parent=47 // pred_check
        %p1239 = pneg %p192
      $region58: #{convs_forward.6} parent=47 // pred_check_branch
        %1241 = sbr.rel (%p1239) target = $region60
      $region59: #{convs_forward.6} parent=47 // pred_region
        %p1242 = scmp.lt.s32.totalorder %s23, 1
        %s1243 = scalar_select %p1242, %s23, 1
        %p1244 = scmp.lt.s32.totalorder %s24, 0
        %s1245 = scalar_select %p1244, %s24, 0
        %s1246 = sadd.s32 %s1245, %s1243
        %s1247 = scalar_lea.vmem %s5, %s1246
      $region60: #{convs_forward.6} parent=47 // pred_fallthru
        _
    $region48: #{convs_forward.6} parent=5 // pred_fallthru
      _
  $region6: #{convs_forward.6} parent=0 // loop_footer
    %s16 = sadd.s32 1, %s12
  $region7: #{convs_forward.6} parent=0 // loop_footer_branch
    %11 = sbr.rel target = $region3
  $region8: #{convs_forward.6} parent=0 // loop_exit
    _

// kernel: convs_forward.7
$region0: #{convs_forward.7}
  #allocation0 [shape = 'u32[]', space=smem, size = 0x4, offset = 0x4, fixed_abs, tag = 'smem constant byte address 0x4 - core index']
  #allocation1 [shape = 'u32[72,128]{1,0:T(1,128)}', space=vmem, size = 0x9000, scoped, tag = 'internal scratch']
  %s0 = inlined_call_operand.vmem [shape: bf16[2,4,4,64], index: 0, kind: input, shape index: {}, may-alias: {0,1,2,3}]
  %s1 = inlined_call_operand.vmem [shape: bf16[2,4,4,64], index: 1, kind: input, shape index: {}, may-alias: {0,1,2,3}]
  %s2 = inlined_call_operand.vmem [shape: bf16[2,4,4,64], index: 2, kind: input, shape index: {}, may-alias: {0,1,2,3}]
  %s3 = inlined_call_operand.vmem [shape: bf16[2,4,4,64], index: 3, kind: input, shape index: {}, may-alias: {0,1,2,3}]
  %s4 = inlined_call_operand.vmem [shape: bf16[4,4,64,128], index: 4, kind: input, shape index: {}]
  %s5 = inlined_call_operand.vmem [shape: f32[1,128], index: 5, kind: input, shape index: {}]
  %s6 = inlined_call_operand.vmem [shape: f32[2,1,1,128], index: 6, kind: output, shape index: {}]
  %s7 = sld [smem:[#allocation0]]
  $region57: #{convs_forward.7} parent=0
    _
  %s9 = ssub.s32 1, %s7
  %s10 = scalar_select 0, %s9, %s7
  loop: start=0, step=1, limit=4
  $region2: #{convs_forward.7} parent=0 // loop_pre_header
    _
  $region3: #{convs_forward.7} parent=0 // loop_header
    %s12 = sphi 0, %s16
    %p13 = scmp.ge.s32.totalorder %s12, 4
    %s19 = sphi 0, %s31
    %s20 = sphi 0, %s27
    %s21 = sphi 0, %s19
    %s22 = sphi 0, %s20
    %s23 = sphi 0, %s21
    %s24 = sphi 0, %s22
    %s36 = sphi 0, %s38
    %s39 = sphi 0, %s36
    %s40 = sphi 0, %s39
    %s56 = sphi 0, %s40
    %s66 = sphi 0, %s68
    %s69 = sphi 0, %s66
    %s70 = sphi 0, %s69
    %s86 = sphi 0, %s70
    %s96 = sphi 0, %s98
    %s99 = sphi 0, %s96
    %s100 = sphi 0, %s99
    %s116 = sphi 0, %s100
    %s126 = sphi 0, %s128
    %s129 = sphi 0, %s126
    %s130 = sphi 0, %s129
    %s146 = sphi 0, %s130
    %s150 = sphi 0, %s150
    %s152 = sphi 0, %s150
    %s153 = sphi 0, %s152
    %s167 = sphi 0, %s153
    %s171 = sphi 0, %s171
    %s173 = sphi 0, %s171
    %s174 = sphi 0, %s173
    %s188 = sphi 0, %s174
    %s196 = sphi 0, %s198
    %s199 = sphi 0, %s196
    %s200 = sphi 0, %s199
    %s216 = sphi 0, %s200
  $region4: #{convs_forward.7} parent=0 // loop_header_branch
    %15 = sbr.rel (%p13) target = $region8
  $region5: #{convs_forward.7} parent=0 // loop_body
    %s17 = ssub.s32 %s12, 1
    %s18 = ssub.s32 %s12, 2
    %s25 = sadd.s32 1, %s20
    %p26 = scmp.ge.s32.totalorder %s25, 1
    %s27 = scalar_select %p26, 0, %s25
    %s28 = sadd.s32 1, %s19
    %s29 = scalar_select %p26, %s28, %s19
    %p30 = scmp.ge.s32.totalorder %s29, 2
    %s31 = scalar_select %p30, 0, %s29
    %s32 = ssub.s32 %s19, %s31
    %s33 = ssub.s32 %s20, %s27
    %s34 = sor.u32 %s32, %s33
    %p35 = scmp.eq.s32.totalorder %s34, 0
    %s37 = sadd.s32 %s36, 1
    %s38 = scalar_select %p35, %s36, %s37
    %p41 = pneg %p35
    %p42 = scmp.eq.s32.totalorder %s12, 1
    %p43 = por %p41, %p42
    %p44 = scmp.ne.s32.totalorder %s36, %s39
    %p45 = scmp.eq.s32.totalorder %s12, 0
    %p46 = por %p44, %p45
    %p47 = scmp.ne.s32.totalorder %s36, %s39
    %p48 = scmp.eq.s32.totalorder %s17, 1
    %p49 = por %p47, %p48
    %p50 = scmp.ne.s32.totalorder %s39, %s40
    %p51 = scmp.eq.s32.totalorder %s17, 0
    %p52 = por %p50, %p51
    %p53 = scmp.ne.s32.totalorder %s39, %s40
    %p54 = scmp.eq.s32.totalorder %s18, 1
    %p55 = por %p53, %p54
    %p57 = scmp.ne.s32.totalorder %s40, %s56
    %p58 = scmp.eq.s32.totalorder %s18, 0
    %p59 = por %p57, %p58
    %s60 = sadd.s32 %s20, 1
    %s61 = sadd.s32 %s27, 1
    %s62 = ssub.s32 %s19, %s31
    %s63 = ssub.s32 %s60, %s61
    %s64 = sor.u32 %s62, %s63
    %p65 = scmp.eq.s32.totalorder %s64, 0
    %s67 = sadd.s32 %s66, 1
    %s68 = scalar_select %p65, %s66, %s67
    %p71 = pneg %p65
    %p72 = scmp.eq.s32.totalorder %s12, 1
    %p73 = por %p71, %p72
    %p74 = scmp.ne.s32.totalorder %s66, %s69
    %p75 = scmp.eq.s32.totalorder %s12, 0
    %p76 = por %p74, %p75
    %p77 = scmp.ne.s32.totalorder %s66, %s69
    %p78 = scmp.eq.s32.totalorder %s17, 1
    %p79 = por %p77, %p78
    %p80 = scmp.ne.s32.totalorder %s69, %s70
    %p81 = scmp.eq.s32.totalorder %s17, 0
    %p82 = por %p80, %p81
    %p83 = scmp.ne.s32.totalorder %s69, %s70
    %p84 = scmp.eq.s32.totalorder %s18, 1
    %p85 = por %p83, %p84
    %p87 = scmp.ne.s32.totalorder %s70, %s86
    %p88 = scmp.eq.s32.totalorder %s18, 0
    %p89 = por %p87, %p88
    %s90 = sadd.s32 %s20, 2
    %s91 = sadd.s32 %s27, 2
    %s92 = ssub.s32 %s19, %s31
    %s93 = ssub.s32 %s90, %s91
    %s94 = sor.u32 %s92, %s93
    %p95 = scmp.eq.s32.totalorder %s94, 0
    %s97 = sadd.s32 %s96, 1
    %s98 = scalar_select %p95, %s96, %s97
    %p101 = pneg %p95
    %p102 = scmp.eq.s32.totalorder %s12, 1
    %p103 = por %p101, %p102
    %p104 = scmp.ne.s32.totalorder %s96, %s99
    %p105 = scmp.eq.s32.totalorder %s12, 0
    %p106 = por %p104, %p105
    %p107 = scmp.ne.s32.totalorder %s96, %s99
    %p108 = scmp.eq.s32.totalorder %s17, 1
    %p109 = por %p107, %p108
    %p110 = scmp.ne.s32.totalorder %s99, %s100
    %p111 = scmp.eq.s32.totalorder %s17, 0
    %p112 = por %p110, %p111
    %p113 = scmp.ne.s32.totalorder %s99, %s100
    %p114 = scmp.eq.s32.totalorder %s18, 1
    %p115 = por %p113, %p114
    %p117 = scmp.ne.s32.totalorder %s100, %s116
    %p118 = scmp.eq.s32.totalorder %s18, 0
    %p119 = por %p117, %p118
    %s120 = sadd.s32 %s20, 3
    %s121 = sadd.s32 %s27, 3
    %s122 = ssub.s32 %s19, %s31
    %s123 = ssub.s32 %s120, %s121
    %s124 = sor.u32 %s122, %s123
    %p125 = scmp.eq.s32.totalorder %s124, 0
    %s127 = sadd.s32 %s126, 1
    %s128 = scalar_select %p125, %s126, %s127
    %p131 = pneg %p125
    %p132 = scmp.eq.s32.totalorder %s12, 1
    %p133 = por %p131, %p132
    %p134 = scmp.ne.s32.totalorder %s126, %s129
    %p135 = scmp.eq.s32.totalorder %s12, 0
    %p136 = por %p134, %p135
    %p137 = scmp.ne.s32.totalorder %s126, %s129
    %p138 = scmp.eq.s32.totalorder %s17, 1
    %p139 = por %p137, %p138
    %p140 = scmp.ne.s32.totalorder %s129, %s130
    %p141 = scmp.eq.s32.totalorder %s17, 0
    %p142 = por %p140, %p141
    %p143 = scmp.ne.s32.totalorder %s129, %s130
    %p144 = scmp.eq.s32.totalorder %s18, 1
    %p145 = por %p143, %p144
    %p147 = scmp.ne.s32.totalorder %s130, %s146
    %p148 = scmp.eq.s32.totalorder %s18, 0
    %p149 = por %p147, %p148
    %s151 = sadd.s32 %s150, 1
    %p154 = scmp.eq.s32.totalorder %s12, 1
    %p155 = scmp.ne.s32.totalorder %s150, %s152
    %p156 = scmp.eq.s32.totalorder %s12, 0
    %p157 = por %p155, %p156
    %p158 = scmp.ne.s32.totalorder %s150, %s152
    %p159 = scmp.eq.s32.totalorder %s17, 1
    %p160 = por %p158, %p159
    %p161 = scmp.ne.s32.totalorder %s152, %s153
    %p162 = scmp.eq.s32.totalorder %s17, 0
    %p163 = por %p161, %p162
    %p164 = scmp.ne.s32.totalorder %s152, %s153
    %p165 = scmp.eq.s32.totalorder %s18, 1
    %p166 = por %p164, %p165
    %p168 = scmp.ne.s32.totalorder %s153, %s167
    %p169 = scmp.eq.s32.totalorder %s18, 0
    %p170 = por %p168, %p169
    %s172 = sadd.s32 %s171, 1
    %p175 = scmp.eq.s32.totalorder %s12, 1
    %p176 = scmp.ne.s32.totalorder %s171, %s173
    %p177 = scmp.eq.s32.totalorder %s12, 0
    %p178 = por %p176, %p177
    %p179 = scmp.ne.s32.totalorder %s171, %s173
    %p180 = scmp.eq.s32.totalorder %s17, 1
    %p181 = por %p179, %p180
    %p182 = scmp.ne.s32.totalorder %s173, %s174
    %p183 = scmp.eq.s32.totalorder %s17, 0
    %p184 = por %p182, %p183
    %p185 = scmp.ne.s32.totalorder %s173, %s174
    %p186 = scmp.eq.s32.totalorder %s18, 1
    %p187 = por %p185, %p186
    %p189 = scmp.ne.s32.totalorder %s174, %s188
    %p190 = scmp.eq.s32.totalorder %s18, 0
    %p191 = por %p189, %p190
    %s192 = ssub.s32 %s19, %s31
    %s193 = ssub.s32 %s20, %s27
    %s194 = sor.u32 %s192, %s193
    %p195 = scmp.eq.s32.totalorder %s194, 0
    %s197 = sadd.s32 %s196, 1
    %s198 = scalar_select %p195, %s196, %s197
    %p201 = pneg %p195
    %p202 = scmp.eq.s32.totalorder %s12, 1
    %p203 = por %p201, %p202
    %p204 = scmp.ne.s32.totalorder %s196, %s199
    %p205 = scmp.eq.s32.totalorder %s12, 0
    %p206 = por %p204, %p205
    %p207 = scmp.ne.s32.totalorder %s196, %s199
    %p208 = scmp.eq.s32.totalorder %s17, 1
    %p209 = por %p207, %p208
    %p210 = scmp.ne.s32.totalorder %s199, %s200
    %p211 = scmp.eq.s32.totalorder %s17, 0
    %p212 = por %p210, %p211
    %p213 = scmp.ne.s32.totalorder %s199, %s200
    %p214 = scmp.eq.s32.totalorder %s18, 1
    %p215 = por %p213, %p214
    %p217 = scmp.ne.s32.totalorder %s200, %s216
    %p218 = scmp.eq.s32.totalorder %s18, 0
    %p219 = por %p217, %p218
    %p220 = scmp.le.s32.totalorder 1, %s12
    %p221 = scmp.lt.s32.totalorder %s12, 3
    %p222 = pnand %p220, %p221
    %p223 = pneg %p222
    // Predicated region
    $region9: #{convs_forward.7} parent=5 // pred_check
      _
    $region10: #{convs_forward.7} parent=5 // pred_check_branch
      %225 = sbr.rel (%p222) target = $region12
    $region11: #{convs_forward.7} parent=5 // pred_region
      %s226 = ssub.s32 %s12, 1
      // Predicated region
      $region13: #{convs_forward.7} parent=11 // pred_check
        %p227 = pneg %p163
      $region14: #{convs_forward.7} parent=11 // pred_check_branch
        %229 = sbr.rel (%p227) target = $region16
      $region15: #{convs_forward.7} parent=11 // pred_region
        _
      $region16: #{convs_forward.7} parent=11 // pred_fallthru
        _
      // Predicated region
      $region17: #{convs_forward.7} parent=11 // pred_check
        %p230 = pneg %p184
      $region18: #{convs_forward.7} parent=11 // pred_check_branch
        %232 = sbr.rel (%p230) target = $region20
      $region19: #{convs_forward.7} parent=11 // pred_region
        _
      $region20: #{convs_forward.7} parent=11 // pred_fallthru
        _
    $region12: #{convs_forward.7} parent=5 // pred_fallthru
      _
    %p233 = scmp.lt.s32.totalorder %s12, 2
    // Predicated region
    $region21: #{convs_forward.7} parent=5 // pred_check
      %p234 = pneg %p233
    $region22: #{convs_forward.7} parent=5 // pred_check_branch
      %236 = sbr.rel (%p234) target = $region24
    $region23: #{convs_forward.7} parent=5 // pred_region
      // Predicated region
      $region25: #{convs_forward.7} parent=23 // pred_check
        %p237 = pneg %p46
      $region26: #{convs_forward.7} parent=23 // pred_check_branch
        %239 = sbr.rel (%p237) target = $region28
      $region27: #{convs_forward.7} parent=23 // pred_region
        %p240 = scmp.lt.s32.totalorder %s19, 1
        %s241 = scalar_select %p240, %s19, 1
        %p242 = scmp.lt.s32.totalorder %s20, 3
        %s243 = scalar_select %p242, %s20, 3
        %s244 = smul.addr %s241, 4
        %s245 = sadd.s32 %s243, %s244
        %s246 = smul.addr %s245, 2
        %s247 = scalar_lea.vmem %s0, %s246
      $region28: #{convs_forward.7} parent=23 // pred_fallthru
        _
      // Predicated region
      $region29: #{convs_forward.7} parent=23 // pred_check
        %p248 = pneg %p76
      $region30: #{convs_forward.7} parent=23 // pred_check_branch
        %250 = sbr.rel (%p248) target = $region32
      $region31: #{convs_forward.7} parent=23 // pred_region
        %s251 = sadd.s32 %s20, 1
        %p252 = scmp.lt.s32.totalorder %s19, 1
        %s253 = scalar_select %p252, %s19, 1
        %p254 = scmp.lt.s32.totalorder %s251, 3
        %s255 = scalar_select %p254, %s251, 3
        %s256 = smul.addr %s253, 4
        %s257 = sadd.s32 %s255, %s256
        %s258 = smul.addr %s257, 2
        %s259 = scalar_lea.vmem %s1, %s258
        %s260 = sadd.s32 %s20, 1
      $region32: #{convs_forward.7} parent=23 // pred_fallthru
        _
      // Predicated region
      $region33: #{convs_forward.7} parent=23 // pred_check
        %p261 = pneg %p106
      $region34: #{convs_forward.7} parent=23 // pred_check_branch
        %263 = sbr.rel (%p261) target = $region36
      $region35: #{convs_forward.7} parent=23 // pred_region
        %s264 = sadd.s32 %s20, 2
        %p265 = scmp.lt.s32.totalorder %s19, 1
        %s266 = scalar_select %p265, %s19, 1
        %p267 = scmp.lt.s32.totalorder %s264, 3
        %s268 = scalar_select %p267, %s264, 3
        %s269 = smul.addr %s266, 4
        %s270 = sadd.s32 %s268, %s269
        %s271 = smul.addr %s270, 2
        %s272 = scalar_lea.vmem %s2, %s271
        %s273 = sadd.s32 %s20, 2
      $region36: #{convs_forward.7} parent=23 // pred_fallthru
        _
      // Predicated region
      $region37: #{convs_forward.7} parent=23 // pred_check
        %p274 = pneg %p136
      $region38: #{convs_forward.7} parent=23 // pred_check_branch
        %276 = sbr.rel (%p274) target = $region40
      $region39: #{convs_forward.7} parent=23 // pred_region
        %s277 = sadd.s32 %s20, 3
        %p278 = scmp.lt.s32.totalorder %s19, 1
        %s279 = scalar_select %p278, %s19, 1
        %p280 = scmp.lt.s32.totalorder %s277, 3
        %s281 = scalar_select %p280, %s277, 3
        %s282 = smul.addr %s279, 4
        %s283 = sadd.s32 %s281, %s282
        %s284 = smul.addr %s283, 2
        %s285 = scalar_lea.vmem %s3, %s284
        %s286 = sadd.s32 %s20, 3
      $region40: #{convs_forward.7} parent=23 // pred_fallthru
        _
    $region24: #{convs_forward.7} parent=5 // pred_fallthru
      _
    %p287 = scmp.le.s32.totalorder 1, %s12
    %p288 = scmp.lt.s32.totalorder %s12, 3
    %p289 = pnand %p287, %p288
    %p290 = pneg %p289
    // Predicated region
    $region41: #{convs_forward.7} parent=5 // pred_check
      _
    $region42: #{convs_forward.7} parent=5 // pred_check_branch
      %292 = sbr.rel (%p289) target = $region44
    $region43: #{convs_forward.7} parent=5 // pred_region
      %s293 = ssub.s32 %s12, 1
      %p294 = scmp.lt.s32.totalorder %s21, 1
      %s295 = scalar_select %p294, %s21, 1
      %p296 = scmp.lt.s32.totalorder %s22, 3
      %s297 = scalar_select %p296, %s22, 3
      %s298 = smul.addr %s295, 4
      %s299 = sadd.s32 %s297, %s298
      %s300 = smul.addr %s299, 2
      %s301 = scalar_lea.vmem %s0, %s300
      %p302 = pneg %p52
      %p303 = pneg %p49
      %s304 = sadd.s32 %s22, 1
      %p305 = scmp.lt.s32.totalorder %s21, 1
      %s306 = scalar_select %p305, %s21, 1
      %p307 = scmp.lt.s32.totalorder %s304, 3
      %s308 = scalar_select %p307, %s304, 3
      %s309 = smul.addr %s306, 4
      %s310 = sadd.s32 %s308, %s309
      %s311 = smul.addr %s310, 2
      %s312 = scalar_lea.vmem %s1, %s311
      %p313 = pneg %p82
      %p314 = pneg %p79
      %s315 = sadd.s32 %s22, 2
      %p316 = scmp.lt.s32.totalorder %s21, 1
      %s317 = scalar_select %p316, %s21, 1
      %p318 = scmp.lt.s32.totalorder %s315, 3
      %s319 = scalar_select %p318, %s315, 3
      %s320 = smul.addr %s317, 4
      %s321 = sadd.s32 %s319, %s320
      %s322 = smul.addr %s321, 2
      %s323 = scalar_lea.vmem %s2, %s322
      %p324 = pneg %p112
      %p325 = pneg %p109
      %s326 = sadd.s32 %s22, 3
      %p327 = scmp.lt.s32.totalorder %s21, 1
      %s328 = scalar_select %p327, %s21, 1
      %p329 = scmp.lt.s32.totalorder %s326, 3
      %s330 = scalar_select %p329, %s326, 3
      %s331 = smul.addr %s328, 4
      %s332 = sadd.s32 %s330, %s331
      %s333 = smul.addr %s332, 2
      %s334 = scalar_lea.vmem %s3, %s333
      %p335 = pneg %p142
      %p336 = pneg %p139
      %p337 = pneg %p163
      %p338 = pneg %p160
      %p339 = pneg %p184
      %p340 = pneg %p181
      %p341 = pneg %p212
      %p342 = pneg %p209
      %p343 = scmp.lt.s32.totalorder %s21, 1
      %s344 = scalar_select %p343, %s21, 1
      %p345 = scmp.lt.s32.totalorder %s22, 0
      %s346 = scalar_select %p345, %s22, 0
      %s347 = sadd.s32 %s346, %s344
      %s348 = scalar_lea.vmem %s6, %s347
      %p349 = scmp.lt.s32.totalorder %s21, 1
      %s350 = scalar_select %p349, %s21, 1
      %p351 = scmp.lt.s32.totalorder %s22, 3
      %s352 = scalar_select %p351, %s22, 3
      %s353 = smul.addr %s350, 4
      %s354 = sadd.s32 %s352, %s353
      %s355 = smul.addr %s354, 2
      %s356 = scalar_lea.vmem %s0, %s355
      %s357 = sadd.s32 %s22, 1
      %p358 = scmp.lt.s32.totalorder %s21, 1
      %s359 = scalar_select %p358, %s21, 1
      %p360 = scmp.lt.s32.totalorder %s357, 3
      %s361 = scalar_select %p360, %s357, 3
      %s362 = smul.addr %s359, 4
      %s363 = sadd.s32 %s361, %s362
      %s364 = smul.addr %s363, 2
      %s365 = scalar_lea.vmem %s1, %s364
      %s366 = sadd.s32 %s22, 1
      %s367 = sadd.s32 %s22, 2
      %p368 = scmp.lt.s32.totalorder %s21, 1
      %s369 = scalar_select %p368, %s21, 1
      %p370 = scmp.lt.s32.totalorder %s367, 3
      %s371 = scalar_select %p370, %s367, 3
      %s372 = smul.addr %s369, 4
      %s373 = sadd.s32 %s371, %s372
      %s374 = smul.addr %s373, 2
      %s375 = scalar_lea.vmem %s2, %s374
      %s376 = sadd.s32 %s22, 2
      %s377 = sadd.s32 %s22, 3
      %p378 = scmp.lt.s32.totalorder %s21, 1
      %s379 = scalar_select %p378, %s21, 1
      %p380 = scmp.lt.s32.totalorder %s377, 3
      %s381 = scalar_select %p380, %s377, 3
      %s382 = smul.addr %s379, 4
      %s383 = sadd.s32 %s381, %s382
      %s384 = smul.addr %s383, 2
      %s385 = scalar_lea.vmem %s3, %s384
      %s386 = sadd.s32 %s22, 3
      %p387 = scmp.lt.s32.totalorder %s21, 1
      %s388 = scalar_select %p387, %s21, 1
      %p389 = scmp.lt.s32.totalorder %s22, 0
      %s390 = scalar_select %p389, %s22, 0
      %s391 = sadd.s32 %s390, %s388
      %s392 = scalar_lea.vmem %s6, %s391
      %v394 = vld [vmem:[%s356] sm:$0x3]
      %v395 = vld [vmem:[%s365] sm:$0x3]
      %v396 = vld [vmem:[%s375] sm:$0x3]
      %v397 = vld [vmem:[%s385] sm:$0x3]
      %v398 = vld [vmem:[%s4] sm:$0xf]
      %v399 = vld [vmem:[%s4 + $0x4] sm:$0xf]
      %v400 = vld [vmem:[%s4 + $0x8] sm:$0xf]
      %v401 = vld [vmem:[%s4 + $0xc] sm:$0xf]
      %v402 = vld [vmem:[%s4 + $0x10] sm:$0xf]
      %v403 = vld [vmem:[%s4 + $0x14] sm:$0xf]
      %v404 = vld [vmem:[%s4 + $0x18] sm:$0xf]
      %v405 = vld [vmem:[%s4 + $0x1c] sm:$0xf]
      %v406 = vld [vmem:[%s4 + $0x20] sm:$0xf]
      %v407 = vld [vmem:[%s4 + $0x24] sm:$0xf]
      %v408 = vld [vmem:[%s4 + $0x28] sm:$0xf]
      %v409 = vld [vmem:[%s4 + $0x2c] sm:$0xf]
      %v410 = vld [vmem:[%s4 + $0x30] sm:$0xf]
      %v411 = vld [vmem:[%s4 + $0x34] sm:$0xf]
      %v412 = vld [vmem:[%s4 + $0x38] sm:$0xf]
      %v413 = vld [vmem:[%s4 + $0x3c] sm:$0xf]
      %v414 = vld [vmem:[%s4 + $0x40] sm:$0xf]
      %v415 = vld [vmem:[%s4 + $0x44] sm:$0xf]
      %v416 = vld [vmem:[%s4 + $0x48] sm:$0xf]
      %v417 = vld [vmem:[%s4 + $0x4c] sm:$0xf]
      %v418 = vld [vmem:[%s4 + $0x50] sm:$0xf]
      %v419 = vld [vmem:[%s4 + $0x54] sm:$0xf]
      %v420 = vld [vmem:[%s4 + $0x58] sm:$0xf]
      %v421 = vld [vmem:[%s4 + $0x5c] sm:$0xf]
      %v422 = vld [vmem:[%s4 + $0x60] sm:$0xf]
      %v423 = vld [vmem:[%s4 + $0x64] sm:$0xf]
      %v424 = vld [vmem:[%s4 + $0x68] sm:$0xf]
      %v425 = vld [vmem:[%s4 + $0x6c] sm:$0xf]
      %v426 = vld [vmem:[%s4 + $0x70] sm:$0xf]
      %v427 = vld [vmem:[%s4 + $0x74] sm:$0xf]
      %v428 = vld [vmem:[%s4 + $0x78] sm:$0xf]
      %v429 = vld [vmem:[%s4 + $0x7c] sm:$0xf]
      %v430 = vld [vmem:[%s4 + $0x80] sm:$0xf]
      %v431 = vld [vmem:[%s4 + $0x84] sm:$0xf]
      %v432 = vld [vmem:[%s4 + $0x88] sm:$0xf]
      %v433 = vld [vmem:[%s4 + $0x8c] sm:$0xf]
      %v434 = vld [vmem:[%s4 + $0x90] sm:$0xf]
      %v435 = vld [vmem:[%s4 + $0x94] sm:$0xf]
      %v436 = vld [vmem:[%s4 + $0x98] sm:$0xf]
      %v437 = vld [vmem:[%s4 + $0x9c] sm:$0xf]
      %v438 = vld [vmem:[%s4 + $0xa0] sm:$0xf]
      %v439 = vld [vmem:[%s4 + $0xa4] sm:$0xf]
      %v440 = vld [vmem:[%s4 + $0xa8] sm:$0xf]
      %v441 = vld [vmem:[%s4 + $0xac] sm:$0xf]
      %v442 = vld [vmem:[%s4 + $0xb0] sm:$0xf]
      %v443 = vld [vmem:[%s4 + $0xb4] sm:$0xf]
      %v444 = vld [vmem:[%s4 + $0xb8] sm:$0xf]
      %v445 = vld [vmem:[%s4 + $0xbc] sm:$0xf]
      %v446 = vld [vmem:[%s4 + $0xc0] sm:$0xf]
      %v447 = vld [vmem:[%s4 + $0xc4] sm:$0xf]
      %v448 = vld [vmem:[%s4 + $0xc8] sm:$0xf]
      %v449 = vld [vmem:[%s4 + $0xcc] sm:$0xf]
      %v450 = vld [vmem:[%s4 + $0xd0] sm:$0xf]
      %v451 = vld [vmem:[%s4 + $0xd4] sm:$0xf]
      %v452 = vld [vmem:[%s4 + $0xd8] sm:$0xf]
      %v453 = vld [vmem:[%s4 + $0xdc] sm:$0xf]
      %v454 = vld [vmem:[%s4 + $0xe0] sm:$0xf]
      %v455 = vld [vmem:[%s4 + $0xe4] sm:$0xf]
      %v456 = vld [vmem:[%s4 + $0xe8] sm:$0xf]
      %v457 = vld [vmem:[%s4 + $0xec] sm:$0xf]
      %v458 = vld [vmem:[%s4 + $0xf0] sm:$0xf]
      %v459 = vld [vmem:[%s4 + $0xf4] sm:$0xf]
      %v460 = vld [vmem:[%s4 + $0xf8] sm:$0xf]
      %v461 = vld [vmem:[%s4 + $0xfc] sm:$0xf]
      %v462 = vld [vmem:[%s4 + $0x100] sm:$0xf]
      %v463 = vld [vmem:[%s4 + $0x104] sm:$0xf]
      %v464 = vld [vmem:[%s4 + $0x108] sm:$0xf]
      %v465 = vld [vmem:[%s4 + $0x10c] sm:$0xf]
      %v466 = vld [vmem:[%s4 + $0x110] sm:$0xf]
      %v467 = vld [vmem:[%s4 + $0x114] sm:$0xf]
      %v468 = vld [vmem:[%s4 + $0x118] sm:$0xf]
      %v469 = vld [vmem:[%s4 + $0x11c] sm:$0xf]
      %v470 = vld [vmem:[%s4 + $0x120] sm:$0xf]
      %v471 = vld [vmem:[%s4 + $0x124] sm:$0xf]
      %v472 = vld [vmem:[%s4 + $0x128] sm:$0xf]
      %v473 = vld [vmem:[%s4 + $0x12c] sm:$0xf]
      %v474 = vld [vmem:[%s4 + $0x130] sm:$0xf]
      %v475 = vld [vmem:[%s4 + $0x134] sm:$0xf]
      %v476 = vld [vmem:[%s4 + $0x138] sm:$0xf]
      %v477 = vld [vmem:[%s4 + $0x13c] sm:$0xf]
      %v478 = vld [vmem:[%s4 + $0x140] sm:$0xf]
      %v479 = vld [vmem:[%s4 + $0x144] sm:$0xf]
      %v480 = vld [vmem:[%s4 + $0x148] sm:$0xf]
      %v481 = vld [vmem:[%s4 + $0x14c] sm:$0xf]
      %v482 = vld [vmem:[%s4 + $0x150] sm:$0xf]
      %v483 = vld [vmem:[%s4 + $0x154] sm:$0xf]
      %v484 = vld [vmem:[%s4 + $0x158] sm:$0xf]
      %v485 = vld [vmem:[%s4 + $0x15c] sm:$0xf]
      %v486 = vld [vmem:[%s4 + $0x160] sm:$0xf]
      %v487 = vld [vmem:[%s4 + $0x164] sm:$0xf]
      %v488 = vld [vmem:[%s4 + $0x168] sm:$0xf]
      %v489 = vld [vmem:[%s4 + $0x16c] sm:$0xf]
      %v490 = vld [vmem:[%s4 + $0x170] sm:$0xf]
      %v491 = vld [vmem:[%s4 + $0x174] sm:$0xf]
      %v492 = vld [vmem:[%s4 + $0x178] sm:$0xf]
      %v493 = vld [vmem:[%s4 + $0x17c] sm:$0xf]
      %v494 = vld [vmem:[%s4 + $0x180] sm:$0xf]
      %v495 = vld [vmem:[%s4 + $0x184] sm:$0xf]
      %v496 = vld [vmem:[%s4 + $0x188] sm:$0xf]
      %v497 = vld [vmem:[%s4 + $0x18c] sm:$0xf]
      %v498 = vld [vmem:[%s4 + $0x190] sm:$0xf]
      %v499 = vld [vmem:[%s4 + $0x194] sm:$0xf]
      %v500 = vld [vmem:[%s4 + $0x198] sm:$0xf]
      %v501 = vld [vmem:[%s4 + $0x19c] sm:$0xf]
      %v502 = vld [vmem:[%s4 + $0x1a0] sm:$0xf]
      %v503 = vld [vmem:[%s4 + $0x1a4] sm:$0xf]
      %v504 = vld [vmem:[%s4 + $0x1a8] sm:$0xf]
      %v505 = vld [vmem:[%s4 + $0x1ac] sm:$0xf]
      %v506 = vld [vmem:[%s4 + $0x1b0] sm:$0xf]
      %v507 = vld [vmem:[%s4 + $0x1b4] sm:$0xf]
      %v508 = vld [vmem:[%s4 + $0x1b8] sm:$0xf]
      %v509 = vld [vmem:[%s4 + $0x1bc] sm:$0xf]
      %v510 = vld [vmem:[%s4 + $0x1c0] sm:$0xf]
      %v511 = vld [vmem:[%s4 + $0x1c4] sm:$0xf]
      %v512 = vld [vmem:[%s4 + $0x1c8] sm:$0xf]
      %v513 = vld [vmem:[%s4 + $0x1cc] sm:$0xf]
      %v514 = vld [vmem:[%s4 + $0x1d0] sm:$0xf]
      %v515 = vld [vmem:[%s4 + $0x1d4] sm:$0xf]
      %v516 = vld [vmem:[%s4 + $0x1d8] sm:$0xf]
      %v517 = vld [vmem:[%s4 + $0x1dc] sm:$0xf]
      %v518 = vld [vmem:[%s4 + $0x1e0] sm:$0xf]
      %v519 = vld [vmem:[%s4 + $0x1e4] sm:$0xf]
      %v520 = vld [vmem:[%s4 + $0x1e8] sm:$0xf]
      %v521 = vld [vmem:[%s4 + $0x1ec] sm:$0xf]
      %v522 = vld [vmem:[%s4 + $0x1f0] sm:$0xf]
      %v523 = vld [vmem:[%s4 + $0x1f4] sm:$0xf]
      %v524 = vld [vmem:[%s4 + $0x1f8] sm:$0xf]
      %v525 = vld [vmem:[%s4 + $0x1fc] sm:$0xf]
      %v534 = vunpack.c.l.b16 %v430
      %v535 = vunpack.c.l.b16 %v431
      %v536 = vunpack.c.l.b16 %v432
      %v537 = vunpack.c.l.b16 %v433
      %v538 = vunpack.c.l.b16 %v434
      %v539 = vunpack.c.l.b16 %v435
      %v540 = vunpack.c.l.b16 %v436
      %v541 = vunpack.c.l.b16 %v437
      %v542 = vpack.c.b16 %v535, %v534
      %v543 = vpack.c.b16 %v537, %v536
      %v544 = vpack.c.b16 %v539, %v538
      %v545 = vpack.c.b16 %v541, %v540
      %vm550 = vcmask 523264
      %v552 = vsel %vm550, %v395, 0
      %554 = vmatpush.bf16.msra.mxu0 0
      %555 = vmatpush.bf16.msra.mxu0 0
      %556 = vmatpush.bf16.msra.mxu0 0
      %557 = vmatpush.bf16.msra.mxu0 0
      %558 = vmatpush.bf16.msra.mxu0 %v545
      %559 = vmatpush.bf16.msra.mxu0 %v544
      %560 = vmatpush.bf16.msra.mxu0 %v543
      %561 = vmatpush.bf16.msra.mxu0 %v542
      %562 = vmatmul.bf16.gmra.mxu0 %v552
      %v563 = vpop.f32.mrf.mxu0
      %v564 = vadd.f32 0.0, %v563
      %v565 = vpop.f32.mrf.mxu0
      %566 = vdwg.mxu0
      %v575 = vunpack.c.l.b16 %v462
      %v576 = vunpack.c.l.b16 %v463
      %v577 = vunpack.c.l.b16 %v464
      %v578 = vunpack.c.l.b16 %v465
      %v579 = vunpack.c.l.b16 %v466
      %v580 = vunpack.c.l.b16 %v467
      %v581 = vunpack.c.l.b16 %v468
      %v582 = vunpack.c.l.b16 %v469
      %v583 = vpack.c.b16 %v576, %v575
      %v584 = vpack.c.b16 %v578, %v577
      %v585 = vpack.c.b16 %v580, %v579
      %v586 = vpack.c.b16 %v582, %v581
      %v592 = vsel %vm550, %v396, 0
      %594 = vmatpush.bf16.msra.mxu0 0
      %595 = vmatpush.bf16.msra.mxu0 0
      %596 = vmatpush.bf16.msra.mxu0 0
      %597 = vmatpush.bf16.msra.mxu0 0
      %598 = vmatpush.bf16.msra.mxu0 %v586
      %599 = vmatpush.bf16.msra.mxu0 %v585
      %600 = vmatpush.bf16.msra.mxu0 %v584
      %601 = vmatpush.bf16.msra.mxu0 %v583
      %602 = vmatmul.bf16.gmra.mxu0 %v592
      %v603 = vpop.f32.mrf.mxu0
      %v604 = vadd.f32 0.0, %v603
      %v605 = vpop.f32.mrf.mxu0
      %606 = vdwg.mxu0
      %v615 = vunpack.c.l.b16 %v494
      %v616 = vunpack.c.l.b16 %v495
      %v617 = vunpack.c.l.b16 %v496
      %v618 = vunpack.c.l.b16 %v497
      %v619 = vunpack.c.l.b16 %v498
      %v620 = vunpack.c.l.b16 %v499
      %v621 = vunpack.c.l.b16 %v500
      %v622 = vunpack.c.l.b16 %v501
      %v623 = vpack.c.b16 %v616, %v615
      %v624 = vpack.c.b16 %v618, %v617
      %v625 = vpack.c.b16 %v620, %v619
      %v626 = vpack.c.b16 %v622, %v621
      %v632 = vsel %vm550, %v397, 0
      %634 = vmatpush.bf16.msra.mxu0 0
      %635 = vmatpush.bf16.msra.mxu0 0
      %636 = vmatpush.bf16.msra.mxu0 0
      %637 = vmatpush.bf16.msra.mxu0 0
      %638 = vmatpush.bf16.msra.mxu0 %v626
      %639 = vmatpush.bf16.msra.mxu0 %v625
      %640 = vmatpush.bf16.msra.mxu0 %v624
      %641 = vmatpush.bf16.msra.mxu0 %v623
      %642 = vmatmul.bf16.gmra.mxu0 %v632
      %v643 = vpop.f32.mrf.mxu0
      %v644 = vadd.f32 0.0, %v643
      %v645 = vpop.f32.mrf.mxu0
      %646 = vdwg.mxu0
      %648 = vst [vmem:[#allocation1] ss:$4 sm:$0xff] %v394
      %v649 = vld.sshfl [vmem:[#allocation1] sm:$0xff pattern:$0x73625140]
      %v650 = vshrl.u32 %v649, 16
      %v660 = vunpack.c.l.b16 %v406
      %v661 = vunpack.c.l.b16 %v407
      %v662 = vunpack.c.l.b16 %v408
      %v663 = vunpack.c.l.b16 %v409
      %v664 = vunpack.c.l.b16 %v410
      %v665 = vunpack.c.l.b16 %v411
      %v666 = vunpack.c.l.b16 %v412
      %v667 = vunpack.c.l.b16 %v413
      %v668 = vpack.c.b16 %v661, %v660
      %v669 = vpack.c.b16 %v663, %v662
      %v670 = vpack.c.b16 %v665, %v664
      %v671 = vpack.c.b16 %v667, %v666
      %v677 = vsel %vm550, %v650, 0
      %679 = vmatpush.bf16.msra.mxu0 0
      %680 = vmatpush.bf16.msra.mxu0 0
      %681 = vmatpush.bf16.msra.mxu0 0
      %682 = vmatpush.bf16.msra.mxu0 0
      %683 = vmatpush.bf16.msra.mxu0 %v671
      %684 = vmatpush.bf16.msra.mxu0 %v670
      %685 = vmatpush.bf16.msra.mxu0 %v669
      %686 = vmatpush.bf16.msra.mxu0 %v668
      %687 = vmatmul.bf16.gmra.mxu0 %v677
      %v688 = vpop.f32.mrf.mxu0
      %v689 = vadd.f32 0.0, %v688
      %v690 = vpop.f32.mrf.mxu0
      %691 = vdwg.mxu0
      %692 = vst [vmem:[#allocation1] ss:$4 sm:$0xff] %v395
      %v693 = vld.sshfl [vmem:[#allocation1] sm:$0xff pattern:$0x73625140]
      %v694 = vshrl.u32 %v693, 16
      %v704 = vunpack.c.l.b16 %v438
      %v705 = vunpack.c.l.b16 %v439
      %v706 = vunpack.c.l.b16 %v440
      %v707 = vunpack.c.l.b16 %v441
      %v708 = vunpack.c.l.b16 %v442
      %v709 = vunpack.c.l.b16 %v443
      %v710 = vunpack.c.l.b16 %v444
      %v711 = vunpack.c.l.b16 %v445
      %v712 = vpack.c.b16 %v705, %v704
      %v713 = vpack.c.b16 %v707, %v706
      %v714 = vpack.c.b16 %v709, %v708
      %v715 = vpack.c.b16 %v711, %v710
      %v721 = vsel %vm550, %v694, 0
      %723 = vmatpush.bf16.msra.mxu0 0
      %724 = vmatpush.bf16.msra.mxu0 0
      %725 = vmatpush.bf16.msra.mxu0 0
      %726 = vmatpush.bf16.msra.mxu0 0
      %727 = vmatpush.bf16.msra.mxu0 %v715
      %728 = vmatpush.bf16.msra.mxu0 %v714
      %729 = vmatpush.bf16.msra.mxu0 %v713
      %730 = vmatpush.bf16.msra.mxu0 %v712
      %731 = vmatmul.bf16.gmra.mxu0 %v721
      %v732 = vpop.f32.mrf.mxu0
      %v733 = vadd.f32 0.0, %v732
      %v734 = vpop.f32.mrf.mxu0
      %735 = vdwg.mxu0
      %736 = vst [vmem:[#allocation1] ss:$4 sm:$0xff] %v396
      %v737 = vld.sshfl [vmem:[#allocation1] sm:$0xff pattern:$0x73625140]
      %v738 = vshrl.u32 %v737, 16
      %v748 = vunpack.c.l.b16 %v470
      %v749 = vunpack.c.l.b16 %v471
      %v750 = vunpack.c.l.b16 %v472
      %v751 = vunpack.c.l.b16 %v473
      %v752 = vunpack.c.l.b16 %v474
      %v753 = vunpack.c.l.b16 %v475
      %v754 = vunpack.c.l.b16 %v476
      %v755 = vunpack.c.l.b16 %v477
      %v756 = vpack.c.b16 %v749, %v748
      %v757 = vpack.c.b16 %v751, %v750
      %v758 = vpack.c.b16 %v753, %v752
      %v759 = vpack.c.b16 %v755, %v754
      %v765 = vsel %vm550, %v738, 0
      %767 = vmatpush.bf16.msra.mxu0 0
      %768 = vmatpush.bf16.msra.mxu0 0
      %769 = vmatpush.bf16.msra.mxu0 0
      %770 = vmatpush.bf16.msra.mxu0 0
      %771 = vmatpush.bf16.msra.mxu0 %v759
      %772 = vmatpush.bf16.msra.mxu0 %v758
      %773 = vmatpush.bf16.msra.mxu0 %v757
      %774 = vmatpush.bf16.msra.mxu0 %v756
      %775 = vmatmul.bf16.gmra.mxu0 %v765
      %v776 = vpop.f32.mrf.mxu0
      %v777 = vadd.f32 0.0, %v776
      %v778 = vpop.f32.mrf.mxu0
      %779 = vdwg.mxu0
      %780 = vst [vmem:[#allocation1] ss:$4 sm:$0xff] %v397
      %v781 = vld.sshfl [vmem:[#allocation1] sm:$0xff pattern:$0x73625140]
      %v782 = vshrl.u32 %v781, 16
      %v792 = vunpack.c.l.b16 %v502
      %v793 = vunpack.c.l.b16 %v503
      %v794 = vunpack.c.l.b16 %v504
      %v795 = vunpack.c.l.b16 %v505
      %v796 = vunpack.c.l.b16 %v506
      %v797 = vunpack.c.l.b16 %v507
      %v798 = vunpack.c.l.b16 %v508
      %v799 = vunpack.c.l.b16 %v509
      %v800 = vpack.c.b16 %v793, %v792
      %v801 = vpack.c.b16 %v795, %v794
      %v802 = vpack.c.b16 %v797, %v796
      %v803 = vpack.c.b16 %v799, %v798
      %v809 = vsel %vm550, %v782, 0
      %811 = vmatpush.bf16.msra.mxu0 0
      %812 = vmatpush.bf16.msra.mxu0 0
      %813 = vmatpush.bf16.msra.mxu0 0
      %814 = vmatpush.bf16.msra.mxu0 0
      %815 = vmatpush.bf16.msra.mxu0 %v803
      %816 = vmatpush.bf16.msra.mxu0 %v802
      %817 = vmatpush.bf16.msra.mxu0 %v801
      %818 = vmatpush.bf16.msra.mxu0 %v800
      %819 = vmatmul.bf16.gmra.mxu0 %v809
      %v820 = vpop.f32.mrf.mxu0
      %v821 = vadd.f32 0.0, %v820
      %v822 = vpop.f32.mrf.mxu0
      %823 = vdwg.mxu0
      %824 = vst [vmem:[#allocation1] ss:$4 sm:$0xff] %v394
      %v825 = vld.sshfl [vmem:[#allocation1] sm:$0xff pattern:$0x73625140]
      %v827 = vrot.slane %v825, 1
      %v836 = vunpack.c.l.b16 %v414
      %v837 = vunpack.c.l.b16 %v415
      %v838 = vunpack.c.l.b16 %v416
      %v839 = vunpack.c.l.b16 %v417
      %v840 = vunpack.c.l.b16 %v418
      %v841 = vunpack.c.l.b16 %v419
      %v842 = vunpack.c.l.b16 %v420
      %v843 = vunpack.c.l.b16 %v421
      %v844 = vpack.c.b16 %v837, %v836
      %v845 = vpack.c.b16 %v839, %v838
      %v846 = vpack.c.b16 %v841, %v840
      %v847 = vpack.c.b16 %v843, %v842
      %v853 = vsel %vm550, %v827, 0
      %855 = vmatpush.bf16.msra.mxu0 0
      %856 = vmatpush.bf16.msra.mxu0 0
      %857 = vmatpush.bf16.msra.mxu0 0
      %858 = vmatpush.bf16.msra.mxu0 0
      %859 = vmatpush.bf16.msra.mxu0 %v847
      %860 = vmatpush.bf16.msra.mxu0 %v846
      %861 = vmatpush.bf16.msra.mxu0 %v845
      %862 = vmatpush.bf16.msra.mxu0 %v844
      %863 = vmatmul.bf16.gmra.mxu0 %v853
      %v864 = vpop.f32.mrf.mxu0
      %v865 = vadd.f32 0.0, %v864
      %v866 = vpop.f32.mrf.mxu0
      %867 = vdwg.mxu0
      %868 = vst [vmem:[#allocation1] ss:$4 sm:$0xff] %v395
      %v869 = vld.sshfl [vmem:[#allocation1] sm:$0xff pattern:$0x73625140]
      %v871 = vrot.slane %v869, 1
      %v880 = vunpack.c.l.b16 %v446
      %v881 = vunpack.c.l.b16 %v447
      %v882 = vunpack.c.l.b16 %v448
      %v883 = vunpack.c.l.b16 %v449
      %v884 = vunpack.c.l.b16 %v450
      %v885 = vunpack.c.l.b16 %v451
      %v886 = vunpack.c.l.b16 %v452
      %v887 = vunpack.c.l.b16 %v453
      %v888 = vpack.c.b16 %v881, %v880
      %v889 = vpack.c.b16 %v883, %v882
      %v890 = vpack.c.b16 %v885, %v884
      %v891 = vpack.c.b16 %v887, %v886
      %v897 = vsel %vm550, %v871, 0
      %899 = vmatpush.bf16.msra.mxu0 0
      %900 = vmatpush.bf16.msra.mxu0 0
      %901 = vmatpush.bf16.msra.mxu0 0
      %902 = vmatpush.bf16.msra.mxu0 0
      %903 = vmatpush.bf16.msra.mxu0 %v891
      %904 = vmatpush.bf16.msra.mxu0 %v890
      %905 = vmatpush.bf16.msra.mxu0 %v889
      %906 = vmatpush.bf16.msra.mxu0 %v888
      %907 = vmatmul.bf16.gmra.mxu0 %v897
      %v908 = vpop.f32.mrf.mxu0
      %v909 = vadd.f32 0.0, %v908
      %v910 = vpop.f32.mrf.mxu0
      %911 = vdwg.mxu0
      %912 = vst [vmem:[#allocation1] ss:$4 sm:$0xff] %v396
      %v913 = vld.sshfl [vmem:[#allocation1] sm:$0xff pattern:$0x73625140]
      %v915 = vrot.slane %v913, 1
      %v924 = vunpack.c.l.b16 %v478
      %v925 = vunpack.c.l.b16 %v479
      %v926 = vunpack.c.l.b16 %v480
      %v927 = vunpack.c.l.b16 %v481
      %v928 = vunpack.c.l.b16 %v482
      %v929 = vunpack.c.l.b16 %v483
      %v930 = vunpack.c.l.b16 %v484
      %v931 = vunpack.c.l.b16 %v485
      %v932 = vpack.c.b16 %v925, %v924
      %v933 = vpack.c.b16 %v927, %v926
      %v934 = vpack.c.b16 %v929, %v928
      %v935 = vpack.c.b16 %v931, %v930
      %v941 = vsel %vm550, %v915, 0
      %943 = vmatpush.bf16.msra.mxu0 0
      %944 = vmatpush.bf16.msra.mxu0 0
      %945 = vmatpush.bf16.msra.mxu0 0
      %946 = vmatpush.bf16.msra.mxu0 0
      %947 = vmatpush.bf16.msra.mxu0 %v935
      %948 = vmatpush.bf16.msra.mxu0 %v934
      %949 = vmatpush.bf16.msra.mxu0 %v933
      %950 = vmatpush.bf16.msra.mxu0 %v932
      %951 = vmatmul.bf16.gmra.mxu0 %v941
      %v952 = vpop.f32.mrf.mxu0
      %v953 = vadd.f32 0.0, %v952
      %v954 = vpop.f32.mrf.mxu0
      %955 = vdwg.mxu0
      %956 = vst [vmem:[#allocation1] ss:$4 sm:$0xff] %v397
      %v957 = vld.sshfl [vmem:[#allocation1] sm:$0xff pattern:$0x73625140]
      %v959 = vrot.slane %v957, 1
      %v968 = vunpack.c.l.b16 %v510
      %v969 = vunpack.c.l.b16 %v511
      %v970 = vunpack.c.l.b16 %v512
      %v971 = vunpack.c.l.b16 %v513
      %v972 = vunpack.c.l.b16 %v514
      %v973 = vunpack.c.l.b16 %v515
      %v974 = vunpack.c.l.b16 %v516
      %v975 = vunpack.c.l.b16 %v517
      %v976 = vpack.c.b16 %v969, %v968
      %v977 = vpack.c.b16 %v971, %v970
      %v978 = vpack.c.b16 %v973, %v972
      %v979 = vpack.c.b16 %v975, %v974
      %v985 = vsel %vm550, %v959, 0
      %987 = vmatpush.bf16.msra.mxu0 0
      %988 = vmatpush.bf16.msra.mxu0 0
      %989 = vmatpush.bf16.msra.mxu0 0
      %990 = vmatpush.bf16.msra.mxu0 0
      %991 = vmatpush.bf16.msra.mxu0 %v979
      %992 = vmatpush.bf16.msra.mxu0 %v978
      %993 = vmatpush.bf16.msra.mxu0 %v977
      %994 = vmatpush.bf16.msra.mxu0 %v976
      %995 = vmatmul.bf16.gmra.mxu0 %v985
      %v996 = vpop.f32.mrf.mxu0
      %v997 = vadd.f32 0.0, %v996
      %v998 = vpop.f32.mrf.mxu0
      %999 = vdwg.mxu0
      %1000 = vst [vmem:[#allocation1] ss:$4 sm:$0xff] %v394
      %v1001 = vld.sshfl [vmem:[#allocation1] sm:$0xff pattern:$0x73625140]
      %v1002 = vshrl.u32 %v1001, 16
      %v1004 = vrot.slane %v1002, 1
      %v1013 = vunpack.c.l.b16 %v422
      %v1014 = vunpack.c.l.b16 %v423
      %v1015 = vunpack.c.l.b16 %v424
      %v1016 = vunpack.c.l.b16 %v425
      %v1017 = vunpack.c.l.b16 %v426
      %v1018 = vunpack.c.l.b16 %v427
      %v1019 = vunpack.c.l.b16 %v428
      %v1020 = vunpack.c.l.b16 %v429
      %v1021 = vpack.c.b16 %v1014, %v1013
      %v1022 = vpack.c.b16 %v1016, %v1015
      %v1023 = vpack.c.b16 %v1018, %v1017
      %v1024 = vpack.c.b16 %v1020, %v1019
      %v1030 = vsel %vm550, %v1004, 0
      %1032 = vmatpush.bf16.msra.mxu0 0
      %1033 = vmatpush.bf16.msra.mxu0 0
      %1034 = vmatpush.bf16.msra.mxu0 0
      %1035 = vmatpush.bf16.msra.mxu0 0
      %1036 = vmatpush.bf16.msra.mxu0 %v1024
      %1037 = vmatpush.bf16.msra.mxu0 %v1023
      %1038 = vmatpush.bf16.msra.mxu0 %v1022
      %1039 = vmatpush.bf16.msra.mxu0 %v1021
      %1040 = vmatmul.bf16.gmra.mxu0 %v1030
      %v1041 = vpop.f32.mrf.mxu0
      %v1042 = vadd.f32 0.0, %v1041
      %v1043 = vpop.f32.mrf.mxu0
      %1044 = vdwg.mxu0
      %1045 = vst [vmem:[#allocation1] ss:$4 sm:$0xff] %v395
      %v1046 = vld.sshfl [vmem:[#allocation1] sm:$0xff pattern:$0x73625140]
      %v1047 = vshrl.u32 %v1046, 16
      %v1049 = vrot.slane %v1047, 1
      %v1058 = vunpack.c.l.b16 %v454
      %v1059 = vunpack.c.l.b16 %v455
      %v1060 = vunpack.c.l.b16 %v456
      %v1061 = vunpack.c.l.b16 %v457
      %v1062 = vunpack.c.l.b16 %v458
      %v1063 = vunpack.c.l.b16 %v459
      %v1064 = vunpack.c.l.b16 %v460
      %v1065 = vunpack.c.l.b16 %v461
      %v1066 = vpack.c.b16 %v1059, %v1058
      %v1067 = vpack.c.b16 %v1061, %v1060
      %v1068 = vpack.c.b16 %v1063, %v1062
      %v1069 = vpack.c.b16 %v1065, %v1064
      %v1075 = vsel %vm550, %v1049, 0
      %1077 = vmatpush.bf16.msra.mxu0 0
      %1078 = vmatpush.bf16.msra.mxu0 0
      %1079 = vmatpush.bf16.msra.mxu0 0
      %1080 = vmatpush.bf16.msra.mxu0 0
      %1081 = vmatpush.bf16.msra.mxu0 %v1069
      %1082 = vmatpush.bf16.msra.mxu0 %v1068
      %1083 = vmatpush.bf16.msra.mxu0 %v1067
      %1084 = vmatpush.bf16.msra.mxu0 %v1066
      %1085 = vmatmul.bf16.gmra.mxu0 %v1075
      %v1086 = vpop.f32.mrf.mxu0
      %v1087 = vadd.f32 0.0, %v1086
      %v1088 = vpop.f32.mrf.mxu0
      %1089 = vdwg.mxu0
      %1090 = vst [vmem:[#allocation1] ss:$4 sm:$0xff] %v396
      %v1091 = vld.sshfl [vmem:[#allocation1] sm:$0xff pattern:$0x73625140]
      %v1092 = vshrl.u32 %v1091, 16
      %v1094 = vrot.slane %v1092, 1
      %v1103 = vunpack.c.l.b16 %v486
      %v1104 = vunpack.c.l.b16 %v487
      %v1105 = vunpack.c.l.b16 %v488
      %v1106 = vunpack.c.l.b16 %v489
      %v1107 = vunpack.c.l.b16 %v490
      %v1108 = vunpack.c.l.b16 %v491
      %v1109 = vunpack.c.l.b16 %v492
      %v1110 = vunpack.c.l.b16 %v493
      %v1111 = vpack.c.b16 %v1104, %v1103
      %v1112 = vpack.c.b16 %v1106, %v1105
      %v1113 = vpack.c.b16 %v1108, %v1107
      %v1114 = vpack.c.b16 %v1110, %v1109
      %v1120 = vsel %vm550, %v1094, 0
      %1122 = vmatpush.bf16.msra.mxu0 0
      %1123 = vmatpush.bf16.msra.mxu0 0
      %1124 = vmatpush.bf16.msra.mxu0 0
      %1125 = vmatpush.bf16.msra.mxu0 0
      %1126 = vmatpush.bf16.msra.mxu0 %v1114
      %1127 = vmatpush.bf16.msra.mxu0 %v1113
      %1128 = vmatpush.bf16.msra.mxu0 %v1112
      %1129 = vmatpush.bf16.msra.mxu0 %v1111
      %1130 = vmatmul.bf16.gmra.mxu0 %v1120
      %v1131 = vpop.f32.mrf.mxu0
      %v1132 = vadd.f32 0.0, %v1131
      %v1133 = vpop.f32.mrf.mxu0
      %1134 = vdwg.mxu0
      %1135 = vst [vmem:[#allocation1] ss:$4 sm:$0xff] %v397
      %v1136 = vld.sshfl [vmem:[#allocation1] sm:$0xff pattern:$0x73625140]
      %v1137 = vshrl.u32 %v1136, 16
      %v1139 = vrot.slane %v1137, 1
      %v1148 = vunpack.c.l.b16 %v518
      %v1149 = vunpack.c.l.b16 %v519
      %v1150 = vunpack.c.l.b16 %v520
      %v1151 = vunpack.c.l.b16 %v521
      %v1152 = vunpack.c.l.b16 %v522
      %v1153 = vunpack.c.l.b16 %v523
      %v1154 = vunpack.c.l.b16 %v524
      %v1155 = vunpack.c.l.b16 %v525
      %v1156 = vpack.c.b16 %v1149, %v1148
      %v1157 = vpack.c.b16 %v1151, %v1150
      %v1158 = vpack.c.b16 %v1153, %v1152
      %v1159 = vpack.c.b16 %v1155, %v1154
      %v1165 = vsel %vm550, %v1139, 0
      %1167 = vmatpush.bf16.msra.mxu0 0
      %1168 = vmatpush.bf16.msra.mxu0 0
      %1169 = vmatpush.bf16.msra.mxu0 0
      %1170 = vmatpush.bf16.msra.mxu0 0
      %1171 = vmatpush.bf16.msra.mxu0 %v1159
      %1172 = vmatpush.bf16.msra.mxu0 %v1158
      %1173 = vmatpush.bf16.msra.mxu0 %v1157
      %1174 = vmatpush.bf16.msra.mxu0 %v1156
      %1175 = vmatmul.bf16.gmra.mxu0 %v1165
      %v1176 = vpop.f32.mrf.mxu0
      %v1177 = vadd.f32 0.0, %v1176
      %v1178 = vpop.f32.mrf.mxu0
      %1179 = vdwg.mxu0
      %v1188 = vunpack.c.l.b16 %v398
      %v1189 = vunpack.c.l.b16 %v399
      %v1190 = vunpack.c.l.b16 %v400
      %v1191 = vunpack.c.l.b16 %v401
      %v1192 = vunpack.c.l.b16 %v402
      %v1193 = vunpack.c.l.b16 %v403
      %v1194 = vunpack.c.l.b16 %v404
      %v1195 = vunpack.c.l.b16 %v405
      %v1196 = vpack.c.b16 %v1189, %v1188
      %v1197 = vpack.c.b16 %v1191, %v1190
      %v1198 = vpack.c.b16 %v1193, %v1192
      %v1199 = vpack.c.b16 %v1195, %v1194
      %v1204 = vsel %vm550, %v394, 0
      %1206 = vmatpush.bf16.msra.mxu0 0
      %1207 = vmatpush.bf16.msra.mxu0 0
      %1208 = vmatpush.bf16.msra.mxu0 0
      %1209 = vmatpush.bf16.msra.mxu0 0
      %1210 = vmatpush.bf16.msra.mxu0 %v1199
      %1211 = vmatpush.bf16.msra.mxu0 %v1198
      %1212 = vmatpush.bf16.msra.mxu0 %v1197
      %1213 = vmatpush.bf16.msra.mxu0 %v1196
      %1214 = vmatmul.bf16.gmra.mxu0 %v1204
      %v1215 = vpop.f32.mrf.mxu0
      %v1216 = vadd.f32 %v564, %v1215
      %v1217 = vpop.f32.mrf.mxu0
      %1218 = vdwg.mxu0
      %v1219 = vadd.f32 %v1216, %v604
      %v1220 = vadd.f32 %v1219, %v644
      %v1221 = vadd.f32 %v1220, %v689
      %v1222 = vadd.f32 %v1221, %v733
      %v1223 = vadd.f32 %v1222, %v777
      %v1224 = vadd.f32 %v1223, %v821
      %v1225 = vadd.f32 %v1224, %v865
      %v1226 = vadd.f32 %v1225, %v909
      %v1227 = vadd.f32 %v1226, %v953
      %v1228 = vadd.f32 %v1227, %v997
      %v1229 = vadd.f32 %v1228, %v1042
      %v1230 = vadd.f32 %v1229, %v1087
      %v1231 = vadd.f32 %v1230, %v1132
      %v1232 = vadd.f32 %v1231, %v1177
      %v1233 = vld [vmem:[%s5] sm:$0x1]
      %v1234 = vadd.f32 %v1232, %v1233
      %1235 = vst [vmem:[%s392] sm:$0x1] %v1234
      %p1236 = scmp.lt.s32.totalorder %s21, 1
      %s1237 = scalar_select %p1236, %s21, 1
      %p1238 = scmp.lt.s32.totalorder %s22, 0
      %s1239 = scalar_select %p1238, %s22, 0
      %s1240 = sadd.s32 %s1239, %s1237
      %s1241 = scalar_lea.vmem %s6, %s1240
      // Predicated region
      $region45: #{convs_forward.7} parent=43 // pred_check
        %p1242 = pneg %p209
      $region46: #{convs_forward.7} parent=43 // pred_check_branch
        %1244 = sbr.rel (%p1242) target = $region48
      $region47: #{convs_forward.7} parent=43 // pred_region
        _
      $region48: #{convs_forward.7} parent=43 // pred_fallthru
        _
    $region44: #{convs_forward.7} parent=5 // pred_fallthru
      _
    %p1245 = scmp.le.s32.totalorder 2, %s12
    // Predicated region
    $region49: #{convs_forward.7} parent=5 // pred_check
      %p1246 = pneg %p1245
    $region50: #{convs_forward.7} parent=5 // pred_check_branch
      %1248 = sbr.rel (%p1246) target = $region52
    $region51: #{convs_forward.7} parent=5 // pred_region
      %s1249 = ssub.s32 %s12, 2
      // Predicated region
      $region53: #{convs_forward.7} parent=51 // pred_check
        %p1250 = pneg %p215
      $region54: #{convs_forward.7} parent=51 // pred_check_branch
        %1252 = sbr.rel (%p1250) target = $region56
      $region55: #{convs_forward.7} parent=51 // pred_region
        %p1253 = scmp.lt.s32.totalorder %s23, 1
        %s1254 = scalar_select %p1253, %s23, 1
        %p1255 = scmp.lt.s32.totalorder %s24, 0
        %s1256 = scalar_select %p1255, %s24, 0
        %s1257 = sadd.s32 %s1256, %s1254
        %s1258 = scalar_lea.vmem %s6, %s1257
      $region56: #{convs_forward.7} parent=51 // pred_fallthru
        _
    $region52: #{convs_forward.7} parent=5 // pred_fallthru
      _
  $region6: #{convs_forward.7} parent=0 // loop_footer
    %s16 = sadd.s32 1, %s12
  $region7: #{convs_forward.7} parent=0 // loop_footer_branch
    %11 = sbr.rel target = $region3
  $region8: #{convs_forward.7} parent=0 // loop_exit
    _

</llo_original>
